<compile_context>
chip_gen: v5e
topology: v5e:2x2
jax: 0.10.0
libtpu: 0.0.40
codegen_flags: <defaults>
</compile_context>

<pallas_src>
import functools

import jax
import jax.numpy as jnp
from jax import lax
from jax.experimental import pallas as pl
from jax.experimental.pallas import tpu as pltpu

LEAKY_SLOPE = 0.01  # nn.LeakyReLU default negative_slope
BN_EPS = 1e-5


# ----------------------------------------------------------------------------
# Shared kernel pieces
# ----------------------------------------------------------------------------
def _fill_padded(xp_ref, x, padding, H, W):
    """Zero the (Hp, Wp, C) bf16 VMEM scratch and write the tile interior."""
    xp_ref[...] = jnp.zeros(xp_ref.shape, xp_ref.dtype)
    xp_ref[pl.ds(padding, H), pl.ds(padding, W), :] = x.astype(xp_ref.dtype)


def _conv3x3_bn_lrelu(xp_ref, w_ref, shift_ref, *, H, W, C, dilation):
    """Dilated 3x3 conv as 9 shifted-tap bf16 MXU matmuls (f32 accumulation),
    then folded bias/BN shift and LeakyReLU.  Returns (H*W, C) float32."""
    acc = jnp.zeros((H * W, C), jnp.float32)
    for ky in range(3):
        for kx in range(3):
            patch = xp_ref[pl.ds(ky * dilation, H),
                           pl.ds(kx * dilation, W), :]          # (H, W, C) bf16
            # W is a multiple of 8 here, so this reshape is layout-preserving.
            acc = acc + jnp.dot(patch.reshape(H * W, C),
                                w_ref[ky, kx],                   # (C, C) bf16
                                preferred_element_type=jnp.float32)
    acc = acc + shift_ref[0].astype(jnp.float32)                 # folded b + BN
    return jnp.where(acc > 0, acc, LEAKY_SLOPE * acc)            # LeakyReLU


# ----------------------------------------------------------------------------
# Kernel 1: one dilated-conv branch (conv + folded BN + LeakyReLU)
# ----------------------------------------------------------------------------
def _branch_kernel(x_ref, w_ref, shift_ref, o_ref, xp_ref,
                   *, H, W, C, dilation, padding):
    _fill_padded(xp_ref, x_ref[...], padding, H, W)
    act = _conv3x3_bn_lrelu(xp_ref, w_ref, shift_ref,
                            H=H, W=W, C=C, dilation=dilation)
    o_ref[...] = act.reshape(H, W, C).astype(o_ref.dtype)


# ----------------------------------------------------------------------------
# Kernel 2: last branch fused with the residual sum
#   out = x + d1 + d2 + d3 + lrelu(bn(conv(d3)))
# ----------------------------------------------------------------------------
def _last_branch_kernel(x3_ref, x0_ref, d1_ref, d2_ref, w_ref, shift_ref,
                        o_ref, xp_ref, *, H, W, C, dilation, padding):
    x3 = x3_ref[...]                                             # d3 (bf16)
    _fill_padded(xp_ref, x3, padding, H, W)
    d4 = _conv3x3_bn_lrelu(xp_ref, w_ref, shift_ref,
                           H=H, W=W, C=C, dilation=dilation).reshape(H, W, C)
    total = (x0_ref[...].astype(jnp.float32)
             + d1_ref[...].astype(jnp.float32)
             + d2_ref[...].astype(jnp.float32)
             + x3.astype(jnp.float32)
             + d4)
    o_ref[...] = total.astype(o_ref.dtype)


# ----------------------------------------------------------------------------
# pallas_call wrappers
# ----------------------------------------------------------------------------
def _img_spec(H, W, C):
    return pl.BlockSpec((None, H, W, C), lambda n: (n, 0, 0, 0))


def _branch_call(x_nhwc, w_bf16, shift_f32, dilation, padding, out_dtype):
    N, H, W, C = x_nhwc.shape
    assert padding == dilation, "Dblock residual add requires padding == dilation"
    Hp, Wp = H + 2 * padding, W + 2 * padding
    kern = functools.partial(_branch_kernel, H=H, W=W, C=C,
                             dilation=dilation, padding=padding)
    return pl.pallas_call(
        kern,
        out_shape=jax.ShapeDtypeStruct((N, H, W, C), out_dtype),
        grid=(N,),
        in_specs=[
            _img_spec(H, W, C),
            pl.BlockSpec((3, 3, C, C), lambda n: (0, 0, 0, 0)),
            pl.BlockSpec((1, C), lambda n: (0, 0)),
        ],
        out_specs=_img_spec(H, W, C),
        scratch_shapes=[pltpu.VMEM((Hp, Wp, C), jnp.bfloat16)],
        compiler_params=pltpu.CompilerParams(
            dimension_semantics=("parallel",)),
    )(x_nhwc, w_bf16, shift_f32.reshape(1, C))


def _last_branch_call(d3, x0, d1, d2, w_bf16, shift_f32,
                      dilation, padding, out_dtype):
    N, H, W, C = x0.shape
    assert padding == dilation, "Dblock residual add requires padding == dilation"
    Hp, Wp = H + 2 * padding, W + 2 * padding
    kern = functools.partial(_last_branch_kernel, H=H, W=W, C=C,
                             dilation=dilation, padding=padding)
    return pl.pallas_call(
        kern,
        out_shape=jax.ShapeDtypeStruct((N, H, W, C), out_dtype),
        grid=(N,),
        in_specs=[
            _img_spec(H, W, C),                # d3 (conv input + residual)
            _img_spec(H, W, C),                # x
            _img_spec(H, W, C),                # d1
            _img_spec(H, W, C),                # d2
            pl.BlockSpec((3, 3, C, C), lambda n: (0, 0, 0, 0)),
            pl.BlockSpec((1, C), lambda n: (0, 0)),
        ],
        out_specs=_img_spec(H, W, C),
        scratch_shapes=[pltpu.VMEM((Hp, Wp, C), jnp.bfloat16)],
        compiler_params=pltpu.CompilerParams(
            dimension_semantics=("parallel",)),
    )(d3, x0, d1, d2, w_bf16, shift_f32.reshape(1, C))


# ----------------------------------------------------------------------------
# Dblock forward
# ----------------------------------------------------------------------------
def dblock_forward_nhwc(x_nhwc, params, dilation_series, padding_series):
    w, s = params["w_eff"], params["shift_eff"]
    # d1..d3 stored bf16 (they feed the next branch + the fused residual).
    d1 = _branch_call(x_nhwc, w[0], s[0], dilation_series[0], padding_series[0],
                      jnp.bfloat16)
    d2 = _branch_call(d1, w[1], s[1], dilation_series[1], padding_series[1],
                      jnp.bfloat16)
    d3 = _branch_call(d2, w[2], s[2], dilation_series[2], padding_series[2],
                      jnp.bfloat16)
    return _last_branch_call(d3, x_nhwc, d1, d2, w[3], s[3],
                             dilation_series[3], padding_series[3],
                             x_nhwc.dtype)


def dblock_forward(x_nchw, params, dilation_series, padding_series):
    # NCHW wrapper to match the PyTorch module; prefer the NHWC entry point
    # if the surrounding model can stay channels-last.
    x = jnp.transpose(x_nchw, (0, 2, 3, 1))
    out = dblock_forward_nhwc(x, params, dilation_series, padding_series)
    return jnp.transpose(out, (0, 3, 1, 2))


# ----------------------------------------------------------------------------
# Parameters (PyTorch-equivalent raw params, then fold bias + BN into weights)
# ----------------------------------------------------------------------------
def init_dblock_params(key, channel):
    raw = {"w": [], "b": []}
    for i in range(4):
        k = jax.random.fold_in(key, i)
        # PyTorch layout (Cout, Cin, 3, 3); module zeroes the biases.
        raw["w"].append(jax.random.normal(k, (channel, channel, 3, 3),
                                          jnp.float32) * 0.1)
        raw["b"].append(jnp.zeros((channel,), jnp.float32))
    # BatchNorm2d defaults right after __init__.
    raw["gamma"] = jnp.ones((channel,), jnp.float32)
    raw["beta"] = jnp.zeros((channel,), jnp.float32)
    raw["running_mean"] = jnp.zeros((channel,), jnp.float32)
    raw["running_var"] = jnp.ones((channel,), jnp.float32)
    return raw


def fold_dblock_params(raw):
    """Fold conv bias + inference-mode BN into the conv weights (in f32),
    then cast weights to bf16 for the MXU."""
    scale = raw["gamma"] / jnp.sqrt(raw["running_var"] + BN_EPS)
    shift = raw["beta"] - raw["running_mean"] * scale
    w_eff, shift_eff = [], []
    for i in range(4):
        w_hwio = jnp.transpose(raw["w"][i], (2, 3, 1, 0))   # -> (3,3,Cin,Cout)
        w_eff.append((w_hwio * scale[None, None, None, :]).astype(jnp.bfloat16))
        shift_eff.append(raw["b"][i] * scale + shift)        # stays f32
    return {"w_eff": w_eff, "shift_eff": shift_eff}


# ----------------------------------------------------------------------------
# Pure-JAX reference (same bf16 operand / f32 accumulation scheme)
# ----------------------------------------------------------------------------
def _ref_branch(x_nhwc, w_eff_bf16, shift_eff, dilation, padding):
    y = lax.conv_general_dilated(
        x_nhwc.astype(jnp.bfloat16), w_eff_bf16,
        window_strides=(1, 1),
        padding=((padding, padding), (padding, padding)),
        rhs_dilation=(dilation, dilation),
        dimension_numbers=("NHWC", "HWIO", "NHWC"),
        preferred_element_type=jnp.float32)
    y = y + shift_eff
    return jnp.where(y > 0, y, LEAKY_SLOPE * y)


def dblock_reference(x_nchw, params, dilation_series, padding_series):
    w, s = params["w_eff"], params["shift_eff"]
    x = jnp.transpose(x_nchw, (0, 2, 3, 1))
    d1 = _ref_branch(x, w[0], s[0], dilation_series[0],
                     padding_series[0]).astype(jnp.bfloat16)
    d2 = _ref_branch(d1, w[1], s[1], dilation_series[1],
                     padding_series[1]).astype(jnp.bfloat16)
    d3 = _ref_branch(d2, w[2], s[2], dilation_series[2],
                     padding_series[2]).astype(jnp.bfloat16)
    d4 = _ref_branch(d3, w[3], s[3], dilation_series[3], padding_series[3])
    out = (x + d1.astype(jnp.float32) + d2.astype(jnp.float32)
           + d3.astype(jnp.float32) + d4)
    return jnp.transpose(out, (0, 3, 1, 2))


if __name__ == "__main__":
    key = jax.random.PRNGKey(0)
    channel = 4
    dilation_series = [1, 2, 4, 8]
    padding_series = [1, 2, 4, 8]

    raw = init_dblock_params(jax.random.fold_in(key, 100), channel)
    params = fold_dblock_params(raw)
    x = jax.random.normal(jax.random.fold_in(key, 200),
                          (2, channel, 16, 16), jnp.float32)   # NCHW

    out = jax.block_until_ready(
        dblock_forward(x, params, dilation_series, padding_series))
    ref = jax.block_until_ready(
        dblock_reference(x, params, dilation_series, padding_series))

    assert out.shape == x.shape and out.dtype == x.dtype
    max_err = float(jnp.max(jnp.abs(out - ref)))
    assert jnp.allclose(out, ref, rtol=2e-2, atol=2e-2), max_err
    print("KERNEL_OK")
</pallas_src>

<mosaic_0001>
module attributes {stable_mosaic.version = 11 : i64} {
  func.func @_branch_kernel(%arg0: i32, %arg1: memref<1x16x16x4xf32, #tpu.memory_space<vmem>>, %arg2: memref<3x3x4x4xbf16, #tpu.memory_space<vmem>>, %arg3: memref<1x4xf32, #tpu.memory_space<vmem>>, %arg4: memref<1x16x16x4xbf16, #tpu.memory_space<vmem>>, %arg5: memref<18x18x4xbf16, #tpu.memory_space<vmem>>) attributes {dimension_semantics = [#tpu.dimension_semantics<parallel>], iteration_bounds = array<i64: 2>, scalar_prefetch = 0 : i64, scratch_operands = 1 : i64, tpu.core_type = #tpu.core_type<tc>, window_params = [{transform_indices = @transform_0, window_bounds = array<i64: 1, 16, 16, 4>}, {pipeline_mode = #tpu.pipeline_mode<synchronous>, transform_indices = @transform_1, window_bounds = array<i64: 3, 3, 4, 4>}, {pipeline_mode = #tpu.pipeline_mode<synchronous>, transform_indices = @transform_2, window_bounds = array<i64: 1, 4>}, {transform_indices = @transform_3, window_bounds = array<i64: 1, 16, 16, 4>}]} {
    %c0 = arith.constant 0 : index
    %c0_0 = arith.constant 0 : index
    %c0_1 = arith.constant 0 : index
    %c0_2 = arith.constant 0 : index
    %0 = vector.load %arg1[%c0, %c0_0, %c0_1, %c0_2] : memref<1x16x16x4xf32, #tpu.memory_space<vmem>>, vector<1x16x16x4xf32>
    %1 = vector.shape_cast %0 : vector<1x16x16x4xf32> to vector<16x16x4xf32>
    %cst = arith.constant 0.000000e+00 : bf16
    %2 = vector.broadcast %cst : bf16 to vector<18x18x4xbf16>
    %c0_3 = arith.constant 0 : index
    %c0_4 = arith.constant 0 : index
    %c0_5 = arith.constant 0 : index
    %3 = vector.load %arg5[%c0_3, %c0_4, %c0_5] : memref<18x18x4xbf16, #tpu.memory_space<vmem>>, vector<18x18x4xbf16>
    tpu.vector_store %arg5[%c0_3, %c0_4, %c0_5], %2 {strides = array<i32>} : memref<18x18x4xbf16, #tpu.memory_space<vmem>>, vector<18x18x4xbf16>,
    %4 = arith.truncf %1 : vector<16x16x4xf32> to vector<16x16x4xbf16>
    %c1 = arith.constant 1 : index
    %c1_6 = arith.constant 1 : index
    %c0_7 = arith.constant 0 : index
    %5 = vector.load %arg5[%c1, %c1_6, %c0_7] : memref<18x18x4xbf16, #tpu.memory_space<vmem>>, vector<16x16x4xbf16>
    tpu.vector_store %arg5[%c1, %c1_6, %c0_7], %4 {strides = array<i32>} : memref<18x18x4xbf16, #tpu.memory_space<vmem>>, vector<16x16x4xbf16>,
    %cst_8 = arith.constant 0.000000e+00 : f32
    %6 = vector.broadcast %cst_8 : f32 to vector<256x4xf32>
    %c0_9 = arith.constant 0 : index
    %c0_10 = arith.constant 0 : index
    %c0_11 = arith.constant 0 : index
    %7 = vector.load %arg5[%c0_9, %c0_10, %c0_11] : memref<18x18x4xbf16, #tpu.memory_space<vmem>>, vector<16x16x4xbf16>
    %8 = vector.shape_cast %7 : vector<16x16x4xbf16> to vector<256x4xbf16>
    %c0_12 = arith.constant 0 : index
    %c0_13 = arith.constant 0 : index
    %c0_14 = arith.constant 0 : index
    %c0_15 = arith.constant 0 : index
    %9 = vector.load %arg2[%c0_12, %c0_13, %c0_14, %c0_15] : memref<3x3x4x4xbf16, #tpu.memory_space<vmem>>, vector<1x1x4x4xbf16>
    %10 = vector.shape_cast %9 : vector<1x1x4x4xbf16> to vector<4x4xbf16>
    %cst_16 = arith.constant dense<0.000000e+00> : vector<256x4xf32>
    %11 = tpu.matmul %8, %10, %cst_16 {dimension_numbers = #tpu.dot_dimension_numbers<[1], [0], [0], [1], [0, 0, 1, 1], [], []>} : vector<256x4xbf16>, vector<4x4xbf16>, vector<256x4xf32> -> vector<256x4xf32>
    %12 = arith.addf %6, %11 : vector<256x4xf32>
    %c0_17 = arith.constant 0 : index
    %c1_18 = arith.constant 1 : index
    %c0_19 = arith.constant 0 : index
    %13 = vector.load %arg5[%c0_17, %c1_18, %c0_19] : memref<18x18x4xbf16, #tpu.memory_space<vmem>>, vector<16x16x4xbf16>
    %14 = vector.shape_cast %13 : vector<16x16x4xbf16> to vector<256x4xbf16>
    %c0_20 = arith.constant 0 : index
    %c1_21 = arith.constant 1 : index
    %c0_22 = arith.constant 0 : index
    %c0_23 = arith.constant 0 : index
    %15 = vector.load %arg2[%c0_20, %c1_21, %c0_22, %c0_23] : memref<3x3x4x4xbf16, #tpu.memory_space<vmem>>, vector<1x1x4x4xbf16>
    %16 = vector.shape_cast %15 : vector<1x1x4x4xbf16> to vector<4x4xbf16>
    %cst_24 = arith.constant dense<0.000000e+00> : vector<256x4xf32>
    %17 = tpu.matmul %14, %16, %cst_24 {dimension_numbers = #tpu.dot_dimension_numbers<[1], [0], [0], [1], [0, 0, 1, 1], [], []>} : vector<256x4xbf16>, vector<4x4xbf16>, vector<256x4xf32> -> vector<256x4xf32>
    %18 = arith.addf %12, %17 : vector<256x4xf32>
    %c0_25 = arith.constant 0 : index
    %c2 = arith.constant 2 : index
    %c0_26 = arith.constant 0 : index
    %19 = vector.load %arg5[%c0_25, %c2, %c0_26] : memref<18x18x4xbf16, #tpu.memory_space<vmem>>, vector<16x16x4xbf16>
    %20 = vector.shape_cast %19 : vector<16x16x4xbf16> to vector<256x4xbf16>
    %c0_27 = arith.constant 0 : index
    %c2_28 = arith.constant 2 : index
    %c0_29 = arith.constant 0 : index
    %c0_30 = arith.constant 0 : index
    %21 = vector.load %arg2[%c0_27, %c2_28, %c0_29, %c0_30] : memref<3x3x4x4xbf16, #tpu.memory_space<vmem>>, vector<1x1x4x4xbf16>
    %22 = vector.shape_cast %21 : vector<1x1x4x4xbf16> to vector<4x4xbf16>
    %cst_31 = arith.constant dense<0.000000e+00> : vector<256x4xf32>
    %23 = tpu.matmul %20, %22, %cst_31 {dimension_numbers = #tpu.dot_dimension_numbers<[1], [0], [0], [1], [0, 0, 1, 1], [], []>} : vector<256x4xbf16>, vector<4x4xbf16>, vector<256x4xf32> -> vector<256x4xf32>
    %24 = arith.addf %18, %23 : vector<256x4xf32>
    %c1_32 = arith.constant 1 : index
    %c0_33 = arith.constant 0 : index
    %c0_34 = arith.constant 0 : index
    %25 = vector.load %arg5[%c1_32, %c0_33, %c0_34] : memref<18x18x4xbf16, #tpu.memory_space<vmem>>, vector<16x16x4xbf16>
    %26 = vector.shape_cast %25 : vector<16x16x4xbf16> to vector<256x4xbf16>
    %c1_35 = arith.constant 1 : index
    %c0_36 = arith.constant 0 : index
    %c0_37 = arith.constant 0 : index
    %c0_38 = arith.constant 0 : index
    %27 = vector.load %arg2[%c1_35, %c0_36, %c0_37, %c0_38] : memref<3x3x4x4xbf16, #tpu.memory_space<vmem>>, vector<1x1x4x4xbf16>
    %28 = vector.shape_cast %27 : vector<1x1x4x4xbf16> to vector<4x4xbf16>
    %cst_39 = arith.constant dense<0.000000e+00> : vector<256x4xf32>
    %29 = tpu.matmul %26, %28, %cst_39 {dimension_numbers = #tpu.dot_dimension_numbers<[1], [0], [0], [1], [0, 0, 1, 1], [], []>} : vector<256x4xbf16>, vector<4x4xbf16>, vector<256x4xf32> -> vector<256x4xf32>
    %30 = arith.addf %24, %29 : vector<256x4xf32>
    %c1_40 = arith.constant 1 : index
    %c1_41 = arith.constant 1 : index
    %c0_42 = arith.constant 0 : index
    %31 = vector.load %arg5[%c1_40, %c1_41, %c0_42] : memref<18x18x4xbf16, #tpu.memory_space<vmem>>, vector<16x16x4xbf16>
    %32 = vector.shape_cast %31 : vector<16x16x4xbf16> to vector<256x4xbf16>
    %c1_43 = arith.constant 1 : index
    %c1_44 = arith.constant 1 : index
    %c0_45 = arith.constant 0 : index
    %c0_46 = arith.constant 0 : index
    %33 = vector.load %arg2[%c1_43, %c1_44, %c0_45, %c0_46] : memref<3x3x4x4xbf16, #tpu.memory_space<vmem>>, vector<1x1x4x4xbf16>
    %34 = vector.shape_cast %33 : vector<1x1x4x4xbf16> to vector<4x4xbf16>
    %cst_47 = arith.constant dense<0.000000e+00> : vector<256x4xf32>
    %35 = tpu.matmul %32, %34, %cst_47 {dimension_numbers = #tpu.dot_dimension_numbers<[1], [0], [0], [1], [0, 0, 1, 1], [], []>} : vector<256x4xbf16>, vector<4x4xbf16>, vector<256x4xf32> -> vector<256x4xf32>
    %36 = arith.addf %30, %35 : vector<256x4xf32>
    %c1_48 = arith.constant 1 : index
    %c2_49 = arith.constant 2 : index
    %c0_50 = arith.constant 0 : index
    %37 = vector.load %arg5[%c1_48, %c2_49, %c0_50] : memref<18x18x4xbf16, #tpu.memory_space<vmem>>, vector<16x16x4xbf16>
    %38 = vector.shape_cast %37 : vector<16x16x4xbf16> to vector<256x4xbf16>
    %c1_51 = arith.constant 1 : index
    %c2_52 = arith.constant 2 : index
    %c0_53 = arith.constant 0 : index
    %c0_54 = arith.constant 0 : index
    %39 = vector.load %arg2[%c1_51, %c2_52, %c0_53, %c0_54] : memref<3x3x4x4xbf16, #tpu.memory_space<vmem>>, vector<1x1x4x4xbf16>
    %40 = vector.shape_cast %39 : vector<1x1x4x4xbf16> to vector<4x4xbf16>
    %cst_55 = arith.constant dense<0.000000e+00> : vector<256x4xf32>
    %41 = tpu.matmul %38, %40, %cst_55 {dimension_numbers = #tpu.dot_dimension_numbers<[1], [0], [0], [1], [0, 0, 1, 1], [], []>} : vector<256x4xbf16>, vector<4x4xbf16>, vector<256x4xf32> -> vector<256x4xf32>
    %42 = arith.addf %36, %41 : vector<256x4xf32>
    %c2_56 = arith.constant 2 : index
    %c0_57 = arith.constant 0 : index
    %c0_58 = arith.constant 0 : index
    %43 = vector.load %arg5[%c2_56, %c0_57, %c0_58] : memref<18x18x4xbf16, #tpu.memory_space<vmem>>, vector<16x16x4xbf16>
    %44 = vector.shape_cast %43 : vector<16x16x4xbf16> to vector<256x4xbf16>
    %c2_59 = arith.constant 2 : index
    %c0_60 = arith.constant 0 : index
    %c0_61 = arith.constant 0 : index
    %c0_62 = arith.constant 0 : index
    %45 = vector.load %arg2[%c2_59, %c0_60, %c0_61, %c0_62] : memref<3x3x4x4xbf16, #tpu.memory_space<vmem>>, vector<1x1x4x4xbf16>
    %46 = vector.shape_cast %45 : vector<1x1x4x4xbf16> to vector<4x4xbf16>
    %cst_63 = arith.constant dense<0.000000e+00> : vector<256x4xf32>
    %47 = tpu.matmul %44, %46, %cst_63 {dimension_numbers = #tpu.dot_dimension_numbers<[1], [0], [0], [1], [0, 0, 1, 1], [], []>} : vector<256x4xbf16>, vector<4x4xbf16>, vector<256x4xf32> -> vector<256x4xf32>
    %48 = arith.addf %42, %47 : vector<256x4xf32>
    %c2_64 = arith.constant 2 : index
    %c1_65 = arith.constant 1 : index
    %c0_66 = arith.constant 0 : index
    %49 = vector.load %arg5[%c2_64, %c1_65, %c0_66] : memref<18x18x4xbf16, #tpu.memory_space<vmem>>, vector<16x16x4xbf16>
    %50 = vector.shape_cast %49 : vector<16x16x4xbf16> to vector<256x4xbf16>
    %c2_67 = arith.constant 2 : index
    %c1_68 = arith.constant 1 : index
    %c0_69 = arith.constant 0 : index
    %c0_70 = arith.constant 0 : index
    %51 = vector.load %arg2[%c2_67, %c1_68, %c0_69, %c0_70] : memref<3x3x4x4xbf16, #tpu.memory_space<vmem>>, vector<1x1x4x4xbf16>
    %52 = vector.shape_cast %51 : vector<1x1x4x4xbf16> to vector<4x4xbf16>
    %cst_71 = arith.constant dense<0.000000e+00> : vector<256x4xf32>
    %53 = tpu.matmul %50, %52, %cst_71 {dimension_numbers = #tpu.dot_dimension_numbers<[1], [0], [0], [1], [0, 0, 1, 1], [], []>} : vector<256x4xbf16>, vector<4x4xbf16>, vector<256x4xf32> -> vector<256x4xf32>
    %54 = arith.addf %48, %53 : vector<256x4xf32>
    %c2_72 = arith.constant 2 : index
    %c2_73 = arith.constant 2 : index
    %c0_74 = arith.constant 0 : index
    %55 = vector.load %arg5[%c2_72, %c2_73, %c0_74] : memref<18x18x4xbf16, #tpu.memory_space<vmem>>, vector<16x16x4xbf16>
    %56 = vector.shape_cast %55 : vector<16x16x4xbf16> to vector<256x4xbf16>
    %c2_75 = arith.constant 2 : index
    %c2_76 = arith.constant 2 : index
    %c0_77 = arith.constant 0 : index
    %c0_78 = arith.constant 0 : index
    %57 = vector.load %arg2[%c2_75, %c2_76, %c0_77, %c0_78] : memref<3x3x4x4xbf16, #tpu.memory_space<vmem>>, vector<1x1x4x4xbf16>
    %58 = vector.shape_cast %57 : vector<1x1x4x4xbf16> to vector<4x4xbf16>
    %cst_79 = arith.constant dense<0.000000e+00> : vector<256x4xf32>
    %59 = tpu.matmul %56, %58, %cst_79 {dimension_numbers = #tpu.dot_dimension_numbers<[1], [0], [0], [1], [0, 0, 1, 1], [], []>} : vector<256x4xbf16>, vector<4x4xbf16>, vector<256x4xf32> -> vector<256x4xf32>
    %60 = arith.addf %54, %59 : vector<256x4xf32>
    %c0_80 = arith.constant 0 : index
    %c0_81 = arith.constant 0 : index
    %61 = vector.load %arg3[%c0_80, %c0_81] : memref<1x4xf32, #tpu.memory_space<vmem>>, vector<1x4xf32>
    %62 = vector.shape_cast %61 : vector<1x4xf32> to vector<4xf32>
    %63 = vector.shape_cast %62 : vector<4xf32> to vector<1x4xf32>
    %64 = vector.broadcast %63 : vector<1x4xf32> to vector<256x4xf32>
    %65 = arith.addf %60, %64 : vector<256x4xf32>
    %cst_82 = arith.constant 0.000000e+00 : f32
    %66 = vector.broadcast %cst_82 : f32 to vector<256x4xf32>
    %67 = arith.cmpf ogt, %65, %66 : vector<256x4xf32>
    %cst_83 = arith.constant 0.00999999977 : f32
    %68 = vector.broadcast %cst_83 : f32 to vector<256x4xf32>
    %69 = arith.mulf %68, %65 : vector<256x4xf32>
    %70 = arith.select %67, %65, %69 : vector<256x4xi1>, vector<256x4xf32>
    %71 = vector.shape_cast %70 : vector<256x4xf32> to vector<16x16x4xf32>
    %72 = arith.truncf %71 : vector<16x16x4xf32> to vector<16x16x4xbf16>
    %c0_84 = arith.constant 0 : index
    %c0_85 = arith.constant 0 : index
    %c0_86 = arith.constant 0 : index
    %c0_87 = arith.constant 0 : index
    %73 = vector.load %arg4[%c0_84, %c0_85, %c0_86, %c0_87] : memref<1x16x16x4xbf16, #tpu.memory_space<vmem>>, vector<1x16x16x4xbf16>
    %74 = vector.shape_cast %73 : vector<1x16x16x4xbf16> to vector<16x16x4xbf16>
    %75 = vector.shape_cast %72 : vector<16x16x4xbf16> to vector<1x16x16x4xbf16>
    tpu.vector_store %arg4[%c0_84, %c0_85, %c0_86, %c0_87], %75 {strides = array<i32>} : memref<1x16x16x4xbf16, #tpu.memory_space<vmem>>, vector<1x16x16x4xbf16>,
    return
  }
  func.func @transform_0(%arg0: i32) -> (i32, i32, i32, i32) {
    %c0_i32 = arith.constant 0 : i32
    %c0_i32_0 = arith.constant 0 : i32
    %c0_i32_1 = arith.constant 0 : i32
    %c0_i32_2 = arith.constant 0 : i32
    return %arg0, %c0_i32, %c0_i32_0, %c0_i32_1 : i32, i32, i32, i32
  }
  func.func @transform_1(%arg0: i32) -> (i32, i32, i32, i32) {
    %c0_i32 = arith.constant 0 : i32
    %c0_i32_0 = arith.constant 0 : i32
    %c0_i32_1 = arith.constant 0 : i32
    %c0_i32_2 = arith.constant 0 : i32
    %c0_i32_3 = arith.constant 0 : i32
    return %c0_i32, %c0_i32_0, %c0_i32_1, %c0_i32_2 : i32, i32, i32, i32
  }
  func.func @transform_2(%arg0: i32) -> (i32, i32) {
    %c0_i32 = arith.constant 0 : i32
    %c0_i32_0 = arith.constant 0 : i32
    %c0_i32_1 = arith.constant 0 : i32
    return %c0_i32, %c0_i32_0 : i32, i32
  }
  func.func @transform_3(%arg0: i32) -> (i32, i32, i32, i32) {
    %c0_i32 = arith.constant 0 : i32
    %c0_i32_0 = arith.constant 0 : i32
    %c0_i32_1 = arith.constant 0 : i32
    %c0_i32_2 = arith.constant 0 : i32
    return %arg0, %c0_i32, %c0_i32_0, %c0_i32_1 : i32, i32, i32, i32
  }
}

</mosaic_0001>

<llo_original>
// kernel: tpu_custom_call.1
$region0: #{tpu_custom_call.1}
  #allocation0 [shape = 'u32[]', space=smem, size = 0x4, offset = 0x4, fixed_abs, tag = 'smem constant byte address 0x4 - core index']
  #allocation1 [shape = 'u32[72,128]{1,0:T(1,128)}', space=vmem, size = 0x9000, scoped, tag = 'internal scratch']
  #allocation2 [shape = 'bf16[18,18,4]{2,1,0:T(8,128)(2,1)}', space=vmem, size = 0x1b000, scoped, tag = 'scratch operand']
  %s0 = inlined_call_operand.vmem [shape: f32[2,16,16,4], index: 0, kind: input, shape index: {}]
  %s1 = inlined_call_operand.vmem [shape: bf16[3,3,4,4], index: 1, kind: input, shape index: {}]
  %s2 = inlined_call_operand.vmem [shape: f32[1,4], index: 2, kind: input, shape index: {}]
  %s3 = inlined_call_operand.vmem [shape: bf16[2,16,16,4], index: 3, kind: output, shape index: {}]
  %s4 = sld [smem:[#allocation0]]
  $region45: #{tpu_custom_call.1} parent=0
    _
  %s6 = ssub.s32 1, %s4
  %s7 = scalar_select 0, %s6, %s4
  loop: start=0, step=1, limit=4
  $region2: #{tpu_custom_call.1} parent=0 // loop_pre_header
    _
  $region3: #{tpu_custom_call.1} parent=0 // loop_header
    %s9 = sphi 0, %s13
    %p10 = scmp.ge.s32.totalorder %s9, 4
    %s19 = sphi 0, %s21
    %s22 = sphi 0, %s19
    %s23 = sphi 0, %s22
    %s39 = sphi 0, %s23
    %s43 = sphi 0, %s43
    %s45 = sphi 0, %s43
    %s46 = sphi 0, %s45
    %s60 = sphi 0, %s46
    %s64 = sphi 0, %s64
    %s66 = sphi 0, %s64
    %s67 = sphi 0, %s66
    %s81 = sphi 0, %s67
    %s87 = sphi 0, %s89
    %s90 = sphi 0, %s87
    %s91 = sphi 0, %s90
    %s107 = sphi 0, %s91
  $region4: #{tpu_custom_call.1} parent=0 // loop_header_branch
    %12 = sbr.rel (%p10) target = $region8
  $region5: #{tpu_custom_call.1} parent=0 // loop_body
    %s14 = ssub.s32 %s9, 1
    %s15 = ssub.s32 %s9, 2
    %s16 = sadd.s32 %s9, 1
    %s17 = ssub.s32 %s9, %s16
    %p18 = scmp.eq.s32.totalorder %s17, 0
    %s20 = sadd.s32 %s19, 1
    %s21 = scalar_select %p18, %s19, %s20
    %p24 = pneg %p18
    %p25 = scmp.eq.s32.totalorder %s9, 1
    %p26 = por %p24, %p25
    %p27 = scmp.ne.s32.totalorder %s19, %s22
    %p28 = scmp.eq.s32.totalorder %s9, 0
    %p29 = por %p27, %p28
    %p30 = scmp.ne.s32.totalorder %s19, %s22
    %p31 = scmp.eq.s32.totalorder %s14, 1
    %p32 = por %p30, %p31
    %p33 = scmp.ne.s32.totalorder %s22, %s23
    %p34 = scmp.eq.s32.totalorder %s14, 0
    %p35 = por %p33, %p34
    %p36 = scmp.ne.s32.totalorder %s22, %s23
    %p37 = scmp.eq.s32.totalorder %s15, 1
    %p38 = por %p36, %p37
    %p40 = scmp.ne.s32.totalorder %s23, %s39
    %p41 = scmp.eq.s32.totalorder %s15, 0
    %p42 = por %p40, %p41
    %s44 = sadd.s32 %s43, 1
    %p47 = scmp.eq.s32.totalorder %s9, 1
    %p48 = scmp.ne.s32.totalorder %s43, %s45
    %p49 = scmp.eq.s32.totalorder %s9, 0
    %p50 = por %p48, %p49
    %p51 = scmp.ne.s32.totalorder %s43, %s45
    %p52 = scmp.eq.s32.totalorder %s14, 1
    %p53 = por %p51, %p52
    %p54 = scmp.ne.s32.totalorder %s45, %s46
    %p55 = scmp.eq.s32.totalorder %s14, 0
    %p56 = por %p54, %p55
    %p57 = scmp.ne.s32.totalorder %s45, %s46
    %p58 = scmp.eq.s32.totalorder %s15, 1
    %p59 = por %p57, %p58
    %p61 = scmp.ne.s32.totalorder %s46, %s60
    %p62 = scmp.eq.s32.totalorder %s15, 0
    %p63 = por %p61, %p62
    %s65 = sadd.s32 %s64, 1
    %p68 = scmp.eq.s32.totalorder %s9, 1
    %p69 = scmp.ne.s32.totalorder %s64, %s66
    %p70 = scmp.eq.s32.totalorder %s9, 0
    %p71 = por %p69, %p70
    %p72 = scmp.ne.s32.totalorder %s64, %s66
    %p73 = scmp.eq.s32.totalorder %s14, 1
    %p74 = por %p72, %p73
    %p75 = scmp.ne.s32.totalorder %s66, %s67
    %p76 = scmp.eq.s32.totalorder %s14, 0
    %p77 = por %p75, %p76
    %p78 = scmp.ne.s32.totalorder %s66, %s67
    %p79 = scmp.eq.s32.totalorder %s15, 1
    %p80 = por %p78, %p79
    %p82 = scmp.ne.s32.totalorder %s67, %s81
    %p83 = scmp.eq.s32.totalorder %s15, 0
    %p84 = por %p82, %p83
    %s85 = ssub.s32 %s9, %s16
    %p86 = scmp.eq.s32.totalorder %s85, 0
    %s88 = sadd.s32 %s87, 1
    %s89 = scalar_select %p86, %s87, %s88
    %p92 = pneg %p86
    %p93 = scmp.eq.s32.totalorder %s9, 1
    %p94 = por %p92, %p93
    %p95 = scmp.ne.s32.totalorder %s87, %s90
    %p96 = scmp.eq.s32.totalorder %s9, 0
    %p97 = por %p95, %p96
    %p98 = scmp.ne.s32.totalorder %s87, %s90
    %p99 = scmp.eq.s32.totalorder %s14, 1
    %p100 = por %p98, %p99
    %p101 = scmp.ne.s32.totalorder %s90, %s91
    %p102 = scmp.eq.s32.totalorder %s14, 0
    %p103 = por %p101, %p102
    %p104 = scmp.ne.s32.totalorder %s90, %s91
    %p105 = scmp.eq.s32.totalorder %s15, 1
    %p106 = por %p104, %p105
    %p108 = scmp.ne.s32.totalorder %s91, %s107
    %p109 = scmp.eq.s32.totalorder %s15, 0
    %p110 = por %p108, %p109
    %p111 = scmp.le.s32.totalorder 1, %s9
    %p112 = scmp.lt.s32.totalorder %s9, 3
    %p113 = pnand %p111, %p112
    %p114 = pneg %p113
    // Predicated region
    $region9: #{tpu_custom_call.1} parent=5 // pred_check
      _
    $region10: #{tpu_custom_call.1} parent=5 // pred_check_branch
      %116 = sbr.rel (%p113) target = $region12
    $region11: #{tpu_custom_call.1} parent=5 // pred_region
      %s117 = ssub.s32 %s9, 1
      // Predicated region
      $region13: #{tpu_custom_call.1} parent=11 // pred_check
        %p118 = pneg %p56
      $region14: #{tpu_custom_call.1} parent=11 // pred_check_branch
        %120 = sbr.rel (%p118) target = $region16
      $region15: #{tpu_custom_call.1} parent=11 // pred_region
        _
      $region16: #{tpu_custom_call.1} parent=11 // pred_fallthru
        _
      // Predicated region
      $region17: #{tpu_custom_call.1} parent=11 // pred_check
        %p121 = pneg %p77
      $region18: #{tpu_custom_call.1} parent=11 // pred_check_branch
        %123 = sbr.rel (%p121) target = $region20
      $region19: #{tpu_custom_call.1} parent=11 // pred_region
        _
      $region20: #{tpu_custom_call.1} parent=11 // pred_fallthru
        _
    $region12: #{tpu_custom_call.1} parent=5 // pred_fallthru
      _
    %p124 = scmp.lt.s32.totalorder %s9, 2
    // Predicated region
    $region21: #{tpu_custom_call.1} parent=5 // pred_check
      %p125 = pneg %p124
    $region22: #{tpu_custom_call.1} parent=5 // pred_check_branch
      %127 = sbr.rel (%p125) target = $region24
    $region23: #{tpu_custom_call.1} parent=5 // pred_region
      // Predicated region
      $region25: #{tpu_custom_call.1} parent=23 // pred_check
        %p128 = pneg %p29
      $region26: #{tpu_custom_call.1} parent=23 // pred_check_branch
        %130 = sbr.rel (%p128) target = $region28
      $region27: #{tpu_custom_call.1} parent=23 // pred_region
        %p131 = scmp.lt.s32.totalorder %s9, 1
        %s132 = scalar_select %p131, %s9, 1
        %s133 = smul.addr %s132, 32
        %s134 = smul.addr %s133, 8
        %s135 = scalar_lea.vmem %s0, %s134
      $region28: #{tpu_custom_call.1} parent=23 // pred_fallthru
        _
    $region24: #{tpu_custom_call.1} parent=5 // pred_fallthru
      _
    %p136 = scmp.le.s32.totalorder 1, %s9
    %p137 = scmp.lt.s32.totalorder %s9, 3
    %p138 = pnand %p136, %p137
    %p139 = pneg %p138
    // Predicated region
    $region29: #{tpu_custom_call.1} parent=5 // pred_check
      _
    $region30: #{tpu_custom_call.1} parent=5 // pred_check_branch
      %141 = sbr.rel (%p138) target = $region32
    $region31: #{tpu_custom_call.1} parent=5 // pred_region
      %s142 = ssub.s32 %s9, 1
      %p143 = scmp.lt.s32.totalorder %s14, 1
      %s144 = scalar_select %p143, %s14, 1
      %s145 = smul.addr %s144, 32
      %s146 = smul.addr %s145, 8
      %s147 = scalar_lea.vmem %s0, %s146
      %p148 = pneg %p35
      %p149 = pneg %p32
      %p150 = pneg %p56
      %p151 = pneg %p53
      %p152 = pneg %p77
      %p153 = pneg %p74
      %p154 = pneg %p103
      %p155 = pneg %p100
      %p156 = scmp.lt.s32.totalorder %s14, 1
      %s157 = scalar_select %p156, %s14, 1
      %s158 = smul.addr %s157, 32
      %s159 = smul.addr %s158, 4
      %s160 = scalar_lea.vmem %s3, %s159
      %p161 = scmp.lt.s32.totalorder %s14, 1
      %s162 = scalar_select %p161, %s14, 1
      %s163 = smul.addr %s162, 32
      %s164 = smul.addr %s163, 8
      %s165 = scalar_lea.vmem %s0, %s164
      %p166 = scmp.lt.s32.totalorder %s14, 1
      %s167 = scalar_select %p166, %s14, 1
      %s168 = smul.addr %s167, 32
      %s169 = smul.addr %s168, 4
      %s170 = scalar_lea.vmem %s3, %s169
      %v172 = vld [vmem:[%s165] sm:$0xff]
      %v173 = vld [vmem:[%s165 + $0x8] sm:$0xff]
      %v174 = vld [vmem:[%s165 + $0x10] sm:$0xff]
      %v175 = vld [vmem:[%s165 + $0x18] sm:$0xff]
      %v176 = vld [vmem:[%s165 + $0x20] sm:$0xff]
      %v177 = vld [vmem:[%s165 + $0x28] sm:$0xff]
      %v178 = vld [vmem:[%s165 + $0x30] sm:$0xff]
      %v179 = vld [vmem:[%s165 + $0x38] sm:$0xff]
      %v180 = vld [vmem:[%s165 + $0x40] sm:$0xff]
      %v181 = vld [vmem:[%s165 + $0x48] sm:$0xff]
      %v182 = vld [vmem:[%s165 + $0x50] sm:$0xff]
      %v183 = vld [vmem:[%s165 + $0x58] sm:$0xff]
      %v184 = vld [vmem:[%s165 + $0x60] sm:$0xff]
      %v185 = vld [vmem:[%s165 + $0x68] sm:$0xff]
      %v186 = vld [vmem:[%s165 + $0x70] sm:$0xff]
      %v187 = vld [vmem:[%s165 + $0x78] sm:$0xff]
      %v188 = vld [vmem:[%s165 + $0x80] sm:$0xff]
      %v189 = vld [vmem:[%s165 + $0x88] sm:$0xff]
      %v190 = vld [vmem:[%s165 + $0x90] sm:$0xff]
      %v191 = vld [vmem:[%s165 + $0x98] sm:$0xff]
      %v192 = vld [vmem:[%s165 + $0xa0] sm:$0xff]
      %v193 = vld [vmem:[%s165 + $0xa8] sm:$0xff]
      %v194 = vld [vmem:[%s165 + $0xb0] sm:$0xff]
      %v195 = vld [vmem:[%s165 + $0xb8] sm:$0xff]
      %v196 = vld [vmem:[%s165 + $0xc0] sm:$0xff]
      %v197 = vld [vmem:[%s165 + $0xc8] sm:$0xff]
      %v198 = vld [vmem:[%s165 + $0xd0] sm:$0xff]
      %v199 = vld [vmem:[%s165 + $0xd8] sm:$0xff]
      %v200 = vld [vmem:[%s165 + $0xe0] sm:$0xff]
      %v201 = vld [vmem:[%s165 + $0xe8] sm:$0xff]
      %v202 = vld [vmem:[%s165 + $0xf0] sm:$0xff]
      %v203 = vld [vmem:[%s165 + $0xf8] sm:$0xff]
      %vm204 = vcmask 27648
      %205 = vst.msk [vmem:[#allocation2] sm:$0xf] %vm204, 0
      %206 = vst.msk [vmem:[#allocation2 + $0x4] sm:$0xf] %vm204, 0
      %vm207 = vcmask 24576
      %208 = vst.msk [vmem:[#allocation2 + $0x8] sm:$0x1] %vm207, 0
      %209 = vst.msk [vmem:[#allocation2 + $0xc] sm:$0xf] %vm204, 0
      %210 = vst.msk [vmem:[#allocation2 + $0x10] sm:$0xf] %vm204, 0
      %211 = vst.msk [vmem:[#allocation2 + $0x14] sm:$0x1] %vm207, 0
      %212 = vst.msk [vmem:[#allocation2 + $0x18] sm:$0xf] %vm204, 0
      %213 = vst.msk [vmem:[#allocation2 + $0x1c] sm:$0xf] %vm204, 0
      %214 = vst.msk [vmem:[#allocation2 + $0x20] sm:$0x1] %vm207, 0
      %215 = vst.msk [vmem:[#allocation2 + $0x24] sm:$0xf] %vm204, 0
      %216 = vst.msk [vmem:[#allocation2 + $0x28] sm:$0xf] %vm204, 0
      %217 = vst.msk [vmem:[#allocation2 + $0x2c] sm:$0x1] %vm207, 0
      %218 = vst.msk [vmem:[#allocation2 + $0x30] sm:$0xf] %vm204, 0
      %219 = vst.msk [vmem:[#allocation2 + $0x34] sm:$0xf] %vm204, 0
      %220 = vst.msk [vmem:[#allocation2 + $0x38] sm:$0x1] %vm207, 0
      %221 = vst.msk [vmem:[#allocation2 + $0x3c] sm:$0xf] %vm204, 0
      %222 = vst.msk [vmem:[#allocation2 + $0x40] sm:$0xf] %vm204, 0
      %223 = vst.msk [vmem:[#allocation2 + $0x44] sm:$0x1] %vm207, 0
      %224 = vst.msk [vmem:[#allocation2 + $0x48] sm:$0xf] %vm204, 0
      %225 = vst.msk [vmem:[#allocation2 + $0x4c] sm:$0xf] %vm204, 0
      %226 = vst.msk [vmem:[#allocation2 + $0x50] sm:$0x1] %vm207, 0
      %227 = vst.msk [vmem:[#allocation2 + $0x54] sm:$0xf] %vm204, 0
      %228 = vst.msk [vmem:[#allocation2 + $0x58] sm:$0xf] %vm204, 0
      %229 = vst.msk [vmem:[#allocation2 + $0x5c] sm:$0x1] %vm207, 0
      %230 = vst.msk [vmem:[#allocation2 + $0x60] sm:$0xf] %vm204, 0
      %231 = vst.msk [vmem:[#allocation2 + $0x64] sm:$0xf] %vm204, 0
      %232 = vst.msk [vmem:[#allocation2 + $0x68] sm:$0x1] %vm207, 0
      %233 = vst.msk [vmem:[#allocation2 + $0x6c] sm:$0xf] %vm204, 0
      %234 = vst.msk [vmem:[#allocation2 + $0x70] sm:$0xf] %vm204, 0
      %235 = vst.msk [vmem:[#allocation2 + $0x74] sm:$0x1] %vm207, 0
      %236 = vst.msk [vmem:[#allocation2 + $0x78] sm:$0xf] %vm204, 0
      %237 = vst.msk [vmem:[#allocation2 + $0x7c] sm:$0xf] %vm204, 0
      %238 = vst.msk [vmem:[#allocation2 + $0x80] sm:$0x1] %vm207, 0
      %239 = vst.msk [vmem:[#allocation2 + $0x84] sm:$0xf] %vm204, 0
      %240 = vst.msk [vmem:[#allocation2 + $0x88] sm:$0xf] %vm204, 0
      %241 = vst.msk [vmem:[#allocation2 + $0x8c] sm:$0x1] %vm207, 0
      %242 = vst.msk [vmem:[#allocation2 + $0x90] sm:$0xf] %vm204, 0
      %243 = vst.msk [vmem:[#allocation2 + $0x94] sm:$0xf] %vm204, 0
      %244 = vst.msk [vmem:[#allocation2 + $0x98] sm:$0x1] %vm207, 0
      %245 = vst.msk [vmem:[#allocation2 + $0x9c] sm:$0xf] %vm204, 0
      %246 = vst.msk [vmem:[#allocation2 + $0xa0] sm:$0xf] %vm204, 0
      %247 = vst.msk [vmem:[#allocation2 + $0xa4] sm:$0x1] %vm207, 0
      %248 = vst.msk [vmem:[#allocation2 + $0xa8] sm:$0xf] %vm204, 0
      %249 = vst.msk [vmem:[#allocation2 + $0xac] sm:$0xf] %vm204, 0
      %250 = vst.msk [vmem:[#allocation2 + $0xb0] sm:$0x1] %vm207, 0
      %251 = vst.msk [vmem:[#allocation2 + $0xb4] sm:$0xf] %vm204, 0
      %252 = vst.msk [vmem:[#allocation2 + $0xb8] sm:$0xf] %vm204, 0
      %253 = vst.msk [vmem:[#allocation2 + $0xbc] sm:$0x1] %vm207, 0
      %254 = vst.msk [vmem:[#allocation2 + $0xc0] sm:$0xf] %vm204, 0
      %255 = vst.msk [vmem:[#allocation2 + $0xc4] sm:$0xf] %vm204, 0
      %256 = vst.msk [vmem:[#allocation2 + $0xc8] sm:$0x1] %vm207, 0
      %257 = vst.msk [vmem:[#allocation2 + $0xcc] sm:$0xf] %vm204, 0
      %258 = vst.msk [vmem:[#allocation2 + $0xd0] sm:$0xf] %vm204, 0
      %259 = vst.msk [vmem:[#allocation2 + $0xd4] sm:$0x1] %vm207, 0
      %v260 = vpack.c.bf16 %v172, %v172
      %v261 = vpack.c.bf16 %v173, %v173
      %v262 = vpack.c.bf16 %v174, %v174
      %v263 = vpack.c.bf16 %v175, %v175
      %v264 = vpack.c.bf16 %v176, %v176
      %v265 = vpack.c.bf16 %v177, %v177
      %v266 = vpack.c.bf16 %v178, %v178
      %v267 = vpack.c.bf16 %v179, %v179
      %v268 = vpack.c.bf16 %v180, %v180
      %v269 = vpack.c.bf16 %v181, %v181
      %v270 = vpack.c.bf16 %v182, %v182
      %v271 = vpack.c.bf16 %v183, %v183
      %v272 = vpack.c.bf16 %v184, %v184
      %v273 = vpack.c.bf16 %v185, %v185
      %v274 = vpack.c.bf16 %v186, %v186
      %v275 = vpack.c.bf16 %v187, %v187
      %v276 = vpack.c.bf16 %v188, %v188
      %v277 = vpack.c.bf16 %v189, %v189
      %v278 = vpack.c.bf16 %v190, %v190
      %v279 = vpack.c.bf16 %v191, %v191
      %v280 = vpack.c.bf16 %v192, %v192
      %v281 = vpack.c.bf16 %v193, %v193
      %v282 = vpack.c.bf16 %v194, %v194
      %v283 = vpack.c.bf16 %v195, %v195
      %v284 = vpack.c.bf16 %v196, %v196
      %v285 = vpack.c.bf16 %v197, %v197
      %v286 = vpack.c.bf16 %v198, %v198
      %v287 = vpack.c.bf16 %v199, %v199
      %v288 = vpack.c.bf16 %v200, %v200
      %v289 = vpack.c.bf16 %v201, %v201
      %v290 = vpack.c.bf16 %v202, %v202
      %v291 = vpack.c.bf16 %v203, %v203
      %vm292 = vsmask.f32 256
      %vm293 = vsmask.f32 4368
      %vm294 = vmor %vm292, %vm293
      %v296 = vshrl.u32 %v260, 16
      %v298 = vrot.slane %v296, 7
      %v299 = vshll.u32 %v260, 16
      %v301 = vor.u32 %v298, %v299
      %v302 = vrot.slane %v298, 4
      %v304 = vshrl.u32 %v261, 16
      %v306 = vrot.slane %v304, 7
      %v307 = vshll.u32 %v261, 16
      %v309 = vor.u32 %v306, %v307
      %v310 = vsel %vm294, %v302, %v309
      %v311 = vrot.slane %v306, 4
      %v313 = vshrl.u32 %v262, 16
      %v315 = vrot.slane %v313, 7
      %v316 = vshll.u32 %v262, 16
      %v318 = vor.u32 %v315, %v316
      %v319 = vrot.slane %v315, 4
      %v321 = vshrl.u32 %v263, 16
      %v323 = vrot.slane %v321, 7
      %v324 = vshll.u32 %v263, 16
      %v326 = vor.u32 %v323, %v324
      %v327 = vsel %vm294, %v319, %v326
      %v328 = vrot.slane %v323, 4
      %v330 = vshrl.u32 %v264, 16
      %v332 = vrot.slane %v330, 7
      %v333 = vshll.u32 %v264, 16
      %v335 = vor.u32 %v332, %v333
      %v336 = vrot.slane %v332, 4
      %v338 = vshrl.u32 %v265, 16
      %v340 = vrot.slane %v338, 7
      %v341 = vshll.u32 %v265, 16
      %v343 = vor.u32 %v340, %v341
      %v344 = vsel %vm294, %v336, %v343
      %v345 = vrot.slane %v340, 4
      %v347 = vshrl.u32 %v266, 16
      %v349 = vrot.slane %v347, 7
      %v350 = vshll.u32 %v266, 16
      %v352 = vor.u32 %v349, %v350
      %v353 = vrot.slane %v349, 4
      %v355 = vshrl.u32 %v267, 16
      %v357 = vrot.slane %v355, 7
      %v358 = vshll.u32 %v267, 16
      %v360 = vor.u32 %v357, %v358
      %v361 = vsel %vm294, %v353, %v360
      %v362 = vrot.slane %v357, 4
      %v364 = vshrl.u32 %v268, 16
      %v366 = vrot.slane %v364, 7
      %v367 = vshll.u32 %v268, 16
      %v369 = vor.u32 %v366, %v367
      %v370 = vrot.slane %v366, 4
      %v372 = vshrl.u32 %v269, 16
      %v374 = vrot.slane %v372, 7
      %v375 = vshll.u32 %v269, 16
      %v377 = vor.u32 %v374, %v375
      %v378 = vsel %vm294, %v370, %v377
      %v379 = vrot.slane %v374, 4
      %v381 = vshrl.u32 %v270, 16
      %v383 = vrot.slane %v381, 7
      %v384 = vshll.u32 %v270, 16
      %v386 = vor.u32 %v383, %v384
      %v387 = vrot.slane %v383, 4
      %v389 = vshrl.u32 %v271, 16
      %v391 = vrot.slane %v389, 7
      %v392 = vshll.u32 %v271, 16
      %v394 = vor.u32 %v391, %v392
      %v395 = vsel %vm294, %v387, %v394
      %v396 = vrot.slane %v391, 4
      %v398 = vshrl.u32 %v272, 16
      %v400 = vrot.slane %v398, 7
      %v401 = vshll.u32 %v272, 16
      %v403 = vor.u32 %v400, %v401
      %v404 = vrot.slane %v400, 4
      %v406 = vshrl.u32 %v273, 16
      %v408 = vrot.slane %v406, 7
      %v409 = vshll.u32 %v273, 16
      %v411 = vor.u32 %v408, %v409
      %v412 = vsel %vm294, %v404, %v411
      %v413 = vrot.slane %v408, 4
      %v415 = vshrl.u32 %v274, 16
      %v417 = vrot.slane %v415, 7
      %v418 = vshll.u32 %v274, 16
      %v420 = vor.u32 %v417, %v418
      %v421 = vrot.slane %v417, 4
      %v423 = vshrl.u32 %v275, 16
      %v425 = vrot.slane %v423, 7
      %v426 = vshll.u32 %v275, 16
      %v428 = vor.u32 %v425, %v426
      %v429 = vsel %vm294, %v421, %v428
      %v430 = vrot.slane %v425, 4
      %v432 = vshrl.u32 %v276, 16
      %v434 = vrot.slane %v432, 7
      %v435 = vshll.u32 %v276, 16
      %v437 = vor.u32 %v434, %v435
      %v438 = vrot.slane %v434, 4
      %v440 = vshrl.u32 %v277, 16
      %v442 = vrot.slane %v440, 7
      %v443 = vshll.u32 %v277, 16
      %v445 = vor.u32 %v442, %v443
      %v446 = vsel %vm294, %v438, %v445
      %v447 = vrot.slane %v442, 4
      %v449 = vshrl.u32 %v278, 16
      %v451 = vrot.slane %v449, 7
      %v452 = vshll.u32 %v278, 16
      %v454 = vor.u32 %v451, %v452
      %v455 = vrot.slane %v451, 4
      %v457 = vshrl.u32 %v279, 16
      %v459 = vrot.slane %v457, 7
      %v460 = vshll.u32 %v279, 16
      %v462 = vor.u32 %v459, %v460
      %v463 = vsel %vm294, %v455, %v462
      %v464 = vrot.slane %v459, 4
      %v466 = vshrl.u32 %v280, 16
      %v468 = vrot.slane %v466, 7
      %v469 = vshll.u32 %v280, 16
      %v471 = vor.u32 %v468, %v469
      %v472 = vrot.slane %v468, 4
      %v474 = vshrl.u32 %v281, 16
      %v476 = vrot.slane %v474, 7
      %v477 = vshll.u32 %v281, 16
      %v479 = vor.u32 %v476, %v477
      %v480 = vsel %vm294, %v472, %v479
      %v481 = vrot.slane %v476, 4
      %v483 = vshrl.u32 %v282, 16
      %v485 = vrot.slane %v483, 7
      %v486 = vshll.u32 %v282, 16
      %v488 = vor.u32 %v485, %v486
      %v489 = vrot.slane %v485, 4
      %v491 = vshrl.u32 %v283, 16
      %v493 = vrot.slane %v491, 7
      %v494 = vshll.u32 %v283, 16
      %v496 = vor.u32 %v493, %v494
      %v497 = vsel %vm294, %v489, %v496
      %v498 = vrot.slane %v493, 4
      %v500 = vshrl.u32 %v284, 16
      %v502 = vrot.slane %v500, 7
      %v503 = vshll.u32 %v284, 16
      %v505 = vor.u32 %v502, %v503
      %v506 = vrot.slane %v502, 4
      %v508 = vshrl.u32 %v285, 16
      %v510 = vrot.slane %v508, 7
      %v511 = vshll.u32 %v285, 16
      %v513 = vor.u32 %v510, %v511
      %v514 = vsel %vm294, %v506, %v513
      %v515 = vrot.slane %v510, 4
      %v517 = vshrl.u32 %v286, 16
      %v519 = vrot.slane %v517, 7
      %v520 = vshll.u32 %v286, 16
      %v522 = vor.u32 %v519, %v520
      %v523 = vrot.slane %v519, 4
      %v525 = vshrl.u32 %v287, 16
      %v527 = vrot.slane %v525, 7
      %v528 = vshll.u32 %v287, 16
      %v530 = vor.u32 %v527, %v528
      %v531 = vsel %vm294, %v523, %v530
      %v532 = vrot.slane %v527, 4
      %v534 = vshrl.u32 %v288, 16
      %v536 = vrot.slane %v534, 7
      %v537 = vshll.u32 %v288, 16
      %v539 = vor.u32 %v536, %v537
      %v540 = vrot.slane %v536, 4
      %v542 = vshrl.u32 %v289, 16
      %v544 = vrot.slane %v542, 7
      %v545 = vshll.u32 %v289, 16
      %v547 = vor.u32 %v544, %v545
      %v548 = vsel %vm294, %v540, %v547
      %v549 = vrot.slane %v544, 4
      %v551 = vshrl.u32 %v290, 16
      %v553 = vrot.slane %v551, 7
      %v554 = vshll.u32 %v290, 16
      %v556 = vor.u32 %v553, %v554
      %v557 = vrot.slane %v553, 4
      %v559 = vshrl.u32 %v291, 16
      %v561 = vrot.slane %v559, 7
      %v562 = vshll.u32 %v291, 16
      %v564 = vor.u32 %v561, %v562
      %v565 = vsel %vm294, %v557, %v564
      %v566 = vrot.slane %v561, 4
      %s615 = scalar_lea.vmem [#allocation2], 12
      %vm616 = vcmask 27648
      %vm617 = vsmask.f32 7938
      %vm618 = vmand %vm616, %vm617
      %v619 = vld [vmem:[%s615] sm:$0xf]
      %v620 = vsel %vm618, %v301, %v619
      %621 = vst [vmem:[%s615] sm:$0xf] %v620
      %622 = vst.msk [vmem:[%s615 + $0x4] sm:$0xf] %vm204, %v310
      %vm623 = vcmask 24576
      %vm624 = vmand %vm623, %vm292
      %v625 = vld [vmem:[%s615 + $0x8] sm:$0x1]
      %v626 = vsel %vm624, %v311, %v625
      %627 = vst [vmem:[%s615 + $0x8] sm:$0x1] %v626
      %v628 = vld [vmem:[%s615 + $0xc] sm:$0xf]
      %v629 = vsel %vm618, %v318, %v628
      %630 = vst [vmem:[%s615 + $0xc] sm:$0xf] %v629
      %631 = vst.msk [vmem:[%s615 + $0x10] sm:$0xf] %vm204, %v327
      %v632 = vld [vmem:[%s615 + $0x14] sm:$0x1]
      %v633 = vsel %vm624, %v328, %v632
      %634 = vst [vmem:[%s615 + $0x14] sm:$0x1] %v633
      %v635 = vld [vmem:[%s615 + $0x18] sm:$0xf]
      %v636 = vsel %vm618, %v335, %v635
      %637 = vst [vmem:[%s615 + $0x18] sm:$0xf] %v636
      %638 = vst.msk [vmem:[%s615 + $0x1c] sm:$0xf] %vm204, %v344
      %v639 = vld [vmem:[%s615 + $0x20] sm:$0x1]
      %v640 = vsel %vm624, %v345, %v639
      %641 = vst [vmem:[%s615 + $0x20] sm:$0x1] %v640
      %v642 = vld [vmem:[%s615 + $0x24] sm:$0xf]
      %v643 = vsel %vm618, %v352, %v642
      %644 = vst [vmem:[%s615 + $0x24] sm:$0xf] %v643
      %645 = vst.msk [vmem:[%s615 + $0x28] sm:$0xf] %vm204, %v361
      %v646 = vld [vmem:[%s615 + $0x2c] sm:$0x1]
      %v647 = vsel %vm624, %v362, %v646
      %648 = vst [vmem:[%s615 + $0x2c] sm:$0x1] %v647
      %v649 = vld [vmem:[%s615 + $0x30] sm:$0xf]
      %v650 = vsel %vm618, %v369, %v649
      %651 = vst [vmem:[%s615 + $0x30] sm:$0xf] %v650
      %652 = vst.msk [vmem:[%s615 + $0x34] sm:$0xf] %vm204, %v378
      %v653 = vld [vmem:[%s615 + $0x38] sm:$0x1]
      %v654 = vsel %vm624, %v379, %v653
      %655 = vst [vmem:[%s615 + $0x38] sm:$0x1] %v654
      %v656 = vld [vmem:[%s615 + $0x3c] sm:$0xf]
      %v657 = vsel %vm618, %v386, %v656
      %658 = vst [vmem:[%s615 + $0x3c] sm:$0xf] %v657
      %659 = vst.msk [vmem:[%s615 + $0x40] sm:$0xf] %vm204, %v395
      %v660 = vld [vmem:[%s615 + $0x44] sm:$0x1]
      %v661 = vsel %vm624, %v396, %v660
      %662 = vst [vmem:[%s615 + $0x44] sm:$0x1] %v661
      %v663 = vld [vmem:[%s615 + $0x48] sm:$0xf]
      %v664 = vsel %vm618, %v403, %v663
      %665 = vst [vmem:[%s615 + $0x48] sm:$0xf] %v664
      %666 = vst.msk [vmem:[%s615 + $0x4c] sm:$0xf] %vm204, %v412
      %v667 = vld [vmem:[%s615 + $0x50] sm:$0x1]
      %v668 = vsel %vm624, %v413, %v667
      %669 = vst [vmem:[%s615 + $0x50] sm:$0x1] %v668
      %v670 = vld [vmem:[%s615 + $0x54] sm:$0xf]
      %v671 = vsel %vm618, %v420, %v670
      %672 = vst [vmem:[%s615 + $0x54] sm:$0xf] %v671
      %673 = vst.msk [vmem:[%s615 + $0x58] sm:$0xf] %vm204, %v429
      %v674 = vld [vmem:[%s615 + $0x5c] sm:$0x1]
      %v675 = vsel %vm624, %v430, %v674
      %676 = vst [vmem:[%s615 + $0x5c] sm:$0x1] %v675
      %v677 = vld [vmem:[%s615 + $0x60] sm:$0xf]
      %v678 = vsel %vm618, %v437, %v677
      %679 = vst [vmem:[%s615 + $0x60] sm:$0xf] %v678
      %680 = vst.msk [vmem:[%s615 + $0x64] sm:$0xf] %vm204, %v446
      %v681 = vld [vmem:[%s615 + $0x68] sm:$0x1]
      %v682 = vsel %vm624, %v447, %v681
      %683 = vst [vmem:[%s615 + $0x68] sm:$0x1] %v682
      %v684 = vld [vmem:[%s615 + $0x6c] sm:$0xf]
      %v685 = vsel %vm618, %v454, %v684
      %686 = vst [vmem:[%s615 + $0x6c] sm:$0xf] %v685
      %687 = vst.msk [vmem:[%s615 + $0x70] sm:$0xf] %vm204, %v463
      %v688 = vld [vmem:[%s615 + $0x74] sm:$0x1]
      %v689 = vsel %vm624, %v464, %v688
      %690 = vst [vmem:[%s615 + $0x74] sm:$0x1] %v689
      %v691 = vld [vmem:[%s615 + $0x78] sm:$0xf]
      %v692 = vsel %vm618, %v471, %v691
      %693 = vst [vmem:[%s615 + $0x78] sm:$0xf] %v692
      %694 = vst.msk [vmem:[%s615 + $0x7c] sm:$0xf] %vm204, %v480
      %v695 = vld [vmem:[%s615 + $0x80] sm:$0x1]
      %v696 = vsel %vm624, %v481, %v695
      %697 = vst [vmem:[%s615 + $0x80] sm:$0x1] %v696
      %v698 = vld [vmem:[%s615 + $0x84] sm:$0xf]
      %v699 = vsel %vm618, %v488, %v698
      %700 = vst [vmem:[%s615 + $0x84] sm:$0xf] %v699
      %701 = vst.msk [vmem:[%s615 + $0x88] sm:$0xf] %vm204, %v497
      %v702 = vld [vmem:[%s615 + $0x8c] sm:$0x1]
      %v703 = vsel %vm624, %v498, %v702
      %704 = vst [vmem:[%s615 + $0x8c] sm:$0x1] %v703
      %v705 = vld [vmem:[%s615 + $0x90] sm:$0xf]
      %v706 = vsel %vm618, %v505, %v705
      %707 = vst [vmem:[%s615 + $0x90] sm:$0xf] %v706
      %708 = vst.msk [vmem:[%s615 + $0x94] sm:$0xf] %vm204, %v514
      %v709 = vld [vmem:[%s615 + $0x98] sm:$0x1]
      %v710 = vsel %vm624, %v515, %v709
      %711 = vst [vmem:[%s615 + $0x98] sm:$0x1] %v710
      %v712 = vld [vmem:[%s615 + $0x9c] sm:$0xf]
      %v713 = vsel %vm618, %v522, %v712
      %714 = vst [vmem:[%s615 + $0x9c] sm:$0xf] %v713
      %715 = vst.msk [vmem:[%s615 + $0xa0] sm:$0xf] %vm204, %v531
      %v716 = vld [vmem:[%s615 + $0xa4] sm:$0x1]
      %v717 = vsel %vm624, %v532, %v716
      %718 = vst [vmem:[%s615 + $0xa4] sm:$0x1] %v717
      %v719 = vld [vmem:[%s615 + $0xa8] sm:$0xf]
      %v720 = vsel %vm618, %v539, %v719
      %721 = vst [vmem:[%s615 + $0xa8] sm:$0xf] %v720
      %722 = vst.msk [vmem:[%s615 + $0xac] sm:$0xf] %vm204, %v548
      %v723 = vld [vmem:[%s615 + $0xb0] sm:$0x1]
      %v724 = vsel %vm624, %v549, %v723
      %725 = vst [vmem:[%s615 + $0xb0] sm:$0x1] %v724
      %v726 = vld [vmem:[%s615 + $0xb4] sm:$0xf]
      %v727 = vsel %vm618, %v556, %v726
      %728 = vst [vmem:[%s615 + $0xb4] sm:$0xf] %v727
      %729 = vst.msk [vmem:[%s615 + $0xb8] sm:$0xf] %vm204, %v565
      %v730 = vld [vmem:[%s615 + $0xbc] sm:$0x1]
      %v731 = vsel %vm624, %v566, %v730
      %732 = vst [vmem:[%s615 + $0xbc] sm:$0x1] %v731
      %v733 = vld [vmem:[#allocation2] sm:$0xf]
      %v734 = vld [vmem:[#allocation2 + $0x4] sm:$0xf]
      %v735 = vld [vmem:[#allocation2 + $0xc] sm:$0xf]
      %v736 = vld [vmem:[#allocation2 + $0x10] sm:$0xf]
      %v737 = vld [vmem:[#allocation2 + $0x18] sm:$0xf]
      %v738 = vld [vmem:[#allocation2 + $0x1c] sm:$0xf]
      %v739 = vld [vmem:[#allocation2 + $0x24] sm:$0xf]
      %v740 = vld [vmem:[#allocation2 + $0x28] sm:$0xf]
      %v741 = vld [vmem:[#allocation2 + $0x30] sm:$0xf]
      %v742 = vld [vmem:[#allocation2 + $0x34] sm:$0xf]
      %v743 = vld [vmem:[#allocation2 + $0x3c] sm:$0xf]
      %v744 = vld [vmem:[#allocation2 + $0x40] sm:$0xf]
      %v745 = vld [vmem:[#allocation2 + $0x48] sm:$0xf]
      %v746 = vld [vmem:[#allocation2 + $0x4c] sm:$0xf]
      %v747 = vld [vmem:[#allocation2 + $0x54] sm:$0xf]
      %v748 = vld [vmem:[#allocation2 + $0x58] sm:$0xf]
      %v749 = vld [vmem:[#allocation2 + $0x60] sm:$0xf]
      %v750 = vld [vmem:[#allocation2 + $0x64] sm:$0xf]
      %v751 = vld [vmem:[#allocation2 + $0x6c] sm:$0xf]
      %v752 = vld [vmem:[#allocation2 + $0x70] sm:$0xf]
      %v753 = vld [vmem:[#allocation2 + $0x78] sm:$0xf]
      %v754 = vld [vmem:[#allocation2 + $0x7c] sm:$0xf]
      %v755 = vld [vmem:[#allocation2 + $0x84] sm:$0xf]
      %v756 = vld [vmem:[#allocation2 + $0x88] sm:$0xf]
      %v757 = vld [vmem:[#allocation2 + $0x90] sm:$0xf]
      %v758 = vld [vmem:[#allocation2 + $0x94] sm:$0xf]
      %v759 = vld [vmem:[#allocation2 + $0x9c] sm:$0xf]
      %v760 = vld [vmem:[#allocation2 + $0xa0] sm:$0xf]
      %v761 = vld [vmem:[#allocation2 + $0xa8] sm:$0xf]
      %v762 = vld [vmem:[#allocation2 + $0xac] sm:$0xf]
      %v763 = vld [vmem:[#allocation2 + $0xb4] sm:$0xf]
      %v764 = vld [vmem:[#allocation2 + $0xb8] sm:$0xf]
      %v765 = vld [vmem:[%s1] sm:$0x3]
      %v766 = vld [vmem:[#allocation2 + $0x8] sm:$0x1]
      %v767 = vld [vmem:[#allocation2 + $0x14] sm:$0x1]
      %v768 = vld [vmem:[#allocation2 + $0x20] sm:$0x1]
      %v769 = vld [vmem:[#allocation2 + $0x2c] sm:$0x1]
      %v770 = vld [vmem:[#allocation2 + $0x38] sm:$0x1]
      %v771 = vld [vmem:[#allocation2 + $0x44] sm:$0x1]
      %v772 = vld [vmem:[#allocation2 + $0x50] sm:$0x1]
      %v773 = vld [vmem:[#allocation2 + $0x5c] sm:$0x1]
      %v774 = vld [vmem:[#allocation2 + $0x68] sm:$0x1]
      %v775 = vld [vmem:[#allocation2 + $0x74] sm:$0x1]
      %v776 = vld [vmem:[#allocation2 + $0x80] sm:$0x1]
      %v777 = vld [vmem:[#allocation2 + $0x8c] sm:$0x1]
      %v778 = vld [vmem:[#allocation2 + $0x98] sm:$0x1]
      %v779 = vld [vmem:[#allocation2 + $0xa4] sm:$0x1]
      %v780 = vld [vmem:[#allocation2 + $0xb0] sm:$0x1]
      %v781 = vld [vmem:[#allocation2 + $0xbc] sm:$0x1]
      %vm782 = vsmask.f32 3328
      %vm783 = vsmask.f32 7440
      %vm784 = vmor %vm782, %vm783
      %v786 = vshrl.u32 %v733, 16
      %v788 = vrot.slane %v786, 4
      %v789 = vshll.u32 %v733, 16
      %v791 = vrot.slane %v789, 5
      %v792 = vor.u32 %v788, %v791
      %v793 = vrot.slane %v792, 4
      %v795 = vshll.u32 %v734, 16
      %v797 = vrot.slane %v795, 5
      %v798 = vsel %vm784, %v793, %v797
      %v799 = vshrl.u32 %v734, 16
      %v801 = vrot.slane %v799, 4
      %v802 = vor.u32 %v801, %v797
      %v803 = vrot.slane %v802, 4
      %v805 = vshll.u32 %v766, 16
      %v807 = vrot.slane %v805, 5
      %v808 = vsel %vm784, %v803, %v807
      %v810 = vshrl.u32 %v735, 16
      %v812 = vrot.slane %v810, 4
      %v813 = vshll.u32 %v735, 16
      %v815 = vrot.slane %v813, 5
      %v816 = vor.u32 %v812, %v815
      %v817 = vrot.slane %v816, 4
      %v819 = vshll.u32 %v736, 16
      %v821 = vrot.slane %v819, 5
      %v822 = vsel %vm784, %v817, %v821
      %v823 = vshrl.u32 %v736, 16
      %v825 = vrot.slane %v823, 4
      %v826 = vor.u32 %v825, %v821
      %v827 = vrot.slane %v826, 4
      %v829 = vshll.u32 %v767, 16
      %v831 = vrot.slane %v829, 5
      %v832 = vsel %vm784, %v827, %v831
      %v834 = vshrl.u32 %v737, 16
      %v836 = vrot.slane %v834, 4
      %v837 = vshll.u32 %v737, 16
      %v839 = vrot.slane %v837, 5
      %v840 = vor.u32 %v836, %v839
      %v841 = vrot.slane %v840, 4
      %v843 = vshll.u32 %v738, 16
      %v845 = vrot.slane %v843, 5
      %v846 = vsel %vm784, %v841, %v845
      %v847 = vshrl.u32 %v738, 16
      %v849 = vrot.slane %v847, 4
      %v850 = vor.u32 %v849, %v845
      %v851 = vrot.slane %v850, 4
      %v853 = vshll.u32 %v768, 16
      %v855 = vrot.slane %v853, 5
      %v856 = vsel %vm784, %v851, %v855
      %v858 = vshrl.u32 %v739, 16
      %v860 = vrot.slane %v858, 4
      %v861 = vshll.u32 %v739, 16
      %v863 = vrot.slane %v861, 5
      %v864 = vor.u32 %v860, %v863
      %v865 = vrot.slane %v864, 4
      %v867 = vshll.u32 %v740, 16
      %v869 = vrot.slane %v867, 5
      %v870 = vsel %vm784, %v865, %v869
      %v871 = vshrl.u32 %v740, 16
      %v873 = vrot.slane %v871, 4
      %v874 = vor.u32 %v873, %v869
      %v875 = vrot.slane %v874, 4
      %v877 = vshll.u32 %v769, 16
      %v879 = vrot.slane %v877, 5
      %v880 = vsel %vm784, %v875, %v879
      %v882 = vshrl.u32 %v741, 16
      %v884 = vrot.slane %v882, 4
      %v885 = vshll.u32 %v741, 16
      %v887 = vrot.slane %v885, 5
      %v888 = vor.u32 %v884, %v887
      %v889 = vrot.slane %v888, 4
      %v891 = vshll.u32 %v742, 16
      %v893 = vrot.slane %v891, 5
      %v894 = vsel %vm784, %v889, %v893
      %v895 = vshrl.u32 %v742, 16
      %v897 = vrot.slane %v895, 4
      %v898 = vor.u32 %v897, %v893
      %v899 = vrot.slane %v898, 4
      %v901 = vshll.u32 %v770, 16
      %v903 = vrot.slane %v901, 5
      %v904 = vsel %vm784, %v899, %v903
      %v906 = vshrl.u32 %v743, 16
      %v908 = vrot.slane %v906, 4
      %v909 = vshll.u32 %v743, 16
      %v911 = vrot.slane %v909, 5
      %v912 = vor.u32 %v908, %v911
      %v913 = vrot.slane %v912, 4
      %v915 = vshll.u32 %v744, 16
      %v917 = vrot.slane %v915, 5
      %v918 = vsel %vm784, %v913, %v917
      %v919 = vshrl.u32 %v744, 16
      %v921 = vrot.slane %v919, 4
      %v922 = vor.u32 %v921, %v917
      %v923 = vrot.slane %v922, 4
      %v925 = vshll.u32 %v771, 16
      %v927 = vrot.slane %v925, 5
      %v928 = vsel %vm784, %v923, %v927
      %v930 = vshrl.u32 %v745, 16
      %v932 = vrot.slane %v930, 4
      %v933 = vshll.u32 %v745, 16
      %v935 = vrot.slane %v933, 5
      %v936 = vor.u32 %v932, %v935
      %v937 = vrot.slane %v936, 4
      %v939 = vshll.u32 %v746, 16
      %v941 = vrot.slane %v939, 5
      %v942 = vsel %vm784, %v937, %v941
      %v943 = vshrl.u32 %v746, 16
      %v945 = vrot.slane %v943, 4
      %v946 = vor.u32 %v945, %v941
      %v947 = vrot.slane %v946, 4
      %v949 = vshll.u32 %v772, 16
      %v951 = vrot.slane %v949, 5
      %v952 = vsel %vm784, %v947, %v951
      %v954 = vshrl.u32 %v747, 16
      %v956 = vrot.slane %v954, 4
      %v957 = vshll.u32 %v747, 16
      %v959 = vrot.slane %v957, 5
      %v960 = vor.u32 %v956, %v959
      %v961 = vrot.slane %v960, 4
      %v963 = vshll.u32 %v748, 16
      %v965 = vrot.slane %v963, 5
      %v966 = vsel %vm784, %v961, %v965
      %v967 = vshrl.u32 %v748, 16
      %v969 = vrot.slane %v967, 4
      %v970 = vor.u32 %v969, %v965
      %v971 = vrot.slane %v970, 4
      %v973 = vshll.u32 %v773, 16
      %v975 = vrot.slane %v973, 5
      %v976 = vsel %vm784, %v971, %v975
      %v978 = vshrl.u32 %v749, 16
      %v980 = vrot.slane %v978, 4
      %v981 = vshll.u32 %v749, 16
      %v983 = vrot.slane %v981, 5
      %v984 = vor.u32 %v980, %v983
      %v985 = vrot.slane %v984, 4
      %v987 = vshll.u32 %v750, 16
      %v989 = vrot.slane %v987, 5
      %v990 = vsel %vm784, %v985, %v989
      %v991 = vshrl.u32 %v750, 16
      %v993 = vrot.slane %v991, 4
      %v994 = vor.u32 %v993, %v989
      %v995 = vrot.slane %v994, 4
      %v997 = vshll.u32 %v774, 16
      %v999 = vrot.slane %v997, 5
      %v1000 = vsel %vm784, %v995, %v999
      %v1002 = vshrl.u32 %v751, 16
      %v1004 = vrot.slane %v1002, 4
      %v1005 = vshll.u32 %v751, 16
      %v1007 = vrot.slane %v1005, 5
      %v1008 = vor.u32 %v1004, %v1007
      %v1009 = vrot.slane %v1008, 4
      %v1011 = vshll.u32 %v752, 16
      %v1013 = vrot.slane %v1011, 5
      %v1014 = vsel %vm784, %v1009, %v1013
      %v1015 = vshrl.u32 %v752, 16
      %v1017 = vrot.slane %v1015, 4
      %v1018 = vor.u32 %v1017, %v1013
      %v1019 = vrot.slane %v1018, 4
      %v1021 = vshll.u32 %v775, 16
      %v1023 = vrot.slane %v1021, 5
      %v1024 = vsel %vm784, %v1019, %v1023
      %v1026 = vshrl.u32 %v753, 16
      %v1028 = vrot.slane %v1026, 4
      %v1029 = vshll.u32 %v753, 16
      %v1031 = vrot.slane %v1029, 5
      %v1032 = vor.u32 %v1028, %v1031
      %v1033 = vrot.slane %v1032, 4
      %v1035 = vshll.u32 %v754, 16
      %v1037 = vrot.slane %v1035, 5
      %v1038 = vsel %vm784, %v1033, %v1037
      %v1039 = vshrl.u32 %v754, 16
      %v1041 = vrot.slane %v1039, 4
      %v1042 = vor.u32 %v1041, %v1037
      %v1043 = vrot.slane %v1042, 4
      %v1045 = vshll.u32 %v776, 16
      %v1047 = vrot.slane %v1045, 5
      %v1048 = vsel %vm784, %v1043, %v1047
      %v1050 = vshrl.u32 %v755, 16
      %v1052 = vrot.slane %v1050, 4
      %v1053 = vshll.u32 %v755, 16
      %v1055 = vrot.slane %v1053, 5
      %v1056 = vor.u32 %v1052, %v1055
      %v1057 = vrot.slane %v1056, 4
      %v1059 = vshll.u32 %v756, 16
      %v1061 = vrot.slane %v1059, 5
      %v1062 = vsel %vm784, %v1057, %v1061
      %v1063 = vshrl.u32 %v756, 16
      %v1065 = vrot.slane %v1063, 4
      %v1066 = vor.u32 %v1065, %v1061
      %v1067 = vrot.slane %v1066, 4
      %v1069 = vshll.u32 %v777, 16
      %v1071 = vrot.slane %v1069, 5
      %v1072 = vsel %vm784, %v1067, %v1071
      %v1074 = vshrl.u32 %v757, 16
      %v1076 = vrot.slane %v1074, 4
      %v1077 = vshll.u32 %v757, 16
      %v1079 = vrot.slane %v1077, 5
      %v1080 = vor.u32 %v1076, %v1079
      %v1081 = vrot.slane %v1080, 4
      %v1083 = vshll.u32 %v758, 16
      %v1085 = vrot.slane %v1083, 5
      %v1086 = vsel %vm784, %v1081, %v1085
      %v1087 = vshrl.u32 %v758, 16
      %v1089 = vrot.slane %v1087, 4
      %v1090 = vor.u32 %v1089, %v1085
      %v1091 = vrot.slane %v1090, 4
      %v1093 = vshll.u32 %v778, 16
      %v1095 = vrot.slane %v1093, 5
      %v1096 = vsel %vm784, %v1091, %v1095
      %v1098 = vshrl.u32 %v759, 16
      %v1100 = vrot.slane %v1098, 4
      %v1101 = vshll.u32 %v759, 16
      %v1103 = vrot.slane %v1101, 5
      %v1104 = vor.u32 %v1100, %v1103
      %v1105 = vrot.slane %v1104, 4
      %v1107 = vshll.u32 %v760, 16
      %v1109 = vrot.slane %v1107, 5
      %v1110 = vsel %vm784, %v1105, %v1109
      %v1111 = vshrl.u32 %v760, 16
      %v1113 = vrot.slane %v1111, 4
      %v1114 = vor.u32 %v1113, %v1109
      %v1115 = vrot.slane %v1114, 4
      %v1117 = vshll.u32 %v779, 16
      %v1119 = vrot.slane %v1117, 5
      %v1120 = vsel %vm784, %v1115, %v1119
      %v1122 = vshrl.u32 %v761, 16
      %v1124 = vrot.slane %v1122, 4
      %v1125 = vshll.u32 %v761, 16
      %v1127 = vrot.slane %v1125, 5
      %v1128 = vor.u32 %v1124, %v1127
      %v1129 = vrot.slane %v1128, 4
      %v1131 = vshll.u32 %v762, 16
      %v1133 = vrot.slane %v1131, 5
      %v1134 = vsel %vm784, %v1129, %v1133
      %v1135 = vshrl.u32 %v762, 16
      %v1137 = vrot.slane %v1135, 4
      %v1138 = vor.u32 %v1137, %v1133
      %v1139 = vrot.slane %v1138, 4
      %v1141 = vshll.u32 %v780, 16
      %v1143 = vrot.slane %v1141, 5
      %v1144 = vsel %vm784, %v1139, %v1143
      %v1146 = vshrl.u32 %v763, 16
      %v1148 = vrot.slane %v1146, 4
      %v1149 = vshll.u32 %v763, 16
      %v1151 = vrot.slane %v1149, 5
      %v1152 = vor.u32 %v1148, %v1151
      %v1153 = vrot.slane %v1152, 4
      %v1155 = vshll.u32 %v764, 16
      %v1157 = vrot.slane %v1155, 5
      %v1158 = vsel %vm784, %v1153, %v1157
      %v1159 = vshrl.u32 %v764, 16
      %v1161 = vrot.slane %v1159, 4
      %v1162 = vor.u32 %v1161, %v1157
      %v1163 = vrot.slane %v1162, 4
      %v1165 = vshll.u32 %v781, 16
      %v1167 = vrot.slane %v1165, 5
      %v1168 = vsel %vm784, %v1163, %v1167
      %s1169 = scalar_lea.vmem %s1, 2
      %v1170 = vld [vmem:[%s1169] sm:$0x3]
      %v1171 = vunpack.c.l.b16 %v798
      %v1172 = vunpack.c.l.b16 %v808
      %v1173 = vunpack.c.l.b16 %v822
      %v1174 = vunpack.c.l.b16 %v832
      %v1175 = vunpack.c.l.b16 %v846
      %v1176 = vunpack.c.l.b16 %v856
      %v1177 = vunpack.c.l.b16 %v870
      %v1178 = vunpack.c.l.b16 %v880
      %v1179 = vunpack.c.l.b16 %v894
      %v1180 = vunpack.c.l.b16 %v904
      %v1181 = vunpack.c.l.b16 %v918
      %v1182 = vunpack.c.l.b16 %v928
      %v1183 = vunpack.c.l.b16 %v942
      %v1184 = vunpack.c.l.b16 %v952
      %v1185 = vunpack.c.l.b16 %v966
      %v1186 = vunpack.c.l.b16 %v976
      %v1187 = vunpack.c.l.b16 %v990
      %v1188 = vunpack.c.l.b16 %v1000
      %v1189 = vunpack.c.l.b16 %v1014
      %v1190 = vunpack.c.l.b16 %v1024
      %v1191 = vunpack.c.l.b16 %v1038
      %v1192 = vunpack.c.l.b16 %v1048
      %v1193 = vunpack.c.l.b16 %v1062
      %v1194 = vunpack.c.l.b16 %v1072
      %v1195 = vunpack.c.l.b16 %v1086
      %v1196 = vunpack.c.l.b16 %v1096
      %v1197 = vunpack.c.l.b16 %v1110
      %v1198 = vunpack.c.l.b16 %v1120
      %v1199 = vunpack.c.l.b16 %v1134
      %v1200 = vunpack.c.l.b16 %v1144
      %v1201 = vunpack.c.l.b16 %v1158
      %v1202 = vunpack.c.l.b16 %v1168
      %v1203 = vpack.c.b16 %v1172, %v1171
      %v1204 = vpack.c.b16 %v1174, %v1173
      %v1205 = vpack.c.b16 %v1176, %v1175
      %v1206 = vpack.c.b16 %v1178, %v1177
      %v1207 = vpack.c.b16 %v1180, %v1179
      %v1208 = vpack.c.b16 %v1182, %v1181
      %v1209 = vpack.c.b16 %v1184, %v1183
      %v1210 = vpack.c.b16 %v1186, %v1185
      %v1211 = vpack.c.b16 %v1188, %v1187
      %v1212 = vpack.c.b16 %v1190, %v1189
      %v1213 = vpack.c.b16 %v1192, %v1191
      %v1214 = vpack.c.b16 %v1194, %v1193
      %v1215 = vpack.c.b16 %v1196, %v1195
      %v1216 = vpack.c.b16 %v1198, %v1197
      %v1217 = vpack.c.b16 %v1200, %v1199
      %v1218 = vpack.c.b16 %v1202, %v1201
      %vm1219 = vcmask 31744
      %v1221 = vsel %vm1219, %v1203, 0
      %v1224 = vsel %vm1219, %v1204, 0
      %v1227 = vsel %vm1219, %v1205, 0
      %v1230 = vsel %vm1219, %v1206, 0
      %v1233 = vsel %vm1219, %v1207, 0
      %v1236 = vsel %vm1219, %v1208, 0
      %v1239 = vsel %vm1219, %v1209, 0
      %v1242 = vsel %vm1219, %v1210, 0
      %v1245 = vsel %vm1219, %v1211, 0
      %v1248 = vsel %vm1219, %v1212, 0
      %v1251 = vsel %vm1219, %v1213, 0
      %v1254 = vsel %vm1219, %v1214, 0
      %v1257 = vsel %vm1219, %v1215, 0
      %v1260 = vsel %vm1219, %v1216, 0
      %v1263 = vsel %vm1219, %v1217, 0
      %v1266 = vsel %vm1219, %v1218, 0
      %vm1268 = vcmask 1041408
      %v1270 = vsel %vm1268, %v1170, 0
      %1272 = vmatpush.bf16.msra.mxu0 0
      %1273 = vmatpush.bf16.msra.mxu0 0
      %1274 = vmatpush.bf16.msra.mxu0 0
      %1275 = vmatpush.bf16.msra.mxu0 0
      %1276 = vmatpush.bf16.msra.mxu0 0
      %1277 = vmatpush.bf16.msra.mxu0 0
      %1278 = vmatpush.bf16.msra.mxu0 0
      %1279 = vmatpush.bf16.msra.mxu0 %v1270
      %1280 = vmatmul.bf16.gmra.mxu0 %v1221
      %v1281 = vpop.f32.mrf.mxu0
      %v1282 = vadd.f32 0.0, %v1281
      %v1283 = vpop.f32.mrf.mxu0
      %v1284 = vadd.f32 0.0, %v1283
      %1285 = vmatmul.bf16.gmra.mxu0 %v1224
      %v1286 = vpop.f32.mrf.mxu0
      %v1287 = vadd.f32 0.0, %v1286
      %v1288 = vpop.f32.mrf.mxu0
      %v1289 = vadd.f32 0.0, %v1288
      %1290 = vmatmul.bf16.gmra.mxu0 %v1227
      %v1291 = vpop.f32.mrf.mxu0
      %v1292 = vadd.f32 0.0, %v1291
      %v1293 = vpop.f32.mrf.mxu0
      %v1294 = vadd.f32 0.0, %v1293
      %1295 = vmatmul.bf16.gmra.mxu0 %v1230
      %v1296 = vpop.f32.mrf.mxu0
      %v1297 = vadd.f32 0.0, %v1296
      %v1298 = vpop.f32.mrf.mxu0
      %v1299 = vadd.f32 0.0, %v1298
      %1300 = vmatmul.bf16.gmra.mxu0 %v1233
      %v1301 = vpop.f32.mrf.mxu0
      %v1302 = vadd.f32 0.0, %v1301
      %v1303 = vpop.f32.mrf.mxu0
      %v1304 = vadd.f32 0.0, %v1303
      %1305 = vmatmul.bf16.gmra.mxu0 %v1236
      %v1306 = vpop.f32.mrf.mxu0
      %v1307 = vadd.f32 0.0, %v1306
      %v1308 = vpop.f32.mrf.mxu0
      %v1309 = vadd.f32 0.0, %v1308
      %1310 = vmatmul.bf16.gmra.mxu0 %v1239
      %v1311 = vpop.f32.mrf.mxu0
      %v1312 = vadd.f32 0.0, %v1311
      %v1313 = vpop.f32.mrf.mxu0
      %v1314 = vadd.f32 0.0, %v1313
      %1315 = vmatmul.bf16.gmra.mxu0 %v1242
      %v1316 = vpop.f32.mrf.mxu0
      %v1317 = vadd.f32 0.0, %v1316
      %v1318 = vpop.f32.mrf.mxu0
      %v1319 = vadd.f32 0.0, %v1318
      %1320 = vmatmul.bf16.gmra.mxu0 %v1245
      %v1321 = vpop.f32.mrf.mxu0
      %v1322 = vadd.f32 0.0, %v1321
      %v1323 = vpop.f32.mrf.mxu0
      %v1324 = vadd.f32 0.0, %v1323
      %1325 = vmatmul.bf16.gmra.mxu0 %v1248
      %v1326 = vpop.f32.mrf.mxu0
      %v1327 = vadd.f32 0.0, %v1326
      %v1328 = vpop.f32.mrf.mxu0
      %v1329 = vadd.f32 0.0, %v1328
      %1330 = vmatmul.bf16.gmra.mxu0 %v1251
      %v1331 = vpop.f32.mrf.mxu0
      %v1332 = vadd.f32 0.0, %v1331
      %v1333 = vpop.f32.mrf.mxu0
      %v1334 = vadd.f32 0.0, %v1333
      %1335 = vmatmul.bf16.gmra.mxu0 %v1254
      %v1336 = vpop.f32.mrf.mxu0
      %v1337 = vadd.f32 0.0, %v1336
      %v1338 = vpop.f32.mrf.mxu0
      %v1339 = vadd.f32 0.0, %v1338
      %1340 = vmatmul.bf16.gmra.mxu0 %v1257
      %v1341 = vpop.f32.mrf.mxu0
      %v1342 = vadd.f32 0.0, %v1341
      %v1343 = vpop.f32.mrf.mxu0
      %v1344 = vadd.f32 0.0, %v1343
      %1345 = vmatmul.bf16.gmra.mxu0 %v1260
      %v1346 = vpop.f32.mrf.mxu0
      %v1347 = vadd.f32 0.0, %v1346
      %v1348 = vpop.f32.mrf.mxu0
      %v1349 = vadd.f32 0.0, %v1348
      %1350 = vmatmul.bf16.gmra.mxu0 %v1263
      %v1351 = vpop.f32.mrf.mxu0
      %v1352 = vadd.f32 0.0, %v1351
      %v1353 = vpop.f32.mrf.mxu0
      %v1354 = vadd.f32 0.0, %v1353
      %1355 = vmatmul.bf16.gmra.mxu0 %v1266
      %v1356 = vpop.f32.mrf.mxu0
      %v1357 = vadd.f32 0.0, %v1356
      %v1358 = vpop.f32.mrf.mxu0
      %v1359 = vadd.f32 0.0, %v1358
      %1360 = vdwg.mxu0
      %v1393 = vunpack.c.l.b16 %v733
      %v1394 = vunpack.c.l.b16 %v734
      %v1395 = vunpack.c.l.b16 %v735
      %v1396 = vunpack.c.l.b16 %v736
      %v1397 = vunpack.c.l.b16 %v737
      %v1398 = vunpack.c.l.b16 %v738
      %v1399 = vunpack.c.l.b16 %v739
      %v1400 = vunpack.c.l.b16 %v740
      %v1401 = vunpack.c.l.b16 %v741
      %v1402 = vunpack.c.l.b16 %v742
      %v1403 = vunpack.c.l.b16 %v743
      %v1404 = vunpack.c.l.b16 %v744
      %v1405 = vunpack.c.l.b16 %v745
      %v1406 = vunpack.c.l.b16 %v746
      %v1407 = vunpack.c.l.b16 %v747
      %v1408 = vunpack.c.l.b16 %v748
      %v1409 = vunpack.c.l.b16 %v749
      %v1410 = vunpack.c.l.b16 %v750
      %v1411 = vunpack.c.l.b16 %v751
      %v1412 = vunpack.c.l.b16 %v752
      %v1413 = vunpack.c.l.b16 %v753
      %v1414 = vunpack.c.l.b16 %v754
      %v1415 = vunpack.c.l.b16 %v755
      %v1416 = vunpack.c.l.b16 %v756
      %v1417 = vunpack.c.l.b16 %v757
      %v1418 = vunpack.c.l.b16 %v758
      %v1419 = vunpack.c.l.b16 %v759
      %v1420 = vunpack.c.l.b16 %v760
      %v1421 = vunpack.c.l.b16 %v761
      %v1422 = vunpack.c.l.b16 %v762
      %v1423 = vunpack.c.l.b16 %v763
      %v1424 = vunpack.c.l.b16 %v764
      %v1425 = vpack.c.b16 %v1394, %v1393
      %v1426 = vpack.c.b16 %v1396, %v1395
      %v1427 = vpack.c.b16 %v1398, %v1397
      %v1428 = vpack.c.b16 %v1400, %v1399
      %v1429 = vpack.c.b16 %v1402, %v1401
      %v1430 = vpack.c.b16 %v1404, %v1403
      %v1431 = vpack.c.b16 %v1406, %v1405
      %v1432 = vpack.c.b16 %v1408, %v1407
      %v1433 = vpack.c.b16 %v1410, %v1409
      %v1434 = vpack.c.b16 %v1412, %v1411
      %v1435 = vpack.c.b16 %v1414, %v1413
      %v1436 = vpack.c.b16 %v1416, %v1415
      %v1437 = vpack.c.b16 %v1418, %v1417
      %v1438 = vpack.c.b16 %v1420, %v1419
      %v1439 = vpack.c.b16 %v1422, %v1421
      %v1440 = vpack.c.b16 %v1424, %v1423
      %v1442 = vsel %vm1219, %v1425, 0
      %v1445 = vsel %vm1219, %v1426, 0
      %v1448 = vsel %vm1219, %v1427, 0
      %v1451 = vsel %vm1219, %v1428, 0
      %v1454 = vsel %vm1219, %v1429, 0
      %v1457 = vsel %vm1219, %v1430, 0
      %v1460 = vsel %vm1219, %v1431, 0
      %v1463 = vsel %vm1219, %v1432, 0
      %v1466 = vsel %vm1219, %v1433, 0
      %v1469 = vsel %vm1219, %v1434, 0
      %v1472 = vsel %vm1219, %v1435, 0
      %v1475 = vsel %vm1219, %v1436, 0
      %v1478 = vsel %vm1219, %v1437, 0
      %v1481 = vsel %vm1219, %v1438, 0
      %v1484 = vsel %vm1219, %v1439, 0
      %v1487 = vsel %vm1219, %v1440, 0
      %v1490 = vsel %vm1268, %v765, 0
      %1492 = vmatpush.bf16.msra.mxu0 0
      %1493 = vmatpush.bf16.msra.mxu0 0
      %1494 = vmatpush.bf16.msra.mxu0 0
      %1495 = vmatpush.bf16.msra.mxu0 0
      %1496 = vmatpush.bf16.msra.mxu0 0
      %1497 = vmatpush.bf16.msra.mxu0 0
      %1498 = vmatpush.bf16.msra.mxu0 0
      %1499 = vmatpush.bf16.msra.mxu0 %v1490
      %1500 = vmatmul.bf16.gmra.mxu0 %v1442
      %v1501 = vpop.f32.mrf.mxu0
      %v1502 = vadd.f32 %v1282, %v1501
      %v1503 = vpop.f32.mrf.mxu0
      %v1504 = vadd.f32 %v1284, %v1503
      %1505 = vmatmul.bf16.gmra.mxu0 %v1445
      %v1506 = vpop.f32.mrf.mxu0
      %v1507 = vadd.f32 %v1287, %v1506
      %v1508 = vpop.f32.mrf.mxu0
      %v1509 = vadd.f32 %v1289, %v1508
      %1510 = vmatmul.bf16.gmra.mxu0 %v1448
      %v1511 = vpop.f32.mrf.mxu0
      %v1512 = vadd.f32 %v1292, %v1511
      %v1513 = vpop.f32.mrf.mxu0
      %v1514 = vadd.f32 %v1294, %v1513
      %1515 = vmatmul.bf16.gmra.mxu0 %v1451
      %v1516 = vpop.f32.mrf.mxu0
      %v1517 = vadd.f32 %v1297, %v1516
      %v1518 = vpop.f32.mrf.mxu0
      %v1519 = vadd.f32 %v1299, %v1518
      %1520 = vmatmul.bf16.gmra.mxu0 %v1454
      %v1521 = vpop.f32.mrf.mxu0
      %v1522 = vadd.f32 %v1302, %v1521
      %v1523 = vpop.f32.mrf.mxu0
      %v1524 = vadd.f32 %v1304, %v1523
      %1525 = vmatmul.bf16.gmra.mxu0 %v1457
      %v1526 = vpop.f32.mrf.mxu0
      %v1527 = vadd.f32 %v1307, %v1526
      %v1528 = vpop.f32.mrf.mxu0
      %v1529 = vadd.f32 %v1309, %v1528
      %1530 = vmatmul.bf16.gmra.mxu0 %v1460
      %v1531 = vpop.f32.mrf.mxu0
      %v1532 = vadd.f32 %v1312, %v1531
      %v1533 = vpop.f32.mrf.mxu0
      %v1534 = vadd.f32 %v1314, %v1533
      %1535 = vmatmul.bf16.gmra.mxu0 %v1463
      %v1536 = vpop.f32.mrf.mxu0
      %v1537 = vadd.f32 %v1317, %v1536
      %v1538 = vpop.f32.mrf.mxu0
      %v1539 = vadd.f32 %v1319, %v1538
      %1540 = vmatmul.bf16.gmra.mxu0 %v1466
      %v1541 = vpop.f32.mrf.mxu0
      %v1542 = vadd.f32 %v1322, %v1541
      %v1543 = vpop.f32.mrf.mxu0
      %v1544 = vadd.f32 %v1324, %v1543
      %1545 = vmatmul.bf16.gmra.mxu0 %v1469
      %v1546 = vpop.f32.mrf.mxu0
      %v1547 = vadd.f32 %v1327, %v1546
      %v1548 = vpop.f32.mrf.mxu0
      %v1549 = vadd.f32 %v1329, %v1548
      %1550 = vmatmul.bf16.gmra.mxu0 %v1472
      %v1551 = vpop.f32.mrf.mxu0
      %v1552 = vadd.f32 %v1332, %v1551
      %v1553 = vpop.f32.mrf.mxu0
      %v1554 = vadd.f32 %v1334, %v1553
      %1555 = vmatmul.bf16.gmra.mxu0 %v1475
      %v1556 = vpop.f32.mrf.mxu0
      %v1557 = vadd.f32 %v1337, %v1556
      %v1558 = vpop.f32.mrf.mxu0
      %v1559 = vadd.f32 %v1339, %v1558
      %1560 = vmatmul.bf16.gmra.mxu0 %v1478
      %v1561 = vpop.f32.mrf.mxu0
      %v1562 = vadd.f32 %v1342, %v1561
      %v1563 = vpop.f32.mrf.mxu0
      %v1564 = vadd.f32 %v1344, %v1563
      %1565 = vmatmul.bf16.gmra.mxu0 %v1481
      %v1566 = vpop.f32.mrf.mxu0
      %v1567 = vadd.f32 %v1347, %v1566
      %v1568 = vpop.f32.mrf.mxu0
      %v1569 = vadd.f32 %v1349, %v1568
      %1570 = vmatmul.bf16.gmra.mxu0 %v1484
      %v1571 = vpop.f32.mrf.mxu0
      %v1572 = vadd.f32 %v1352, %v1571
      %v1573 = vpop.f32.mrf.mxu0
      %v1574 = vadd.f32 %v1354, %v1573
      %1575 = vmatmul.bf16.gmra.mxu0 %v1487
      %v1576 = vpop.f32.mrf.mxu0
      %v1577 = vadd.f32 %v1357, %v1576
      %v1578 = vpop.f32.mrf.mxu0
      %v1579 = vadd.f32 %v1359, %v1578
      %1580 = vdwg.mxu0
      %v1581 = vld [vmem:[#allocation2] sm:$0xe]
      %v1582 = vld [vmem:[#allocation2 + $0xc] sm:$0xe]
      %v1583 = vld [vmem:[#allocation2 + $0x18] sm:$0xe]
      %v1584 = vld [vmem:[#allocation2 + $0x24] sm:$0xe]
      %v1585 = vld [vmem:[#allocation2 + $0x30] sm:$0xe]
      %v1586 = vld [vmem:[#allocation2 + $0x3c] sm:$0xe]
      %v1587 = vld [vmem:[#allocation2 + $0x48] sm:$0xe]
      %v1588 = vld [vmem:[#allocation2 + $0x54] sm:$0xe]
      %v1589 = vld [vmem:[#allocation2 + $0x60] sm:$0xe]
      %v1590 = vld [vmem:[#allocation2 + $0x6c] sm:$0xe]
      %v1591 = vld [vmem:[#allocation2 + $0x78] sm:$0xe]
      %v1592 = vld [vmem:[#allocation2 + $0x84] sm:$0xe]
      %v1593 = vld [vmem:[#allocation2 + $0x90] sm:$0xe]
      %v1594 = vld [vmem:[#allocation2 + $0x9c] sm:$0xe]
      %v1595 = vld [vmem:[#allocation2 + $0xa8] sm:$0xe]
      %v1596 = vld [vmem:[#allocation2 + $0xb4] sm:$0xe]
      %vm1629 = vcmask 1042432
      %vm1630 = vcmask 1046532
      %vm1631 = vmor %vm1629, %vm1630
      %v1632 = vrot.slane %v1581, 5
      %v1633 = vrot.slane %v1632, 4
      %v1634 = vrot.slane %v734, 5
      %v1635 = vsel %vm1631, %v1633, %v1634
      %v1636 = vrot.slane %v1634, 4
      %v1637 = vrot.slane %v766, 5
      %v1638 = vsel %vm1631, %v1636, %v1637
      %v1639 = vrot.slane %v1582, 5
      %v1640 = vrot.slane %v1639, 4
      %v1641 = vrot.slane %v736, 5
      %v1642 = vsel %vm1631, %v1640, %v1641
      %v1643 = vrot.slane %v1641, 4
      %v1644 = vrot.slane %v767, 5
      %v1645 = vsel %vm1631, %v1643, %v1644
      %v1646 = vrot.slane %v1583, 5
      %v1647 = vrot.slane %v1646, 4
      %v1648 = vrot.slane %v738, 5
      %v1649 = vsel %vm1631, %v1647, %v1648
      %v1650 = vrot.slane %v1648, 4
      %v1651 = vrot.slane %v768, 5
      %v1652 = vsel %vm1631, %v1650, %v1651
      %v1653 = vrot.slane %v1584, 5
      %v1654 = vrot.slane %v1653, 4
      %v1655 = vrot.slane %v740, 5
      %v1656 = vsel %vm1631, %v1654, %v1655
      %v1657 = vrot.slane %v1655, 4
      %v1658 = vrot.slane %v769, 5
      %v1659 = vsel %vm1631, %v1657, %v1658
      %v1660 = vrot.slane %v1585, 5
      %v1661 = vrot.slane %v1660, 4
      %v1662 = vrot.slane %v742, 5
      %v1663 = vsel %vm1631, %v1661, %v1662
      %v1664 = vrot.slane %v1662, 4
      %v1665 = vrot.slane %v770, 5
      %v1666 = vsel %vm1631, %v1664, %v1665
      %v1667 = vrot.slane %v1586, 5
      %v1668 = vrot.slane %v1667, 4
      %v1669 = vrot.slane %v744, 5
      %v1670 = vsel %vm1631, %v1668, %v1669
      %v1671 = vrot.slane %v1669, 4
      %v1672 = vrot.slane %v771, 5
      %v1673 = vsel %vm1631, %v1671, %v1672
      %v1674 = vrot.slane %v1587, 5
      %v1675 = vrot.slane %v1674, 4
      %v1676 = vrot.slane %v746, 5
      %v1677 = vsel %vm1631, %v1675, %v1676
      %v1678 = vrot.slane %v1676, 4
      %v1679 = vrot.slane %v772, 5
      %v1680 = vsel %vm1631, %v1678, %v1679
      %v1681 = vrot.slane %v1588, 5
      %v1682 = vrot.slane %v1681, 4
      %v1683 = vrot.slane %v748, 5
      %v1684 = vsel %vm1631, %v1682, %v1683
      %v1685 = vrot.slane %v1683, 4
      %v1686 = vrot.slane %v773, 5
      %v1687 = vsel %vm1631, %v1685, %v1686
      %v1688 = vrot.slane %v1589, 5
      %v1689 = vrot.slane %v1688, 4
      %v1690 = vrot.slane %v750, 5
      %v1691 = vsel %vm1631, %v1689, %v1690
      %v1692 = vrot.slane %v1690, 4
      %v1693 = vrot.slane %v774, 5
      %v1694 = vsel %vm1631, %v1692, %v1693
      %v1695 = vrot.slane %v1590, 5
      %v1696 = vrot.slane %v1695, 4
      %v1697 = vrot.slane %v752, 5
      %v1698 = vsel %vm1631, %v1696, %v1697
      %v1699 = vrot.slane %v1697, 4
      %v1700 = vrot.slane %v775, 5
      %v1701 = vsel %vm1631, %v1699, %v1700
      %v1702 = vrot.slane %v1591, 5
      %v1703 = vrot.slane %v1702, 4
      %v1704 = vrot.slane %v754, 5
      %v1705 = vsel %vm1631, %v1703, %v1704
      %v1706 = vrot.slane %v1704, 4
      %v1707 = vrot.slane %v776, 5
      %v1708 = vsel %vm1631, %v1706, %v1707
      %v1709 = vrot.slane %v1592, 5
      %v1710 = vrot.slane %v1709, 4
      %v1711 = vrot.slane %v756, 5
      %v1712 = vsel %vm1631, %v1710, %v1711
      %v1713 = vrot.slane %v1711, 4
      %v1714 = vrot.slane %v777, 5
      %v1715 = vsel %vm1631, %v1713, %v1714
      %v1716 = vrot.slane %v1593, 5
      %v1717 = vrot.slane %v1716, 4
      %v1718 = vrot.slane %v758, 5
      %v1719 = vsel %vm1631, %v1717, %v1718
      %v1720 = vrot.slane %v1718, 4
      %v1721 = vrot.slane %v778, 5
      %v1722 = vsel %vm1631, %v1720, %v1721
      %v1723 = vrot.slane %v1594, 5
      %v1724 = vrot.slane %v1723, 4
      %v1725 = vrot.slane %v760, 5
      %v1726 = vsel %vm1631, %v1724, %v1725
      %v1727 = vrot.slane %v1725, 4
      %v1728 = vrot.slane %v779, 5
      %v1729 = vsel %vm1631, %v1727, %v1728
      %v1730 = vrot.slane %v1595, 5
      %v1731 = vrot.slane %v1730, 4
      %v1732 = vrot.slane %v762, 5
      %v1733 = vsel %vm1631, %v1731, %v1732
      %v1734 = vrot.slane %v1732, 4
      %v1735 = vrot.slane %v780, 5
      %v1736 = vsel %vm1631, %v1734, %v1735
      %v1737 = vrot.slane %v1596, 5
      %v1738 = vrot.slane %v1737, 4
      %v1739 = vrot.slane %v764, 5
      %v1740 = vsel %vm1631, %v1738, %v1739
      %v1741 = vrot.slane %v1739, 4
      %v1742 = vrot.slane %v781, 5
      %v1743 = vsel %vm1631, %v1741, %v1742
      %s1744 = scalar_lea.vmem %s1, 4
      %v1745 = vld [vmem:[%s1744] sm:$0x3]
      %v1746 = vunpack.c.l.b16 %v1635
      %v1747 = vunpack.c.l.b16 %v1638
      %v1748 = vunpack.c.l.b16 %v1642
      %v1749 = vunpack.c.l.b16 %v1645
      %v1750 = vunpack.c.l.b16 %v1649
      %v1751 = vunpack.c.l.b16 %v1652
      %v1752 = vunpack.c.l.b16 %v1656
      %v1753 = vunpack.c.l.b16 %v1659
      %v1754 = vunpack.c.l.b16 %v1663
      %v1755 = vunpack.c.l.b16 %v1666
      %v1756 = vunpack.c.l.b16 %v1670
      %v1757 = vunpack.c.l.b16 %v1673
      %v1758 = vunpack.c.l.b16 %v1677
      %v1759 = vunpack.c.l.b16 %v1680
      %v1760 = vunpack.c.l.b16 %v1684
      %v1761 = vunpack.c.l.b16 %v1687
      %v1762 = vunpack.c.l.b16 %v1691
      %v1763 = vunpack.c.l.b16 %v1694
      %v1764 = vunpack.c.l.b16 %v1698
      %v1765 = vunpack.c.l.b16 %v1701
      %v1766 = vunpack.c.l.b16 %v1705
      %v1767 = vunpack.c.l.b16 %v1708
      %v1768 = vunpack.c.l.b16 %v1712
      %v1769 = vunpack.c.l.b16 %v1715
      %v1770 = vunpack.c.l.b16 %v1719
      %v1771 = vunpack.c.l.b16 %v1722
      %v1772 = vunpack.c.l.b16 %v1726
      %v1773 = vunpack.c.l.b16 %v1729
      %v1774 = vunpack.c.l.b16 %v1733
      %v1775 = vunpack.c.l.b16 %v1736
      %v1776 = vunpack.c.l.b16 %v1740
      %v1777 = vunpack.c.l.b16 %v1743
      %v1778 = vpack.c.b16 %v1747, %v1746
      %v1779 = vpack.c.b16 %v1749, %v1748
      %v1780 = vpack.c.b16 %v1751, %v1750
      %v1781 = vpack.c.b16 %v1753, %v1752
      %v1782 = vpack.c.b16 %v1755, %v1754
      %v1783 = vpack.c.b16 %v1757, %v1756
      %v1784 = vpack.c.b16 %v1759, %v1758
      %v1785 = vpack.c.b16 %v1761, %v1760
      %v1786 = vpack.c.b16 %v1763, %v1762
      %v1787 = vpack.c.b16 %v1765, %v1764
      %v1788 = vpack.c.b16 %v1767, %v1766
      %v1789 = vpack.c.b16 %v1769, %v1768
      %v1790 = vpack.c.b16 %v1771, %v1770
      %v1791 = vpack.c.b16 %v1773, %v1772
      %v1792 = vpack.c.b16 %v1775, %v1774
      %v1793 = vpack.c.b16 %v1777, %v1776
      %v1795 = vsel %vm1219, %v1778, 0
      %v1798 = vsel %vm1219, %v1779, 0
      %v1801 = vsel %vm1219, %v1780, 0
      %v1804 = vsel %vm1219, %v1781, 0
      %v1807 = vsel %vm1219, %v1782, 0
      %v1810 = vsel %vm1219, %v1783, 0
      %v1813 = vsel %vm1219, %v1784, 0
      %v1816 = vsel %vm1219, %v1785, 0
      %v1819 = vsel %vm1219, %v1786, 0
      %v1822 = vsel %vm1219, %v1787, 0
      %v1825 = vsel %vm1219, %v1788, 0
      %v1828 = vsel %vm1219, %v1789, 0
      %v1831 = vsel %vm1219, %v1790, 0
      %v1834 = vsel %vm1219, %v1791, 0
      %v1837 = vsel %vm1219, %v1792, 0
      %v1840 = vsel %vm1219, %v1793, 0
      %v1843 = vsel %vm1268, %v1745, 0
      %1845 = vmatpush.bf16.msra.mxu0 0
      %1846 = vmatpush.bf16.msra.mxu0 0
      %1847 = vmatpush.bf16.msra.mxu0 0
      %1848 = vmatpush.bf16.msra.mxu0 0
      %1849 = vmatpush.bf16.msra.mxu0 0
      %1850 = vmatpush.bf16.msra.mxu0 0
      %1851 = vmatpush.bf16.msra.mxu0 0
      %1852 = vmatpush.bf16.msra.mxu0 %v1843
      %1853 = vmatmul.bf16.gmra.mxu0 %v1795
      %v1854 = vpop.f32.mrf.mxu0
      %v1855 = vadd.f32 0.0, %v1854
      %v1856 = vpop.f32.mrf.mxu0
      %v1857 = vadd.f32 0.0, %v1856
      %1858 = vmatmul.bf16.gmra.mxu0 %v1798
      %v1859 = vpop.f32.mrf.mxu0
      %v1860 = vadd.f32 0.0, %v1859
      %v1861 = vpop.f32.mrf.mxu0
      %v1862 = vadd.f32 0.0, %v1861
      %1863 = vmatmul.bf16.gmra.mxu0 %v1801
      %v1864 = vpop.f32.mrf.mxu0
      %v1865 = vadd.f32 0.0, %v1864
      %v1866 = vpop.f32.mrf.mxu0
      %v1867 = vadd.f32 0.0, %v1866
      %1868 = vmatmul.bf16.gmra.mxu0 %v1804
      %v1869 = vpop.f32.mrf.mxu0
      %v1870 = vadd.f32 0.0, %v1869
      %v1871 = vpop.f32.mrf.mxu0
      %v1872 = vadd.f32 0.0, %v1871
      %1873 = vmatmul.bf16.gmra.mxu0 %v1807
      %v1874 = vpop.f32.mrf.mxu0
      %v1875 = vadd.f32 0.0, %v1874
      %v1876 = vpop.f32.mrf.mxu0
      %v1877 = vadd.f32 0.0, %v1876
      %1878 = vmatmul.bf16.gmra.mxu0 %v1810
      %v1879 = vpop.f32.mrf.mxu0
      %v1880 = vadd.f32 0.0, %v1879
      %v1881 = vpop.f32.mrf.mxu0
      %v1882 = vadd.f32 0.0, %v1881
      %1883 = vmatmul.bf16.gmra.mxu0 %v1813
      %v1884 = vpop.f32.mrf.mxu0
      %v1885 = vadd.f32 0.0, %v1884
      %v1886 = vpop.f32.mrf.mxu0
      %v1887 = vadd.f32 0.0, %v1886
      %1888 = vmatmul.bf16.gmra.mxu0 %v1816
      %v1889 = vpop.f32.mrf.mxu0
      %v1890 = vadd.f32 0.0, %v1889
      %v1891 = vpop.f32.mrf.mxu0
      %v1892 = vadd.f32 0.0, %v1891
      %1893 = vmatmul.bf16.gmra.mxu0 %v1819
      %v1894 = vpop.f32.mrf.mxu0
      %v1895 = vadd.f32 0.0, %v1894
      %v1896 = vpop.f32.mrf.mxu0
      %v1897 = vadd.f32 0.0, %v1896
      %1898 = vmatmul.bf16.gmra.mxu0 %v1822
      %v1899 = vpop.f32.mrf.mxu0
      %v1900 = vadd.f32 0.0, %v1899
      %v1901 = vpop.f32.mrf.mxu0
      %v1902 = vadd.f32 0.0, %v1901
      %1903 = vmatmul.bf16.gmra.mxu0 %v1825
      %v1904 = vpop.f32.mrf.mxu0
      %v1905 = vadd.f32 0.0, %v1904
      %v1906 = vpop.f32.mrf.mxu0
      %v1907 = vadd.f32 0.0, %v1906
      %1908 = vmatmul.bf16.gmra.mxu0 %v1828
      %v1909 = vpop.f32.mrf.mxu0
      %v1910 = vadd.f32 0.0, %v1909
      %v1911 = vpop.f32.mrf.mxu0
      %v1912 = vadd.f32 0.0, %v1911
      %1913 = vmatmul.bf16.gmra.mxu0 %v1831
      %v1914 = vpop.f32.mrf.mxu0
      %v1915 = vadd.f32 0.0, %v1914
      %v1916 = vpop.f32.mrf.mxu0
      %v1917 = vadd.f32 0.0, %v1916
      %1918 = vmatmul.bf16.gmra.mxu0 %v1834
      %v1919 = vpop.f32.mrf.mxu0
      %v1920 = vadd.f32 0.0, %v1919
      %v1921 = vpop.f32.mrf.mxu0
      %v1922 = vadd.f32 0.0, %v1921
      %1923 = vmatmul.bf16.gmra.mxu0 %v1837
      %v1924 = vpop.f32.mrf.mxu0
      %v1925 = vadd.f32 0.0, %v1924
      %v1926 = vpop.f32.mrf.mxu0
      %v1927 = vadd.f32 0.0, %v1926
      %1928 = vmatmul.bf16.gmra.mxu0 %v1840
      %v1929 = vpop.f32.mrf.mxu0
      %v1930 = vadd.f32 0.0, %v1929
      %v1931 = vpop.f32.mrf.mxu0
      %v1932 = vadd.f32 0.0, %v1931
      %1933 = vdwg.mxu0
      %v1934 = vadd.f32 %v1502, %v1855
      %v1935 = vadd.f32 %v1504, %v1857
      %v1936 = vadd.f32 %v1507, %v1860
      %v1937 = vadd.f32 %v1509, %v1862
      %v1938 = vadd.f32 %v1512, %v1865
      %v1939 = vadd.f32 %v1514, %v1867
      %v1940 = vadd.f32 %v1517, %v1870
      %v1941 = vadd.f32 %v1519, %v1872
      %v1942 = vadd.f32 %v1522, %v1875
      %v1943 = vadd.f32 %v1524, %v1877
      %v1944 = vadd.f32 %v1527, %v1880
      %v1945 = vadd.f32 %v1529, %v1882
      %v1946 = vadd.f32 %v1532, %v1885
      %v1947 = vadd.f32 %v1534, %v1887
      %v1948 = vadd.f32 %v1537, %v1890
      %v1949 = vadd.f32 %v1539, %v1892
      %v1950 = vadd.f32 %v1542, %v1895
      %v1951 = vadd.f32 %v1544, %v1897
      %v1952 = vadd.f32 %v1547, %v1900
      %v1953 = vadd.f32 %v1549, %v1902
      %v1954 = vadd.f32 %v1552, %v1905
      %v1955 = vadd.f32 %v1554, %v1907
      %v1956 = vadd.f32 %v1557, %v1910
      %v1957 = vadd.f32 %v1559, %v1912
      %v1958 = vadd.f32 %v1562, %v1915
      %v1959 = vadd.f32 %v1564, %v1917
      %v1960 = vadd.f32 %v1567, %v1920
      %v1961 = vadd.f32 %v1569, %v1922
      %v1962 = vadd.f32 %v1572, %v1925
      %v1963 = vadd.f32 %v1574, %v1927
      %v1964 = vadd.f32 %v1577, %v1930
      %v1965 = vadd.f32 %v1579, %v1932
      %v1966 = vld [vmem:[%s615] sm:$0xf]
      %v1967 = vld [vmem:[%s615 + $0x4] sm:$0xf]
      %v1968 = vld [vmem:[%s615 + $0xc] sm:$0xf]
      %v1969 = vld [vmem:[%s615 + $0x10] sm:$0xf]
      %v1970 = vld [vmem:[%s615 + $0x18] sm:$0xf]
      %v1971 = vld [vmem:[%s615 + $0x1c] sm:$0xf]
      %v1972 = vld [vmem:[%s615 + $0x24] sm:$0xf]
      %v1973 = vld [vmem:[%s615 + $0x28] sm:$0xf]
      %v1974 = vld [vmem:[%s615 + $0x30] sm:$0xf]
      %v1975 = vld [vmem:[%s615 + $0x34] sm:$0xf]
      %v1976 = vld [vmem:[%s615 + $0x3c] sm:$0xf]
      %v1977 = vld [vmem:[%s615 + $0x40] sm:$0xf]
      %v1978 = vld [vmem:[%s615 + $0x48] sm:$0xf]
      %v1979 = vld [vmem:[%s615 + $0x4c] sm:$0xf]
      %v1980 = vld [vmem:[%s615 + $0x54] sm:$0xf]
      %v1981 = vld [vmem:[%s615 + $0x58] sm:$0xf]
      %v1982 = vld [vmem:[%s615 + $0x60] sm:$0xf]
      %v1983 = vld [vmem:[%s615 + $0x64] sm:$0xf]
      %v1984 = vld [vmem:[%s615 + $0x6c] sm:$0xf]
      %v1985 = vld [vmem:[%s615 + $0x70] sm:$0xf]
      %v1986 = vld [vmem:[%s615 + $0x78] sm:$0xf]
      %v1987 = vld [vmem:[%s615 + $0x7c] sm:$0xf]
      %v1988 = vld [vmem:[%s615 + $0x84] sm:$0xf]
      %v1989 = vld [vmem:[%s615 + $0x88] sm:$0xf]
      %v1990 = vld [vmem:[%s615 + $0x90] sm:$0xf]
      %v1991 = vld [vmem:[%s615 + $0x94] sm:$0xf]
      %v1992 = vld [vmem:[%s615 + $0x9c] sm:$0xf]
      %v1993 = vld [vmem:[%s615 + $0xa0] sm:$0xf]
      %v1994 = vld [vmem:[%s615 + $0xa8] sm:$0xf]
      %v1995 = vld [vmem:[%s615 + $0xac] sm:$0xf]
      %v1996 = vld [vmem:[%s615 + $0xb4] sm:$0xf]
      %v1997 = vld [vmem:[%s615 + $0xb8] sm:$0xf]
      %s1998 = scalar_lea.vmem %s1, 6
      %v1999 = vld [vmem:[%s1998] sm:$0x3]
      %v2032 = vunpack.c.l.b16 %v1966
      %v2033 = vunpack.c.l.b16 %v1967
      %v2034 = vunpack.c.l.b16 %v1968
      %v2035 = vunpack.c.l.b16 %v1969
      %v2036 = vunpack.c.l.b16 %v1970
      %v2037 = vunpack.c.l.b16 %v1971
      %v2038 = vunpack.c.l.b16 %v1972
      %v2039 = vunpack.c.l.b16 %v1973
      %v2040 = vunpack.c.l.b16 %v1974
      %v2041 = vunpack.c.l.b16 %v1975
      %v2042 = vunpack.c.l.b16 %v1976
      %v2043 = vunpack.c.l.b16 %v1977
      %v2044 = vunpack.c.l.b16 %v1978
      %v2045 = vunpack.c.l.b16 %v1979
      %v2046 = vunpack.c.l.b16 %v1980
      %v2047 = vunpack.c.l.b16 %v1981
      %v2048 = vunpack.c.l.b16 %v1982
      %v2049 = vunpack.c.l.b16 %v1983
      %v2050 = vunpack.c.l.b16 %v1984
      %v2051 = vunpack.c.l.b16 %v1985
      %v2052 = vunpack.c.l.b16 %v1986
      %v2053 = vunpack.c.l.b16 %v1987
      %v2054 = vunpack.c.l.b16 %v1988
      %v2055 = vunpack.c.l.b16 %v1989
      %v2056 = vunpack.c.l.b16 %v1990
      %v2057 = vunpack.c.l.b16 %v1991
      %v2058 = vunpack.c.l.b16 %v1992
      %v2059 = vunpack.c.l.b16 %v1993
      %v2060 = vunpack.c.l.b16 %v1994
      %v2061 = vunpack.c.l.b16 %v1995
      %v2062 = vunpack.c.l.b16 %v1996
      %v2063 = vunpack.c.l.b16 %v1997
      %v2064 = vpack.c.b16 %v2033, %v2032
      %v2065 = vpack.c.b16 %v2035, %v2034
      %v2066 = vpack.c.b16 %v2037, %v2036
      %v2067 = vpack.c.b16 %v2039, %v2038
      %v2068 = vpack.c.b16 %v2041, %v2040
      %v2069 = vpack.c.b16 %v2043, %v2042
      %v2070 = vpack.c.b16 %v2045, %v2044
      %v2071 = vpack.c.b16 %v2047, %v2046
      %v2072 = vpack.c.b16 %v2049, %v2048
      %v2073 = vpack.c.b16 %v2051, %v2050
      %v2074 = vpack.c.b16 %v2053, %v2052
      %v2075 = vpack.c.b16 %v2055, %v2054
      %v2076 = vpack.c.b16 %v2057, %v2056
      %v2077 = vpack.c.b16 %v2059, %v2058
      %v2078 = vpack.c.b16 %v2061, %v2060
      %v2079 = vpack.c.b16 %v2063, %v2062
      %v2081 = vsel %vm1219, %v2064, 0
      %v2084 = vsel %vm1219, %v2065, 0
      %v2087 = vsel %vm1219, %v2066, 0
      %v2090 = vsel %vm1219, %v2067, 0
      %v2093 = vsel %vm1219, %v2068, 0
      %v2096 = vsel %vm1219, %v2069, 0
      %v2099 = vsel %vm1219, %v2070, 0
      %v2102 = vsel %vm1219, %v2071, 0
      %v2105 = vsel %vm1219, %v2072, 0
      %v2108 = vsel %vm1219, %v2073, 0
      %v2111 = vsel %vm1219, %v2074, 0
      %v2114 = vsel %vm1219, %v2075, 0
      %v2117 = vsel %vm1219, %v2076, 0
      %v2120 = vsel %vm1219, %v2077, 0
      %v2123 = vsel %vm1219, %v2078, 0
      %v2126 = vsel %vm1219, %v2079, 0
      %v2129 = vsel %vm1268, %v1999, 0
      %2131 = vmatpush.bf16.msra.mxu0 0
      %2132 = vmatpush.bf16.msra.mxu0 0
      %2133 = vmatpush.bf16.msra.mxu0 0
      %2134 = vmatpush.bf16.msra.mxu0 0
      %2135 = vmatpush.bf16.msra.mxu0 0
      %2136 = vmatpush.bf16.msra.mxu0 0
      %2137 = vmatpush.bf16.msra.mxu0 0
      %2138 = vmatpush.bf16.msra.mxu0 %v2129
      %2139 = vmatmul.bf16.gmra.mxu0 %v2081
      %v2140 = vpop.f32.mrf.mxu0
      %v2141 = vadd.f32 0.0, %v2140
      %v2142 = vpop.f32.mrf.mxu0
      %v2143 = vadd.f32 0.0, %v2142
      %2144 = vmatmul.bf16.gmra.mxu0 %v2084
      %v2145 = vpop.f32.mrf.mxu0
      %v2146 = vadd.f32 0.0, %v2145
      %v2147 = vpop.f32.mrf.mxu0
      %v2148 = vadd.f32 0.0, %v2147
      %2149 = vmatmul.bf16.gmra.mxu0 %v2087
      %v2150 = vpop.f32.mrf.mxu0
      %v2151 = vadd.f32 0.0, %v2150
      %v2152 = vpop.f32.mrf.mxu0
      %v2153 = vadd.f32 0.0, %v2152
      %2154 = vmatmul.bf16.gmra.mxu0 %v2090
      %v2155 = vpop.f32.mrf.mxu0
      %v2156 = vadd.f32 0.0, %v2155
      %v2157 = vpop.f32.mrf.mxu0
      %v2158 = vadd.f32 0.0, %v2157
      %2159 = vmatmul.bf16.gmra.mxu0 %v2093
      %v2160 = vpop.f32.mrf.mxu0
      %v2161 = vadd.f32 0.0, %v2160
      %v2162 = vpop.f32.mrf.mxu0
      %v2163 = vadd.f32 0.0, %v2162
      %2164 = vmatmul.bf16.gmra.mxu0 %v2096
      %v2165 = vpop.f32.mrf.mxu0
      %v2166 = vadd.f32 0.0, %v2165
      %v2167 = vpop.f32.mrf.mxu0
      %v2168 = vadd.f32 0.0, %v2167
      %2169 = vmatmul.bf16.gmra.mxu0 %v2099
      %v2170 = vpop.f32.mrf.mxu0
      %v2171 = vadd.f32 0.0, %v2170
      %v2172 = vpop.f32.mrf.mxu0
      %v2173 = vadd.f32 0.0, %v2172
      %2174 = vmatmul.bf16.gmra.mxu0 %v2102
      %v2175 = vpop.f32.mrf.mxu0
      %v2176 = vadd.f32 0.0, %v2175
      %v2177 = vpop.f32.mrf.mxu0
      %v2178 = vadd.f32 0.0, %v2177
      %2179 = vmatmul.bf16.gmra.mxu0 %v2105
      %v2180 = vpop.f32.mrf.mxu0
      %v2181 = vadd.f32 0.0, %v2180
      %v2182 = vpop.f32.mrf.mxu0
      %v2183 = vadd.f32 0.0, %v2182
      %2184 = vmatmul.bf16.gmra.mxu0 %v2108
      %v2185 = vpop.f32.mrf.mxu0
      %v2186 = vadd.f32 0.0, %v2185
      %v2187 = vpop.f32.mrf.mxu0
      %v2188 = vadd.f32 0.0, %v2187
      %2189 = vmatmul.bf16.gmra.mxu0 %v2111
      %v2190 = vpop.f32.mrf.mxu0
      %v2191 = vadd.f32 0.0, %v2190
      %v2192 = vpop.f32.mrf.mxu0
      %v2193 = vadd.f32 0.0, %v2192
      %2194 = vmatmul.bf16.gmra.mxu0 %v2114
      %v2195 = vpop.f32.mrf.mxu0
      %v2196 = vadd.f32 0.0, %v2195
      %v2197 = vpop.f32.mrf.mxu0
      %v2198 = vadd.f32 0.0, %v2197
      %2199 = vmatmul.bf16.gmra.mxu0 %v2117
      %v2200 = vpop.f32.mrf.mxu0
      %v2201 = vadd.f32 0.0, %v2200
      %v2202 = vpop.f32.mrf.mxu0
      %v2203 = vadd.f32 0.0, %v2202
      %2204 = vmatmul.bf16.gmra.mxu0 %v2120
      %v2205 = vpop.f32.mrf.mxu0
      %v2206 = vadd.f32 0.0, %v2205
      %v2207 = vpop.f32.mrf.mxu0
      %v2208 = vadd.f32 0.0, %v2207
      %2209 = vmatmul.bf16.gmra.mxu0 %v2123
      %v2210 = vpop.f32.mrf.mxu0
      %v2211 = vadd.f32 0.0, %v2210
      %v2212 = vpop.f32.mrf.mxu0
      %v2213 = vadd.f32 0.0, %v2212
      %2214 = vmatmul.bf16.gmra.mxu0 %v2126
      %v2215 = vpop.f32.mrf.mxu0
      %v2216 = vadd.f32 0.0, %v2215
      %v2217 = vpop.f32.mrf.mxu0
      %v2218 = vadd.f32 0.0, %v2217
      %2219 = vdwg.mxu0
      %v2220 = vadd.f32 %v1934, %v2141
      %v2221 = vadd.f32 %v1935, %v2143
      %v2222 = vadd.f32 %v1936, %v2146
      %v2223 = vadd.f32 %v1937, %v2148
      %v2224 = vadd.f32 %v1938, %v2151
      %v2225 = vadd.f32 %v1939, %v2153
      %v2226 = vadd.f32 %v1940, %v2156
      %v2227 = vadd.f32 %v1941, %v2158
      %v2228 = vadd.f32 %v1942, %v2161
      %v2229 = vadd.f32 %v1943, %v2163
      %v2230 = vadd.f32 %v1944, %v2166
      %v2231 = vadd.f32 %v1945, %v2168
      %v2232 = vadd.f32 %v1946, %v2171
      %v2233 = vadd.f32 %v1947, %v2173
      %v2234 = vadd.f32 %v1948, %v2176
      %v2235 = vadd.f32 %v1949, %v2178
      %v2236 = vadd.f32 %v1950, %v2181
      %v2237 = vadd.f32 %v1951, %v2183
      %v2238 = vadd.f32 %v1952, %v2186
      %v2239 = vadd.f32 %v1953, %v2188
      %v2240 = vadd.f32 %v1954, %v2191
      %v2241 = vadd.f32 %v1955, %v2193
      %v2242 = vadd.f32 %v1956, %v2196
      %v2243 = vadd.f32 %v1957, %v2198
      %v2244 = vadd.f32 %v1958, %v2201
      %v2245 = vadd.f32 %v1959, %v2203
      %v2246 = vadd.f32 %v1960, %v2206
      %v2247 = vadd.f32 %v1961, %v2208
      %v2248 = vadd.f32 %v1962, %v2211
      %v2249 = vadd.f32 %v1963, %v2213
      %v2250 = vadd.f32 %v1964, %v2216
      %v2251 = vadd.f32 %v1965, %v2218
      %v2252 = vld [vmem:[%s615] sm:$0xf]
      %v2253 = vld [vmem:[%s615 + $0x4] sm:$0xf]
      %v2254 = vld [vmem:[%s615 + $0x8] sm:$0x1]
      %v2255 = vld [vmem:[%s615 + $0xc] sm:$0xf]
      %v2256 = vld [vmem:[%s615 + $0x10] sm:$0xf]
      %v2257 = vld [vmem:[%s615 + $0x14] sm:$0x1]
      %v2258 = vld [vmem:[%s615 + $0x18] sm:$0xf]
      %v2259 = vld [vmem:[%s615 + $0x1c] sm:$0xf]
      %v2260 = vld [vmem:[%s615 + $0x20] sm:$0x1]
      %v2261 = vld [vmem:[%s615 + $0x24] sm:$0xf]
      %v2262 = vld [vmem:[%s615 + $0x28] sm:$0xf]
      %v2263 = vld [vmem:[%s615 + $0x2c] sm:$0x1]
      %v2264 = vld [vmem:[%s615 + $0x30] sm:$0xf]
      %v2265 = vld [vmem:[%s615 + $0x34] sm:$0xf]
      %v2266 = vld [vmem:[%s615 + $0x38] sm:$0x1]
      %v2267 = vld [vmem:[%s615 + $0x3c] sm:$0xf]
      %v2268 = vld [vmem:[%s615 + $0x40] sm:$0xf]
      %v2269 = vld [vmem:[%s615 + $0x44] sm:$0x1]
      %v2270 = vld [vmem:[%s615 + $0x48] sm:$0xf]
      %v2271 = vld [vmem:[%s615 + $0x4c] sm:$0xf]
      %v2272 = vld [vmem:[%s615 + $0x50] sm:$0x1]
      %v2273 = vld [vmem:[%s615 + $0x54] sm:$0xf]
      %v2274 = vld [vmem:[%s615 + $0x58] sm:$0xf]
      %v2275 = vld [vmem:[%s615 + $0x5c] sm:$0x1]
      %v2276 = vld [vmem:[%s615 + $0x60] sm:$0xf]
      %v2277 = vld [vmem:[%s615 + $0x64] sm:$0xf]
      %v2278 = vld [vmem:[%s615 + $0x68] sm:$0x1]
      %v2279 = vld [vmem:[%s615 + $0x6c] sm:$0xf]
      %v2280 = vld [vmem:[%s615 + $0x70] sm:$0xf]
      %v2281 = vld [vmem:[%s615 + $0x74] sm:$0x1]
      %v2282 = vld [vmem:[%s615 + $0x78] sm:$0xf]
      %v2283 = vld [vmem:[%s615 + $0x7c] sm:$0xf]
      %v2284 = vld [vmem:[%s615 + $0x80] sm:$0x1]
      %v2285 = vld [vmem:[%s615 + $0x84] sm:$0xf]
      %v2286 = vld [vmem:[%s615 + $0x88] sm:$0xf]
      %v2287 = vld [vmem:[%s615 + $0x8c] sm:$0x1]
      %v2288 = vld [vmem:[%s615 + $0x90] sm:$0xf]
      %v2289 = vld [vmem:[%s615 + $0x94] sm:$0xf]
      %v2290 = vld [vmem:[%s615 + $0x98] sm:$0x1]
      %v2291 = vld [vmem:[%s615 + $0x9c] sm:$0xf]
      %v2292 = vld [vmem:[%s615 + $0xa0] sm:$0xf]
      %v2293 = vld [vmem:[%s615 + $0xa4] sm:$0x1]
      %v2294 = vld [vmem:[%s615 + $0xa8] sm:$0xf]
      %v2295 = vld [vmem:[%s615 + $0xac] sm:$0xf]
      %v2296 = vld [vmem:[%s615 + $0xb0] sm:$0x1]
      %v2297 = vld [vmem:[%s615 + $0xb4] sm:$0xf]
      %v2298 = vld [vmem:[%s615 + $0xb8] sm:$0xf]
      %v2299 = vld [vmem:[%s615 + $0xbc] sm:$0x1]
      %v2301 = vshrl.u32 %v2252, 16
      %v2303 = vrot.slane %v2301, 4
      %v2304 = vshll.u32 %v2252, 16
      %v2306 = vrot.slane %v2304, 5
      %v2307 = vor.u32 %v2303, %v2306
      %v2308 = vrot.slane %v2307, 4
      %v2310 = vshll.u32 %v2253, 16
      %v2312 = vrot.slane %v2310, 5
      %v2313 = vsel %vm784, %v2308, %v2312
      %v2314 = vshrl.u32 %v2253, 16
      %v2316 = vrot.slane %v2314, 4
      %v2317 = vor.u32 %v2316, %v2312
      %v2318 = vrot.slane %v2317, 4
      %v2320 = vshll.u32 %v2254, 16
      %v2322 = vrot.slane %v2320, 5
      %v2323 = vsel %vm784, %v2318, %v2322
      %v2325 = vshrl.u32 %v2255, 16
      %v2327 = vrot.slane %v2325, 4
      %v2328 = vshll.u32 %v2255, 16
      %v2330 = vrot.slane %v2328, 5
      %v2331 = vor.u32 %v2327, %v2330
      %v2332 = vrot.slane %v2331, 4
      %v2334 = vshll.u32 %v2256, 16
      %v2336 = vrot.slane %v2334, 5
      %v2337 = vsel %vm784, %v2332, %v2336
      %v2338 = vshrl.u32 %v2256, 16
      %v2340 = vrot.slane %v2338, 4
      %v2341 = vor.u32 %v2340, %v2336
      %v2342 = vrot.slane %v2341, 4
      %v2344 = vshll.u32 %v2257, 16
      %v2346 = vrot.slane %v2344, 5
      %v2347 = vsel %vm784, %v2342, %v2346
      %v2349 = vshrl.u32 %v2258, 16
      %v2351 = vrot.slane %v2349, 4
      %v2352 = vshll.u32 %v2258, 16
      %v2354 = vrot.slane %v2352, 5
      %v2355 = vor.u32 %v2351, %v2354
      %v2356 = vrot.slane %v2355, 4
      %v2358 = vshll.u32 %v2259, 16
      %v2360 = vrot.slane %v2358, 5
      %v2361 = vsel %vm784, %v2356, %v2360
      %v2362 = vshrl.u32 %v2259, 16
      %v2364 = vrot.slane %v2362, 4
      %v2365 = vor.u32 %v2364, %v2360
      %v2366 = vrot.slane %v2365, 4
      %v2368 = vshll.u32 %v2260, 16
      %v2370 = vrot.slane %v2368, 5
      %v2371 = vsel %vm784, %v2366, %v2370
      %v2373 = vshrl.u32 %v2261, 16
      %v2375 = vrot.slane %v2373, 4
      %v2376 = vshll.u32 %v2261, 16
      %v2378 = vrot.slane %v2376, 5
      %v2379 = vor.u32 %v2375, %v2378
      %v2380 = vrot.slane %v2379, 4
      %v2382 = vshll.u32 %v2262, 16
      %v2384 = vrot.slane %v2382, 5
      %v2385 = vsel %vm784, %v2380, %v2384
      %v2386 = vshrl.u32 %v2262, 16
      %v2388 = vrot.slane %v2386, 4
      %v2389 = vor.u32 %v2388, %v2384
      %v2390 = vrot.slane %v2389, 4
      %v2392 = vshll.u32 %v2263, 16
      %v2394 = vrot.slane %v2392, 5
      %v2395 = vsel %vm784, %v2390, %v2394
      %v2397 = vshrl.u32 %v2264, 16
      %v2399 = vrot.slane %v2397, 4
      %v2400 = vshll.u32 %v2264, 16
      %v2402 = vrot.slane %v2400, 5
      %v2403 = vor.u32 %v2399, %v2402
      %v2404 = vrot.slane %v2403, 4
      %v2406 = vshll.u32 %v2265, 16
      %v2408 = vrot.slane %v2406, 5
      %v2409 = vsel %vm784, %v2404, %v2408
      %v2410 = vshrl.u32 %v2265, 16
      %v2412 = vrot.slane %v2410, 4
      %v2413 = vor.u32 %v2412, %v2408
      %v2414 = vrot.slane %v2413, 4
      %v2416 = vshll.u32 %v2266, 16
      %v2418 = vrot.slane %v2416, 5
      %v2419 = vsel %vm784, %v2414, %v2418
      %v2421 = vshrl.u32 %v2267, 16
      %v2423 = vrot.slane %v2421, 4
      %v2424 = vshll.u32 %v2267, 16
      %v2426 = vrot.slane %v2424, 5
      %v2427 = vor.u32 %v2423, %v2426
      %v2428 = vrot.slane %v2427, 4
      %v2430 = vshll.u32 %v2268, 16
      %v2432 = vrot.slane %v2430, 5
      %v2433 = vsel %vm784, %v2428, %v2432
      %v2434 = vshrl.u32 %v2268, 16
      %v2436 = vrot.slane %v2434, 4
      %v2437 = vor.u32 %v2436, %v2432
      %v2438 = vrot.slane %v2437, 4
      %v2440 = vshll.u32 %v2269, 16
      %v2442 = vrot.slane %v2440, 5
      %v2443 = vsel %vm784, %v2438, %v2442
      %v2445 = vshrl.u32 %v2270, 16
      %v2447 = vrot.slane %v2445, 4
      %v2448 = vshll.u32 %v2270, 16
      %v2450 = vrot.slane %v2448, 5
      %v2451 = vor.u32 %v2447, %v2450
      %v2452 = vrot.slane %v2451, 4
      %v2454 = vshll.u32 %v2271, 16
      %v2456 = vrot.slane %v2454, 5
      %v2457 = vsel %vm784, %v2452, %v2456
      %v2458 = vshrl.u32 %v2271, 16
      %v2460 = vrot.slane %v2458, 4
      %v2461 = vor.u32 %v2460, %v2456
      %v2462 = vrot.slane %v2461, 4
      %v2464 = vshll.u32 %v2272, 16
      %v2466 = vrot.slane %v2464, 5
      %v2467 = vsel %vm784, %v2462, %v2466
      %v2469 = vshrl.u32 %v2273, 16
      %v2471 = vrot.slane %v2469, 4
      %v2472 = vshll.u32 %v2273, 16
      %v2474 = vrot.slane %v2472, 5
      %v2475 = vor.u32 %v2471, %v2474
      %v2476 = vrot.slane %v2475, 4
      %v2478 = vshll.u32 %v2274, 16
      %v2480 = vrot.slane %v2478, 5
      %v2481 = vsel %vm784, %v2476, %v2480
      %v2482 = vshrl.u32 %v2274, 16
      %v2484 = vrot.slane %v2482, 4
      %v2485 = vor.u32 %v2484, %v2480
      %v2486 = vrot.slane %v2485, 4
      %v2488 = vshll.u32 %v2275, 16
      %v2490 = vrot.slane %v2488, 5
      %v2491 = vsel %vm784, %v2486, %v2490
      %v2493 = vshrl.u32 %v2276, 16
      %v2495 = vrot.slane %v2493, 4
      %v2496 = vshll.u32 %v2276, 16
      %v2498 = vrot.slane %v2496, 5
      %v2499 = vor.u32 %v2495, %v2498
      %v2500 = vrot.slane %v2499, 4
      %v2502 = vshll.u32 %v2277, 16
      %v2504 = vrot.slane %v2502, 5
      %v2505 = vsel %vm784, %v2500, %v2504
      %v2506 = vshrl.u32 %v2277, 16
      %v2508 = vrot.slane %v2506, 4
      %v2509 = vor.u32 %v2508, %v2504
      %v2510 = vrot.slane %v2509, 4
      %v2512 = vshll.u32 %v2278, 16
      %v2514 = vrot.slane %v2512, 5
      %v2515 = vsel %vm784, %v2510, %v2514
      %v2517 = vshrl.u32 %v2279, 16
      %v2519 = vrot.slane %v2517, 4
      %v2520 = vshll.u32 %v2279, 16
      %v2522 = vrot.slane %v2520, 5
      %v2523 = vor.u32 %v2519, %v2522
      %v2524 = vrot.slane %v2523, 4
      %v2526 = vshll.u32 %v2280, 16
      %v2528 = vrot.slane %v2526, 5
      %v2529 = vsel %vm784, %v2524, %v2528
      %v2530 = vshrl.u32 %v2280, 16
      %v2532 = vrot.slane %v2530, 4
      %v2533 = vor.u32 %v2532, %v2528
      %v2534 = vrot.slane %v2533, 4
      %v2536 = vshll.u32 %v2281, 16
      %v2538 = vrot.slane %v2536, 5
      %v2539 = vsel %vm784, %v2534, %v2538
      %v2541 = vshrl.u32 %v2282, 16
      %v2543 = vrot.slane %v2541, 4
      %v2544 = vshll.u32 %v2282, 16
      %v2546 = vrot.slane %v2544, 5
      %v2547 = vor.u32 %v2543, %v2546
      %v2548 = vrot.slane %v2547, 4
      %v2550 = vshll.u32 %v2283, 16
      %v2552 = vrot.slane %v2550, 5
      %v2553 = vsel %vm784, %v2548, %v2552
      %v2554 = vshrl.u32 %v2283, 16
      %v2556 = vrot.slane %v2554, 4
      %v2557 = vor.u32 %v2556, %v2552
      %v2558 = vrot.slane %v2557, 4
      %v2560 = vshll.u32 %v2284, 16
      %v2562 = vrot.slane %v2560, 5
      %v2563 = vsel %vm784, %v2558, %v2562
      %v2565 = vshrl.u32 %v2285, 16
      %v2567 = vrot.slane %v2565, 4
      %v2568 = vshll.u32 %v2285, 16
      %v2570 = vrot.slane %v2568, 5
      %v2571 = vor.u32 %v2567, %v2570
      %v2572 = vrot.slane %v2571, 4
      %v2574 = vshll.u32 %v2286, 16
      %v2576 = vrot.slane %v2574, 5
      %v2577 = vsel %vm784, %v2572, %v2576
      %v2578 = vshrl.u32 %v2286, 16
      %v2580 = vrot.slane %v2578, 4
      %v2581 = vor.u32 %v2580, %v2576
      %v2582 = vrot.slane %v2581, 4
      %v2584 = vshll.u32 %v2287, 16
      %v2586 = vrot.slane %v2584, 5
      %v2587 = vsel %vm784, %v2582, %v2586
      %v2589 = vshrl.u32 %v2288, 16
      %v2591 = vrot.slane %v2589, 4
      %v2592 = vshll.u32 %v2288, 16
      %v2594 = vrot.slane %v2592, 5
      %v2595 = vor.u32 %v2591, %v2594
      %v2596 = vrot.slane %v2595, 4
      %v2598 = vshll.u32 %v2289, 16
      %v2600 = vrot.slane %v2598, 5
      %v2601 = vsel %vm784, %v2596, %v2600
      %v2602 = vshrl.u32 %v2289, 16
      %v2604 = vrot.slane %v2602, 4
      %v2605 = vor.u32 %v2604, %v2600
      %v2606 = vrot.slane %v2605, 4
      %v2608 = vshll.u32 %v2290, 16
      %v2610 = vrot.slane %v2608, 5
      %v2611 = vsel %vm784, %v2606, %v2610
      %v2613 = vshrl.u32 %v2291, 16
      %v2615 = vrot.slane %v2613, 4
      %v2616 = vshll.u32 %v2291, 16
      %v2618 = vrot.slane %v2616, 5
      %v2619 = vor.u32 %v2615, %v2618
      %v2620 = vrot.slane %v2619, 4
      %v2622 = vshll.u32 %v2292, 16
      %v2624 = vrot.slane %v2622, 5
      %v2625 = vsel %vm784, %v2620, %v2624
      %v2626 = vshrl.u32 %v2292, 16
      %v2628 = vrot.slane %v2626, 4
      %v2629 = vor.u32 %v2628, %v2624
      %v2630 = vrot.slane %v2629, 4
      %v2632 = vshll.u32 %v2293, 16
      %v2634 = vrot.slane %v2632, 5
      %v2635 = vsel %vm784, %v2630, %v2634
      %v2637 = vshrl.u32 %v2294, 16
      %v2639 = vrot.slane %v2637, 4
      %v2640 = vshll.u32 %v2294, 16
      %v2642 = vrot.slane %v2640, 5
      %v2643 = vor.u32 %v2639, %v2642
      %v2644 = vrot.slane %v2643, 4
      %v2646 = vshll.u32 %v2295, 16
      %v2648 = vrot.slane %v2646, 5
      %v2649 = vsel %vm784, %v2644, %v2648
      %v2650 = vshrl.u32 %v2295, 16
      %v2652 = vrot.slane %v2650, 4
      %v2653 = vor.u32 %v2652, %v2648
      %v2654 = vrot.slane %v2653, 4
      %v2656 = vshll.u32 %v2296, 16
      %v2658 = vrot.slane %v2656, 5
      %v2659 = vsel %vm784, %v2654, %v2658
      %v2661 = vshrl.u32 %v2297, 16
      %v2663 = vrot.slane %v2661, 4
      %v2664 = vshll.u32 %v2297, 16
      %v2666 = vrot.slane %v2664, 5
      %v2667 = vor.u32 %v2663, %v2666
      %v2668 = vrot.slane %v2667, 4
      %v2670 = vshll.u32 %v2298, 16
      %v2672 = vrot.slane %v2670, 5
      %v2673 = vsel %vm784, %v2668, %v2672
      %v2674 = vshrl.u32 %v2298, 16
      %v2676 = vrot.slane %v2674, 4
      %v2677 = vor.u32 %v2676, %v2672
      %v2678 = vrot.slane %v2677, 4
      %v2680 = vshll.u32 %v2299, 16
      %v2682 = vrot.slane %v2680, 5
      %v2683 = vsel %vm784, %v2678, %v2682
      %s2684 = scalar_lea.vmem %s1, 8
      %v2685 = vld [vmem:[%s2684] sm:$0x3]
      %v2686 = vunpack.c.l.b16 %v2313
      %v2687 = vunpack.c.l.b16 %v2323
      %v2688 = vunpack.c.l.b16 %v2337
      %v2689 = vunpack.c.l.b16 %v2347
      %v2690 = vunpack.c.l.b16 %v2361
      %v2691 = vunpack.c.l.b16 %v2371
      %v2692 = vunpack.c.l.b16 %v2385
      %v2693 = vunpack.c.l.b16 %v2395
      %v2694 = vunpack.c.l.b16 %v2409
      %v2695 = vunpack.c.l.b16 %v2419
      %v2696 = vunpack.c.l.b16 %v2433
      %v2697 = vunpack.c.l.b16 %v2443
      %v2698 = vunpack.c.l.b16 %v2457
      %v2699 = vunpack.c.l.b16 %v2467
      %v2700 = vunpack.c.l.b16 %v2481
      %v2701 = vunpack.c.l.b16 %v2491
      %v2702 = vunpack.c.l.b16 %v2505
      %v2703 = vunpack.c.l.b16 %v2515
      %v2704 = vunpack.c.l.b16 %v2529
      %v2705 = vunpack.c.l.b16 %v2539
      %v2706 = vunpack.c.l.b16 %v2553
      %v2707 = vunpack.c.l.b16 %v2563
      %v2708 = vunpack.c.l.b16 %v2577
      %v2709 = vunpack.c.l.b16 %v2587
      %v2710 = vunpack.c.l.b16 %v2601
      %v2711 = vunpack.c.l.b16 %v2611
      %v2712 = vunpack.c.l.b16 %v2625
      %v2713 = vunpack.c.l.b16 %v2635
      %v2714 = vunpack.c.l.b16 %v2649
      %v2715 = vunpack.c.l.b16 %v2659
      %v2716 = vunpack.c.l.b16 %v2673
      %v2717 = vunpack.c.l.b16 %v2683
      %v2718 = vpack.c.b16 %v2687, %v2686
      %v2719 = vpack.c.b16 %v2689, %v2688
      %v2720 = vpack.c.b16 %v2691, %v2690
      %v2721 = vpack.c.b16 %v2693, %v2692
      %v2722 = vpack.c.b16 %v2695, %v2694
      %v2723 = vpack.c.b16 %v2697, %v2696
      %v2724 = vpack.c.b16 %v2699, %v2698
      %v2725 = vpack.c.b16 %v2701, %v2700
      %v2726 = vpack.c.b16 %v2703, %v2702
      %v2727 = vpack.c.b16 %v2705, %v2704
      %v2728 = vpack.c.b16 %v2707, %v2706
      %v2729 = vpack.c.b16 %v2709, %v2708
      %v2730 = vpack.c.b16 %v2711, %v2710
      %v2731 = vpack.c.b16 %v2713, %v2712
      %v2732 = vpack.c.b16 %v2715, %v2714
      %v2733 = vpack.c.b16 %v2717, %v2716
      %v2735 = vsel %vm1219, %v2718, 0
      %v2738 = vsel %vm1219, %v2719, 0
      %v2741 = vsel %vm1219, %v2720, 0
      %v2744 = vsel %vm1219, %v2721, 0
      %v2747 = vsel %vm1219, %v2722, 0
      %v2750 = vsel %vm1219, %v2723, 0
      %v2753 = vsel %vm1219, %v2724, 0
      %v2756 = vsel %vm1219, %v2725, 0
      %v2759 = vsel %vm1219, %v2726, 0
      %v2762 = vsel %vm1219, %v2727, 0
      %v2765 = vsel %vm1219, %v2728, 0
      %v2768 = vsel %vm1219, %v2729, 0
      %v2771 = vsel %vm1219, %v2730, 0
      %v2774 = vsel %vm1219, %v2731, 0
      %v2777 = vsel %vm1219, %v2732, 0
      %v2780 = vsel %vm1219, %v2733, 0
      %v2783 = vsel %vm1268, %v2685, 0
      %2785 = vmatpush.bf16.msra.mxu0 0
      %2786 = vmatpush.bf16.msra.mxu0 0
      %2787 = vmatpush.bf16.msra.mxu0 0
      %2788 = vmatpush.bf16.msra.mxu0 0
      %2789 = vmatpush.bf16.msra.mxu0 0
      %2790 = vmatpush.bf16.msra.mxu0 0
      %2791 = vmatpush.bf16.msra.mxu0 0
      %2792 = vmatpush.bf16.msra.mxu0 %v2783
      %2793 = vmatmul.bf16.gmra.mxu0 %v2735
      %v2794 = vpop.f32.mrf.mxu0
      %v2795 = vadd.f32 0.0, %v2794
      %v2796 = vpop.f32.mrf.mxu0
      %v2797 = vadd.f32 0.0, %v2796
      %2798 = vmatmul.bf16.gmra.mxu0 %v2738
      %v2799 = vpop.f32.mrf.mxu0
      %v2800 = vadd.f32 0.0, %v2799
      %v2801 = vpop.f32.mrf.mxu0
      %v2802 = vadd.f32 0.0, %v2801
      %2803 = vmatmul.bf16.gmra.mxu0 %v2741
      %v2804 = vpop.f32.mrf.mxu0
      %v2805 = vadd.f32 0.0, %v2804
      %v2806 = vpop.f32.mrf.mxu0
      %v2807 = vadd.f32 0.0, %v2806
      %2808 = vmatmul.bf16.gmra.mxu0 %v2744
      %v2809 = vpop.f32.mrf.mxu0
      %v2810 = vadd.f32 0.0, %v2809
      %v2811 = vpop.f32.mrf.mxu0
      %v2812 = vadd.f32 0.0, %v2811
      %2813 = vmatmul.bf16.gmra.mxu0 %v2747
      %v2814 = vpop.f32.mrf.mxu0
      %v2815 = vadd.f32 0.0, %v2814
      %v2816 = vpop.f32.mrf.mxu0
      %v2817 = vadd.f32 0.0, %v2816
      %2818 = vmatmul.bf16.gmra.mxu0 %v2750
      %v2819 = vpop.f32.mrf.mxu0
      %v2820 = vadd.f32 0.0, %v2819
      %v2821 = vpop.f32.mrf.mxu0
      %v2822 = vadd.f32 0.0, %v2821
      %2823 = vmatmul.bf16.gmra.mxu0 %v2753
      %v2824 = vpop.f32.mrf.mxu0
      %v2825 = vadd.f32 0.0, %v2824
      %v2826 = vpop.f32.mrf.mxu0
      %v2827 = vadd.f32 0.0, %v2826
      %2828 = vmatmul.bf16.gmra.mxu0 %v2756
      %v2829 = vpop.f32.mrf.mxu0
      %v2830 = vadd.f32 0.0, %v2829
      %v2831 = vpop.f32.mrf.mxu0
      %v2832 = vadd.f32 0.0, %v2831
      %2833 = vmatmul.bf16.gmra.mxu0 %v2759
      %v2834 = vpop.f32.mrf.mxu0
      %v2835 = vadd.f32 0.0, %v2834
      %v2836 = vpop.f32.mrf.mxu0
      %v2837 = vadd.f32 0.0, %v2836
      %2838 = vmatmul.bf16.gmra.mxu0 %v2762
      %v2839 = vpop.f32.mrf.mxu0
      %v2840 = vadd.f32 0.0, %v2839
      %v2841 = vpop.f32.mrf.mxu0
      %v2842 = vadd.f32 0.0, %v2841
      %2843 = vmatmul.bf16.gmra.mxu0 %v2765
      %v2844 = vpop.f32.mrf.mxu0
      %v2845 = vadd.f32 0.0, %v2844
      %v2846 = vpop.f32.mrf.mxu0
      %v2847 = vadd.f32 0.0, %v2846
      %2848 = vmatmul.bf16.gmra.mxu0 %v2768
      %v2849 = vpop.f32.mrf.mxu0
      %v2850 = vadd.f32 0.0, %v2849
      %v2851 = vpop.f32.mrf.mxu0
      %v2852 = vadd.f32 0.0, %v2851
      %2853 = vmatmul.bf16.gmra.mxu0 %v2771
      %v2854 = vpop.f32.mrf.mxu0
      %v2855 = vadd.f32 0.0, %v2854
      %v2856 = vpop.f32.mrf.mxu0
      %v2857 = vadd.f32 0.0, %v2856
      %2858 = vmatmul.bf16.gmra.mxu0 %v2774
      %v2859 = vpop.f32.mrf.mxu0
      %v2860 = vadd.f32 0.0, %v2859
      %v2861 = vpop.f32.mrf.mxu0
      %v2862 = vadd.f32 0.0, %v2861
      %2863 = vmatmul.bf16.gmra.mxu0 %v2777
      %v2864 = vpop.f32.mrf.mxu0
      %v2865 = vadd.f32 0.0, %v2864
      %v2866 = vpop.f32.mrf.mxu0
      %v2867 = vadd.f32 0.0, %v2866
      %2868 = vmatmul.bf16.gmra.mxu0 %v2780
      %v2869 = vpop.f32.mrf.mxu0
      %v2870 = vadd.f32 0.0, %v2869
      %v2871 = vpop.f32.mrf.mxu0
      %v2872 = vadd.f32 0.0, %v2871
      %2873 = vdwg.mxu0
      %v2874 = vadd.f32 %v2220, %v2795
      %v2875 = vadd.f32 %v2221, %v2797
      %v2876 = vadd.f32 %v2222, %v2800
      %v2877 = vadd.f32 %v2223, %v2802
      %v2878 = vadd.f32 %v2224, %v2805
      %v2879 = vadd.f32 %v2225, %v2807
      %v2880 = vadd.f32 %v2226, %v2810
      %v2881 = vadd.f32 %v2227, %v2812
      %v2882 = vadd.f32 %v2228, %v2815
      %v2883 = vadd.f32 %v2229, %v2817
      %v2884 = vadd.f32 %v2230, %v2820
      %v2885 = vadd.f32 %v2231, %v2822
      %v2886 = vadd.f32 %v2232, %v2825
      %v2887 = vadd.f32 %v2233, %v2827
      %v2888 = vadd.f32 %v2234, %v2830
      %v2889 = vadd.f32 %v2235, %v2832
      %v2890 = vadd.f32 %v2236, %v2835
      %v2891 = vadd.f32 %v2237, %v2837
      %v2892 = vadd.f32 %v2238, %v2840
      %v2893 = vadd.f32 %v2239, %v2842
      %v2894 = vadd.f32 %v2240, %v2845
      %v2895 = vadd.f32 %v2241, %v2847
      %v2896 = vadd.f32 %v2242, %v2850
      %v2897 = vadd.f32 %v2243, %v2852
      %v2898 = vadd.f32 %v2244, %v2855
      %v2899 = vadd.f32 %v2245, %v2857
      %v2900 = vadd.f32 %v2246, %v2860
      %v2901 = vadd.f32 %v2247, %v2862
      %v2902 = vadd.f32 %v2248, %v2865
      %v2903 = vadd.f32 %v2249, %v2867
      %v2904 = vadd.f32 %v2250, %v2870
      %v2905 = vadd.f32 %v2251, %v2872
      %v2906 = vld [vmem:[%s615] sm:$0xe]
      %v2907 = vld [vmem:[%s615 + $0xc] sm:$0xe]
      %v2908 = vld [vmem:[%s615 + $0x18] sm:$0xe]
      %v2909 = vld [vmem:[%s615 + $0x24] sm:$0xe]
      %v2910 = vld [vmem:[%s615 + $0x30] sm:$0xe]
      %v2911 = vld [vmem:[%s615 + $0x3c] sm:$0xe]
      %v2912 = vld [vmem:[%s615 + $0x48] sm:$0xe]
      %v2913 = vld [vmem:[%s615 + $0x54] sm:$0xe]
      %v2914 = vld [vmem:[%s615 + $0x60] sm:$0xe]
      %v2915 = vld [vmem:[%s615 + $0x6c] sm:$0xe]
      %v2916 = vld [vmem:[%s615 + $0x78] sm:$0xe]
      %v2917 = vld [vmem:[%s615 + $0x84] sm:$0xe]
      %v2918 = vld [vmem:[%s615 + $0x90] sm:$0xe]
      %v2919 = vld [vmem:[%s615 + $0x9c] sm:$0xe]
      %v2920 = vld [vmem:[%s615 + $0xa8] sm:$0xe]
      %v2921 = vld [vmem:[%s615 + $0xb4] sm:$0xe]
      %v2970 = vrot.slane %v2906, 5
      %v2971 = vrot.slane %v2970, 4
      %v2972 = vrot.slane %v2253, 5
      %v2973 = vsel %vm1631, %v2971, %v2972
      %v2974 = vrot.slane %v2972, 4
      %v2975 = vrot.slane %v2254, 5
      %v2976 = vsel %vm1631, %v2974, %v2975
      %v2977 = vrot.slane %v2907, 5
      %v2978 = vrot.slane %v2977, 4
      %v2979 = vrot.slane %v2256, 5
      %v2980 = vsel %vm1631, %v2978, %v2979
      %v2981 = vrot.slane %v2979, 4
      %v2982 = vrot.slane %v2257, 5
      %v2983 = vsel %vm1631, %v2981, %v2982
      %v2984 = vrot.slane %v2908, 5
      %v2985 = vrot.slane %v2984, 4
      %v2986 = vrot.slane %v2259, 5
      %v2987 = vsel %vm1631, %v2985, %v2986
      %v2988 = vrot.slane %v2986, 4
      %v2989 = vrot.slane %v2260, 5
      %v2990 = vsel %vm1631, %v2988, %v2989
      %v2991 = vrot.slane %v2909, 5
      %v2992 = vrot.slane %v2991, 4
      %v2993 = vrot.slane %v2262, 5
      %v2994 = vsel %vm1631, %v2992, %v2993
      %v2995 = vrot.slane %v2993, 4
      %v2996 = vrot.slane %v2263, 5
      %v2997 = vsel %vm1631, %v2995, %v2996
      %v2998 = vrot.slane %v2910, 5
      %v2999 = vrot.slane %v2998, 4
      %v3000 = vrot.slane %v2265, 5
      %v3001 = vsel %vm1631, %v2999, %v3000
      %v3002 = vrot.slane %v3000, 4
      %v3003 = vrot.slane %v2266, 5
      %v3004 = vsel %vm1631, %v3002, %v3003
      %v3005 = vrot.slane %v2911, 5
      %v3006 = vrot.slane %v3005, 4
      %v3007 = vrot.slane %v2268, 5
      %v3008 = vsel %vm1631, %v3006, %v3007
      %v3009 = vrot.slane %v3007, 4
      %v3010 = vrot.slane %v2269, 5
      %v3011 = vsel %vm1631, %v3009, %v3010
      %v3012 = vrot.slane %v2912, 5
      %v3013 = vrot.slane %v3012, 4
      %v3014 = vrot.slane %v2271, 5
      %v3015 = vsel %vm1631, %v3013, %v3014
      %v3016 = vrot.slane %v3014, 4
      %v3017 = vrot.slane %v2272, 5
      %v3018 = vsel %vm1631, %v3016, %v3017
      %v3019 = vrot.slane %v2913, 5
      %v3020 = vrot.slane %v3019, 4
      %v3021 = vrot.slane %v2274, 5
      %v3022 = vsel %vm1631, %v3020, %v3021
      %v3023 = vrot.slane %v3021, 4
      %v3024 = vrot.slane %v2275, 5
      %v3025 = vsel %vm1631, %v3023, %v3024
      %v3026 = vrot.slane %v2914, 5
      %v3027 = vrot.slane %v3026, 4
      %v3028 = vrot.slane %v2277, 5
      %v3029 = vsel %vm1631, %v3027, %v3028
      %v3030 = vrot.slane %v3028, 4
      %v3031 = vrot.slane %v2278, 5
      %v3032 = vsel %vm1631, %v3030, %v3031
      %v3033 = vrot.slane %v2915, 5
      %v3034 = vrot.slane %v3033, 4
      %v3035 = vrot.slane %v2280, 5
      %v3036 = vsel %vm1631, %v3034, %v3035
      %v3037 = vrot.slane %v3035, 4
      %v3038 = vrot.slane %v2281, 5
      %v3039 = vsel %vm1631, %v3037, %v3038
      %v3040 = vrot.slane %v2916, 5
      %v3041 = vrot.slane %v3040, 4
      %v3042 = vrot.slane %v2283, 5
      %v3043 = vsel %vm1631, %v3041, %v3042
      %v3044 = vrot.slane %v3042, 4
      %v3045 = vrot.slane %v2284, 5
      %v3046 = vsel %vm1631, %v3044, %v3045
      %v3047 = vrot.slane %v2917, 5
      %v3048 = vrot.slane %v3047, 4
      %v3049 = vrot.slane %v2286, 5
      %v3050 = vsel %vm1631, %v3048, %v3049
      %v3051 = vrot.slane %v3049, 4
      %v3052 = vrot.slane %v2287, 5
      %v3053 = vsel %vm1631, %v3051, %v3052
      %v3054 = vrot.slane %v2918, 5
      %v3055 = vrot.slane %v3054, 4
      %v3056 = vrot.slane %v2289, 5
      %v3057 = vsel %vm1631, %v3055, %v3056
      %v3058 = vrot.slane %v3056, 4
      %v3059 = vrot.slane %v2290, 5
      %v3060 = vsel %vm1631, %v3058, %v3059
      %v3061 = vrot.slane %v2919, 5
      %v3062 = vrot.slane %v3061, 4
      %v3063 = vrot.slane %v2292, 5
      %v3064 = vsel %vm1631, %v3062, %v3063
      %v3065 = vrot.slane %v3063, 4
      %v3066 = vrot.slane %v2293, 5
      %v3067 = vsel %vm1631, %v3065, %v3066
      %v3068 = vrot.slane %v2920, 5
      %v3069 = vrot.slane %v3068, 4
      %v3070 = vrot.slane %v2295, 5
      %v3071 = vsel %vm1631, %v3069, %v3070
      %v3072 = vrot.slane %v3070, 4
      %v3073 = vrot.slane %v2296, 5
      %v3074 = vsel %vm1631, %v3072, %v3073
      %v3075 = vrot.slane %v2921, 5
      %v3076 = vrot.slane %v3075, 4
      %v3077 = vrot.slane %v2298, 5
      %v3078 = vsel %vm1631, %v3076, %v3077
      %v3079 = vrot.slane %v3077, 4
      %v3080 = vrot.slane %v2299, 5
      %v3081 = vsel %vm1631, %v3079, %v3080
      %s3082 = scalar_lea.vmem %s1, 10
      %v3083 = vld [vmem:[%s3082] sm:$0x3]
      %v3084 = vunpack.c.l.b16 %v2973
      %v3085 = vunpack.c.l.b16 %v2976
      %v3086 = vunpack.c.l.b16 %v2980
      %v3087 = vunpack.c.l.b16 %v2983
      %v3088 = vunpack.c.l.b16 %v2987
      %v3089 = vunpack.c.l.b16 %v2990
      %v3090 = vunpack.c.l.b16 %v2994
      %v3091 = vunpack.c.l.b16 %v2997
      %v3092 = vunpack.c.l.b16 %v3001
      %v3093 = vunpack.c.l.b16 %v3004
      %v3094 = vunpack.c.l.b16 %v3008
      %v3095 = vunpack.c.l.b16 %v3011
      %v3096 = vunpack.c.l.b16 %v3015
      %v3097 = vunpack.c.l.b16 %v3018
      %v3098 = vunpack.c.l.b16 %v3022
      %v3099 = vunpack.c.l.b16 %v3025
      %v3100 = vunpack.c.l.b16 %v3029
      %v3101 = vunpack.c.l.b16 %v3032
      %v3102 = vunpack.c.l.b16 %v3036
      %v3103 = vunpack.c.l.b16 %v3039
      %v3104 = vunpack.c.l.b16 %v3043
      %v3105 = vunpack.c.l.b16 %v3046
      %v3106 = vunpack.c.l.b16 %v3050
      %v3107 = vunpack.c.l.b16 %v3053
      %v3108 = vunpack.c.l.b16 %v3057
      %v3109 = vunpack.c.l.b16 %v3060
      %v3110 = vunpack.c.l.b16 %v3064
      %v3111 = vunpack.c.l.b16 %v3067
      %v3112 = vunpack.c.l.b16 %v3071
      %v3113 = vunpack.c.l.b16 %v3074
      %v3114 = vunpack.c.l.b16 %v3078
      %v3115 = vunpack.c.l.b16 %v3081
      %v3116 = vpack.c.b16 %v3085, %v3084
      %v3117 = vpack.c.b16 %v3087, %v3086
      %v3118 = vpack.c.b16 %v3089, %v3088
      %v3119 = vpack.c.b16 %v3091, %v3090
      %v3120 = vpack.c.b16 %v3093, %v3092
      %v3121 = vpack.c.b16 %v3095, %v3094
      %v3122 = vpack.c.b16 %v3097, %v3096
      %v3123 = vpack.c.b16 %v3099, %v3098
      %v3124 = vpack.c.b16 %v3101, %v3100
      %v3125 = vpack.c.b16 %v3103, %v3102
      %v3126 = vpack.c.b16 %v3105, %v3104
      %v3127 = vpack.c.b16 %v3107, %v3106
      %v3128 = vpack.c.b16 %v3109, %v3108
      %v3129 = vpack.c.b16 %v3111, %v3110
      %v3130 = vpack.c.b16 %v3113, %v3112
      %v3131 = vpack.c.b16 %v3115, %v3114
      %v3133 = vsel %vm1219, %v3116, 0
      %v3136 = vsel %vm1219, %v3117, 0
      %v3139 = vsel %vm1219, %v3118, 0
      %v3142 = vsel %vm1219, %v3119, 0
      %v3145 = vsel %vm1219, %v3120, 0
      %v3148 = vsel %vm1219, %v3121, 0
      %v3151 = vsel %vm1219, %v3122, 0
      %v3154 = vsel %vm1219, %v3123, 0
      %v3157 = vsel %vm1219, %v3124, 0
      %v3160 = vsel %vm1219, %v3125, 0
      %v3163 = vsel %vm1219, %v3126, 0
      %v3166 = vsel %vm1219, %v3127, 0
      %v3169 = vsel %vm1219, %v3128, 0
      %v3172 = vsel %vm1219, %v3129, 0
      %v3175 = vsel %vm1219, %v3130, 0
      %v3178 = vsel %vm1219, %v3131, 0
      %v3181 = vsel %vm1268, %v3083, 0
      %3183 = vmatpush.bf16.msra.mxu0 0
      %3184 = vmatpush.bf16.msra.mxu0 0
      %3185 = vmatpush.bf16.msra.mxu0 0
      %3186 = vmatpush.bf16.msra.mxu0 0
      %3187 = vmatpush.bf16.msra.mxu0 0
      %3188 = vmatpush.bf16.msra.mxu0 0
      %3189 = vmatpush.bf16.msra.mxu0 0
      %3190 = vmatpush.bf16.msra.mxu0 %v3181
      %3191 = vmatmul.bf16.gmra.mxu0 %v3133
      %v3192 = vpop.f32.mrf.mxu0
      %v3193 = vadd.f32 0.0, %v3192
      %v3194 = vpop.f32.mrf.mxu0
      %v3195 = vadd.f32 0.0, %v3194
      %3196 = vmatmul.bf16.gmra.mxu0 %v3136
      %v3197 = vpop.f32.mrf.mxu0
      %v3198 = vadd.f32 0.0, %v3197
      %v3199 = vpop.f32.mrf.mxu0
      %v3200 = vadd.f32 0.0, %v3199
      %3201 = vmatmul.bf16.gmra.mxu0 %v3139
      %v3202 = vpop.f32.mrf.mxu0
      %v3203 = vadd.f32 0.0, %v3202
      %v3204 = vpop.f32.mrf.mxu0
      %v3205 = vadd.f32 0.0, %v3204
      %3206 = vmatmul.bf16.gmra.mxu0 %v3142
      %v3207 = vpop.f32.mrf.mxu0
      %v3208 = vadd.f32 0.0, %v3207
      %v3209 = vpop.f32.mrf.mxu0
      %v3210 = vadd.f32 0.0, %v3209
      %3211 = vmatmul.bf16.gmra.mxu0 %v3145
      %v3212 = vpop.f32.mrf.mxu0
      %v3213 = vadd.f32 0.0, %v3212
      %v3214 = vpop.f32.mrf.mxu0
      %v3215 = vadd.f32 0.0, %v3214
      %3216 = vmatmul.bf16.gmra.mxu0 %v3148
      %v3217 = vpop.f32.mrf.mxu0
      %v3218 = vadd.f32 0.0, %v3217
      %v3219 = vpop.f32.mrf.mxu0
      %v3220 = vadd.f32 0.0, %v3219
      %3221 = vmatmul.bf16.gmra.mxu0 %v3151
      %v3222 = vpop.f32.mrf.mxu0
      %v3223 = vadd.f32 0.0, %v3222
      %v3224 = vpop.f32.mrf.mxu0
      %v3225 = vadd.f32 0.0, %v3224
      %3226 = vmatmul.bf16.gmra.mxu0 %v3154
      %v3227 = vpop.f32.mrf.mxu0
      %v3228 = vadd.f32 0.0, %v3227
      %v3229 = vpop.f32.mrf.mxu0
      %v3230 = vadd.f32 0.0, %v3229
      %3231 = vmatmul.bf16.gmra.mxu0 %v3157
      %v3232 = vpop.f32.mrf.mxu0
      %v3233 = vadd.f32 0.0, %v3232
      %v3234 = vpop.f32.mrf.mxu0
      %v3235 = vadd.f32 0.0, %v3234
      %3236 = vmatmul.bf16.gmra.mxu0 %v3160
      %v3237 = vpop.f32.mrf.mxu0
      %v3238 = vadd.f32 0.0, %v3237
      %v3239 = vpop.f32.mrf.mxu0
      %v3240 = vadd.f32 0.0, %v3239
      %3241 = vmatmul.bf16.gmra.mxu0 %v3163
      %v3242 = vpop.f32.mrf.mxu0
      %v3243 = vadd.f32 0.0, %v3242
      %v3244 = vpop.f32.mrf.mxu0
      %v3245 = vadd.f32 0.0, %v3244
      %3246 = vmatmul.bf16.gmra.mxu0 %v3166
      %v3247 = vpop.f32.mrf.mxu0
      %v3248 = vadd.f32 0.0, %v3247
      %v3249 = vpop.f32.mrf.mxu0
      %v3250 = vadd.f32 0.0, %v3249
      %3251 = vmatmul.bf16.gmra.mxu0 %v3169
      %v3252 = vpop.f32.mrf.mxu0
      %v3253 = vadd.f32 0.0, %v3252
      %v3254 = vpop.f32.mrf.mxu0
      %v3255 = vadd.f32 0.0, %v3254
      %3256 = vmatmul.bf16.gmra.mxu0 %v3172
      %v3257 = vpop.f32.mrf.mxu0
      %v3258 = vadd.f32 0.0, %v3257
      %v3259 = vpop.f32.mrf.mxu0
      %v3260 = vadd.f32 0.0, %v3259
      %3261 = vmatmul.bf16.gmra.mxu0 %v3175
      %v3262 = vpop.f32.mrf.mxu0
      %v3263 = vadd.f32 0.0, %v3262
      %v3264 = vpop.f32.mrf.mxu0
      %v3265 = vadd.f32 0.0, %v3264
      %3266 = vmatmul.bf16.gmra.mxu0 %v3178
      %v3267 = vpop.f32.mrf.mxu0
      %v3268 = vadd.f32 0.0, %v3267
      %v3269 = vpop.f32.mrf.mxu0
      %v3270 = vadd.f32 0.0, %v3269
      %3271 = vdwg.mxu0
      %v3272 = vadd.f32 %v2874, %v3193
      %v3273 = vadd.f32 %v2875, %v3195
      %v3274 = vadd.f32 %v2876, %v3198
      %v3275 = vadd.f32 %v2877, %v3200
      %v3276 = vadd.f32 %v2878, %v3203
      %v3277 = vadd.f32 %v2879, %v3205
      %v3278 = vadd.f32 %v2880, %v3208
      %v3279 = vadd.f32 %v2881, %v3210
      %v3280 = vadd.f32 %v2882, %v3213
      %v3281 = vadd.f32 %v2883, %v3215
      %v3282 = vadd.f32 %v2884, %v3218
      %v3283 = vadd.f32 %v2885, %v3220
      %v3284 = vadd.f32 %v2886, %v3223
      %v3285 = vadd.f32 %v2887, %v3225
      %v3286 = vadd.f32 %v2888, %v3228
      %v3287 = vadd.f32 %v2889, %v3230
      %v3288 = vadd.f32 %v2890, %v3233
      %v3289 = vadd.f32 %v2891, %v3235
      %v3290 = vadd.f32 %v2892, %v3238
      %v3291 = vadd.f32 %v2893, %v3240
      %v3292 = vadd.f32 %v2894, %v3243
      %v3293 = vadd.f32 %v2895, %v3245
      %v3294 = vadd.f32 %v2896, %v3248
      %v3295 = vadd.f32 %v2897, %v3250
      %v3296 = vadd.f32 %v2898, %v3253
      %v3297 = vadd.f32 %v2899, %v3255
      %v3298 = vadd.f32 %v2900, %v3258
      %v3299 = vadd.f32 %v2901, %v3260
      %v3300 = vadd.f32 %v2902, %v3263
      %v3301 = vadd.f32 %v2903, %v3265
      %v3302 = vadd.f32 %v2904, %v3268
      %v3303 = vadd.f32 %v2905, %v3270
      %s3304 = scalar_lea.vmem [#allocation2], 24
      %v3305 = vld [vmem:[%s3304] sm:$0xf]
      %v3306 = vld [vmem:[%s3304 + $0x4] sm:$0xf]
      %v3307 = vld [vmem:[%s3304 + $0xc] sm:$0xf]
      %v3308 = vld [vmem:[%s3304 + $0x10] sm:$0xf]
      %v3309 = vld [vmem:[%s3304 + $0x18] sm:$0xf]
      %v3310 = vld [vmem:[%s3304 + $0x1c] sm:$0xf]
      %v3311 = vld [vmem:[%s3304 + $0x24] sm:$0xf]
      %v3312 = vld [vmem:[%s3304 + $0x28] sm:$0xf]
      %v3313 = vld [vmem:[%s3304 + $0x30] sm:$0xf]
      %v3314 = vld [vmem:[%s3304 + $0x34] sm:$0xf]
      %v3315 = vld [vmem:[%s3304 + $0x3c] sm:$0xf]
      %v3316 = vld [vmem:[%s3304 + $0x40] sm:$0xf]
      %v3317 = vld [vmem:[%s3304 + $0x48] sm:$0xf]
      %v3318 = vld [vmem:[%s3304 + $0x4c] sm:$0xf]
      %v3319 = vld [vmem:[%s3304 + $0x54] sm:$0xf]
      %v3320 = vld [vmem:[%s3304 + $0x58] sm:$0xf]
      %v3321 = vld [vmem:[%s3304 + $0x60] sm:$0xf]
      %v3322 = vld [vmem:[%s3304 + $0x64] sm:$0xf]
      %v3323 = vld [vmem:[%s3304 + $0x6c] sm:$0xf]
      %v3324 = vld [vmem:[%s3304 + $0x70] sm:$0xf]
      %v3325 = vld [vmem:[%s3304 + $0x78] sm:$0xf]
      %v3326 = vld [vmem:[%s3304 + $0x7c] sm:$0xf]
      %v3327 = vld [vmem:[%s3304 + $0x84] sm:$0xf]
      %v3328 = vld [vmem:[%s3304 + $0x88] sm:$0xf]
      %v3329 = vld [vmem:[%s3304 + $0x90] sm:$0xf]
      %v3330 = vld [vmem:[%s3304 + $0x94] sm:$0xf]
      %v3331 = vld [vmem:[%s3304 + $0x9c] sm:$0xf]
      %v3332 = vld [vmem:[%s3304 + $0xa0] sm:$0xf]
      %v3333 = vld [vmem:[%s3304 + $0xa8] sm:$0xf]
      %v3334 = vld [vmem:[%s3304 + $0xac] sm:$0xf]
      %v3335 = vld [vmem:[%s3304 + $0xb4] sm:$0xf]
      %v3336 = vld [vmem:[%s3304 + $0xb8] sm:$0xf]
      %s3337 = scalar_lea.vmem %s1, 12
      %v3338 = vld [vmem:[%s3337] sm:$0x3]
      %v3371 = vunpack.c.l.b16 %v3305
      %v3372 = vunpack.c.l.b16 %v3306
      %v3373 = vunpack.c.l.b16 %v3307
      %v3374 = vunpack.c.l.b16 %v3308
      %v3375 = vunpack.c.l.b16 %v3309
      %v3376 = vunpack.c.l.b16 %v3310
      %v3377 = vunpack.c.l.b16 %v3311
      %v3378 = vunpack.c.l.b16 %v3312
      %v3379 = vunpack.c.l.b16 %v3313
      %v3380 = vunpack.c.l.b16 %v3314
      %v3381 = vunpack.c.l.b16 %v3315
      %v3382 = vunpack.c.l.b16 %v3316
      %v3383 = vunpack.c.l.b16 %v3317
      %v3384 = vunpack.c.l.b16 %v3318
      %v3385 = vunpack.c.l.b16 %v3319
      %v3386 = vunpack.c.l.b16 %v3320
      %v3387 = vunpack.c.l.b16 %v3321
      %v3388 = vunpack.c.l.b16 %v3322
      %v3389 = vunpack.c.l.b16 %v3323
      %v3390 = vunpack.c.l.b16 %v3324
      %v3391 = vunpack.c.l.b16 %v3325
      %v3392 = vunpack.c.l.b16 %v3326
      %v3393 = vunpack.c.l.b16 %v3327
      %v3394 = vunpack.c.l.b16 %v3328
      %v3395 = vunpack.c.l.b16 %v3329
      %v3396 = vunpack.c.l.b16 %v3330
      %v3397 = vunpack.c.l.b16 %v3331
      %v3398 = vunpack.c.l.b16 %v3332
      %v3399 = vunpack.c.l.b16 %v3333
      %v3400 = vunpack.c.l.b16 %v3334
      %v3401 = vunpack.c.l.b16 %v3335
      %v3402 = vunpack.c.l.b16 %v3336
      %v3403 = vpack.c.b16 %v3372, %v3371
      %v3404 = vpack.c.b16 %v3374, %v3373
      %v3405 = vpack.c.b16 %v3376, %v3375
      %v3406 = vpack.c.b16 %v3378, %v3377
      %v3407 = vpack.c.b16 %v3380, %v3379
      %v3408 = vpack.c.b16 %v3382, %v3381
      %v3409 = vpack.c.b16 %v3384, %v3383
      %v3410 = vpack.c.b16 %v3386, %v3385
      %v3411 = vpack.c.b16 %v3388, %v3387
      %v3412 = vpack.c.b16 %v3390, %v3389
      %v3413 = vpack.c.b16 %v3392, %v3391
      %v3414 = vpack.c.b16 %v3394, %v3393
      %v3415 = vpack.c.b16 %v3396, %v3395
      %v3416 = vpack.c.b16 %v3398, %v3397
      %v3417 = vpack.c.b16 %v3400, %v3399
      %v3418 = vpack.c.b16 %v3402, %v3401
      %v3420 = vsel %vm1219, %v3403, 0
      %v3423 = vsel %vm1219, %v3404, 0
      %v3426 = vsel %vm1219, %v3405, 0
      %v3429 = vsel %vm1219, %v3406, 0
      %v3432 = vsel %vm1219, %v3407, 0
      %v3435 = vsel %vm1219, %v3408, 0
      %v3438 = vsel %vm1219, %v3409, 0
      %v3441 = vsel %vm1219, %v3410, 0
      %v3444 = vsel %vm1219, %v3411, 0
      %v3447 = vsel %vm1219, %v3412, 0
      %v3450 = vsel %vm1219, %v3413, 0
      %v3453 = vsel %vm1219, %v3414, 0
      %v3456 = vsel %vm1219, %v3415, 0
      %v3459 = vsel %vm1219, %v3416, 0
      %v3462 = vsel %vm1219, %v3417, 0
      %v3465 = vsel %vm1219, %v3418, 0
      %v3468 = vsel %vm1268, %v3338, 0
      %3470 = vmatpush.bf16.msra.mxu0 0
      %3471 = vmatpush.bf16.msra.mxu0 0
      %3472 = vmatpush.bf16.msra.mxu0 0
      %3473 = vmatpush.bf16.msra.mxu0 0
      %3474 = vmatpush.bf16.msra.mxu0 0
      %3475 = vmatpush.bf16.msra.mxu0 0
      %3476 = vmatpush.bf16.msra.mxu0 0
      %3477 = vmatpush.bf16.msra.mxu0 %v3468
      %3478 = vmatmul.bf16.gmra.mxu0 %v3420
      %v3479 = vpop.f32.mrf.mxu0
      %v3480 = vadd.f32 0.0, %v3479
      %v3481 = vpop.f32.mrf.mxu0
      %v3482 = vadd.f32 0.0, %v3481
      %3483 = vmatmul.bf16.gmra.mxu0 %v3423
      %v3484 = vpop.f32.mrf.mxu0
      %v3485 = vadd.f32 0.0, %v3484
      %v3486 = vpop.f32.mrf.mxu0
      %v3487 = vadd.f32 0.0, %v3486
      %3488 = vmatmul.bf16.gmra.mxu0 %v3426
      %v3489 = vpop.f32.mrf.mxu0
      %v3490 = vadd.f32 0.0, %v3489
      %v3491 = vpop.f32.mrf.mxu0
      %v3492 = vadd.f32 0.0, %v3491
      %3493 = vmatmul.bf16.gmra.mxu0 %v3429
      %v3494 = vpop.f32.mrf.mxu0
      %v3495 = vadd.f32 0.0, %v3494
      %v3496 = vpop.f32.mrf.mxu0
      %v3497 = vadd.f32 0.0, %v3496
      %3498 = vmatmul.bf16.gmra.mxu0 %v3432
      %v3499 = vpop.f32.mrf.mxu0
      %v3500 = vadd.f32 0.0, %v3499
      %v3501 = vpop.f32.mrf.mxu0
      %v3502 = vadd.f32 0.0, %v3501
      %3503 = vmatmul.bf16.gmra.mxu0 %v3435
      %v3504 = vpop.f32.mrf.mxu0
      %v3505 = vadd.f32 0.0, %v3504
      %v3506 = vpop.f32.mrf.mxu0
      %v3507 = vadd.f32 0.0, %v3506
      %3508 = vmatmul.bf16.gmra.mxu0 %v3438
      %v3509 = vpop.f32.mrf.mxu0
      %v3510 = vadd.f32 0.0, %v3509
      %v3511 = vpop.f32.mrf.mxu0
      %v3512 = vadd.f32 0.0, %v3511
      %3513 = vmatmul.bf16.gmra.mxu0 %v3441
      %v3514 = vpop.f32.mrf.mxu0
      %v3515 = vadd.f32 0.0, %v3514
      %v3516 = vpop.f32.mrf.mxu0
      %v3517 = vadd.f32 0.0, %v3516
      %3518 = vmatmul.bf16.gmra.mxu0 %v3444
      %v3519 = vpop.f32.mrf.mxu0
      %v3520 = vadd.f32 0.0, %v3519
      %v3521 = vpop.f32.mrf.mxu0
      %v3522 = vadd.f32 0.0, %v3521
      %3523 = vmatmul.bf16.gmra.mxu0 %v3447
      %v3524 = vpop.f32.mrf.mxu0
      %v3525 = vadd.f32 0.0, %v3524
      %v3526 = vpop.f32.mrf.mxu0
      %v3527 = vadd.f32 0.0, %v3526
      %3528 = vmatmul.bf16.gmra.mxu0 %v3450
      %v3529 = vpop.f32.mrf.mxu0
      %v3530 = vadd.f32 0.0, %v3529
      %v3531 = vpop.f32.mrf.mxu0
      %v3532 = vadd.f32 0.0, %v3531
      %3533 = vmatmul.bf16.gmra.mxu0 %v3453
      %v3534 = vpop.f32.mrf.mxu0
      %v3535 = vadd.f32 0.0, %v3534
      %v3536 = vpop.f32.mrf.mxu0
      %v3537 = vadd.f32 0.0, %v3536
      %3538 = vmatmul.bf16.gmra.mxu0 %v3456
      %v3539 = vpop.f32.mrf.mxu0
      %v3540 = vadd.f32 0.0, %v3539
      %v3541 = vpop.f32.mrf.mxu0
      %v3542 = vadd.f32 0.0, %v3541
      %3543 = vmatmul.bf16.gmra.mxu0 %v3459
      %v3544 = vpop.f32.mrf.mxu0
      %v3545 = vadd.f32 0.0, %v3544
      %v3546 = vpop.f32.mrf.mxu0
      %v3547 = vadd.f32 0.0, %v3546
      %3548 = vmatmul.bf16.gmra.mxu0 %v3462
      %v3549 = vpop.f32.mrf.mxu0
      %v3550 = vadd.f32 0.0, %v3549
      %v3551 = vpop.f32.mrf.mxu0
      %v3552 = vadd.f32 0.0, %v3551
      %3553 = vmatmul.bf16.gmra.mxu0 %v3465
      %v3554 = vpop.f32.mrf.mxu0
      %v3555 = vadd.f32 0.0, %v3554
      %v3556 = vpop.f32.mrf.mxu0
      %v3557 = vadd.f32 0.0, %v3556
      %3558 = vdwg.mxu0
      %v3559 = vadd.f32 %v3272, %v3480
      %v3560 = vadd.f32 %v3273, %v3482
      %v3561 = vadd.f32 %v3274, %v3485
      %v3562 = vadd.f32 %v3275, %v3487
      %v3563 = vadd.f32 %v3276, %v3490
      %v3564 = vadd.f32 %v3277, %v3492
      %v3565 = vadd.f32 %v3278, %v3495
      %v3566 = vadd.f32 %v3279, %v3497
      %v3567 = vadd.f32 %v3280, %v3500
      %v3568 = vadd.f32 %v3281, %v3502
      %v3569 = vadd.f32 %v3282, %v3505
      %v3570 = vadd.f32 %v3283, %v3507
      %v3571 = vadd.f32 %v3284, %v3510
      %v3572 = vadd.f32 %v3285, %v3512
      %v3573 = vadd.f32 %v3286, %v3515
      %v3574 = vadd.f32 %v3287, %v3517
      %v3575 = vadd.f32 %v3288, %v3520
      %v3576 = vadd.f32 %v3289, %v3522
      %v3577 = vadd.f32 %v3290, %v3525
      %v3578 = vadd.f32 %v3291, %v3527
      %v3579 = vadd.f32 %v3292, %v3530
      %v3580 = vadd.f32 %v3293, %v3532
      %v3581 = vadd.f32 %v3294, %v3535
      %v3582 = vadd.f32 %v3295, %v3537
      %v3583 = vadd.f32 %v3296, %v3540
      %v3584 = vadd.f32 %v3297, %v3542
      %v3585 = vadd.f32 %v3298, %v3545
      %v3586 = vadd.f32 %v3299, %v3547
      %v3587 = vadd.f32 %v3300, %v3550
      %v3588 = vadd.f32 %v3301, %v3552
      %v3589 = vadd.f32 %v3302, %v3555
      %v3590 = vadd.f32 %v3303, %v3557
      %v3591 = vld [vmem:[%s3304] sm:$0xf]
      %v3592 = vld [vmem:[%s3304 + $0x4] sm:$0xf]
      %v3593 = vld [vmem:[%s3304 + $0x8] sm:$0x1]
      %v3594 = vld [vmem:[%s3304 + $0xc] sm:$0xf]
      %v3595 = vld [vmem:[%s3304 + $0x10] sm:$0xf]
      %v3596 = vld [vmem:[%s3304 + $0x14] sm:$0x1]
      %v3597 = vld [vmem:[%s3304 + $0x18] sm:$0xf]
      %v3598 = vld [vmem:[%s3304 + $0x1c] sm:$0xf]
      %v3599 = vld [vmem:[%s3304 + $0x20] sm:$0x1]
      %v3600 = vld [vmem:[%s3304 + $0x24] sm:$0xf]
      %v3601 = vld [vmem:[%s3304 + $0x28] sm:$0xf]
      %v3602 = vld [vmem:[%s3304 + $0x2c] sm:$0x1]
      %v3603 = vld [vmem:[%s3304 + $0x30] sm:$0xf]
      %v3604 = vld [vmem:[%s3304 + $0x34] sm:$0xf]
      %v3605 = vld [vmem:[%s3304 + $0x38] sm:$0x1]
      %v3606 = vld [vmem:[%s3304 + $0x3c] sm:$0xf]
      %v3607 = vld [vmem:[%s3304 + $0x40] sm:$0xf]
      %v3608 = vld [vmem:[%s3304 + $0x44] sm:$0x1]
      %v3609 = vld [vmem:[%s3304 + $0x48] sm:$0xf]
      %v3610 = vld [vmem:[%s3304 + $0x4c] sm:$0xf]
      %v3611 = vld [vmem:[%s3304 + $0x50] sm:$0x1]
      %v3612 = vld [vmem:[%s3304 + $0x54] sm:$0xf]
      %v3613 = vld [vmem:[%s3304 + $0x58] sm:$0xf]
      %v3614 = vld [vmem:[%s3304 + $0x5c] sm:$0x1]
      %v3615 = vld [vmem:[%s3304 + $0x60] sm:$0xf]
      %v3616 = vld [vmem:[%s3304 + $0x64] sm:$0xf]
      %v3617 = vld [vmem:[%s3304 + $0x68] sm:$0x1]
      %v3618 = vld [vmem:[%s3304 + $0x6c] sm:$0xf]
      %v3619 = vld [vmem:[%s3304 + $0x70] sm:$0xf]
      %v3620 = vld [vmem:[%s3304 + $0x74] sm:$0x1]
      %v3621 = vld [vmem:[%s3304 + $0x78] sm:$0xf]
      %v3622 = vld [vmem:[%s3304 + $0x7c] sm:$0xf]
      %v3623 = vld [vmem:[%s3304 + $0x80] sm:$0x1]
      %v3624 = vld [vmem:[%s3304 + $0x84] sm:$0xf]
      %v3625 = vld [vmem:[%s3304 + $0x88] sm:$0xf]
      %v3626 = vld [vmem:[%s3304 + $0x8c] sm:$0x1]
      %v3627 = vld [vmem:[%s3304 + $0x90] sm:$0xf]
      %v3628 = vld [vmem:[%s3304 + $0x94] sm:$0xf]
      %v3629 = vld [vmem:[%s3304 + $0x98] sm:$0x1]
      %v3630 = vld [vmem:[%s3304 + $0x9c] sm:$0xf]
      %v3631 = vld [vmem:[%s3304 + $0xa0] sm:$0xf]
      %v3632 = vld [vmem:[%s3304 + $0xa4] sm:$0x1]
      %v3633 = vld [vmem:[%s3304 + $0xa8] sm:$0xf]
      %v3634 = vld [vmem:[%s3304 + $0xac] sm:$0xf]
      %v3635 = vld [vmem:[%s3304 + $0xb0] sm:$0x1]
      %v3636 = vld [vmem:[%s3304 + $0xb4] sm:$0xf]
      %v3637 = vld [vmem:[%s3304 + $0xb8] sm:$0xf]
      %v3638 = vld [vmem:[%s3304 + $0xbc] sm:$0x1]
      %v3640 = vshrl.u32 %v3591, 16
      %v3642 = vrot.slane %v3640, 4
      %v3643 = vshll.u32 %v3591, 16
      %v3645 = vrot.slane %v3643, 5
      %v3646 = vor.u32 %v3642, %v3645
      %v3647 = vrot.slane %v3646, 4
      %v3649 = vshll.u32 %v3592, 16
      %v3651 = vrot.slane %v3649, 5
      %v3652 = vsel %vm784, %v3647, %v3651
      %v3653 = vshrl.u32 %v3592, 16
      %v3655 = vrot.slane %v3653, 4
      %v3656 = vor.u32 %v3655, %v3651
      %v3657 = vrot.slane %v3656, 4
      %v3659 = vshll.u32 %v3593, 16
      %v3661 = vrot.slane %v3659, 5
      %v3662 = vsel %vm784, %v3657, %v3661
      %v3664 = vshrl.u32 %v3594, 16
      %v3666 = vrot.slane %v3664, 4
      %v3667 = vshll.u32 %v3594, 16
      %v3669 = vrot.slane %v3667, 5
      %v3670 = vor.u32 %v3666, %v3669
      %v3671 = vrot.slane %v3670, 4
      %v3673 = vshll.u32 %v3595, 16
      %v3675 = vrot.slane %v3673, 5
      %v3676 = vsel %vm784, %v3671, %v3675
      %v3677 = vshrl.u32 %v3595, 16
      %v3679 = vrot.slane %v3677, 4
      %v3680 = vor.u32 %v3679, %v3675
      %v3681 = vrot.slane %v3680, 4
      %v3683 = vshll.u32 %v3596, 16
      %v3685 = vrot.slane %v3683, 5
      %v3686 = vsel %vm784, %v3681, %v3685
      %v3688 = vshrl.u32 %v3597, 16
      %v3690 = vrot.slane %v3688, 4
      %v3691 = vshll.u32 %v3597, 16
      %v3693 = vrot.slane %v3691, 5
      %v3694 = vor.u32 %v3690, %v3693
      %v3695 = vrot.slane %v3694, 4
      %v3697 = vshll.u32 %v3598, 16
      %v3699 = vrot.slane %v3697, 5
      %v3700 = vsel %vm784, %v3695, %v3699
      %v3701 = vshrl.u32 %v3598, 16
      %v3703 = vrot.slane %v3701, 4
      %v3704 = vor.u32 %v3703, %v3699
      %v3705 = vrot.slane %v3704, 4
      %v3707 = vshll.u32 %v3599, 16
      %v3709 = vrot.slane %v3707, 5
      %v3710 = vsel %vm784, %v3705, %v3709
      %v3712 = vshrl.u32 %v3600, 16
      %v3714 = vrot.slane %v3712, 4
      %v3715 = vshll.u32 %v3600, 16
      %v3717 = vrot.slane %v3715, 5
      %v3718 = vor.u32 %v3714, %v3717
      %v3719 = vrot.slane %v3718, 4
      %v3721 = vshll.u32 %v3601, 16
      %v3723 = vrot.slane %v3721, 5
      %v3724 = vsel %vm784, %v3719, %v3723
      %v3725 = vshrl.u32 %v3601, 16
      %v3727 = vrot.slane %v3725, 4
      %v3728 = vor.u32 %v3727, %v3723
      %v3729 = vrot.slane %v3728, 4
      %v3731 = vshll.u32 %v3602, 16
      %v3733 = vrot.slane %v3731, 5
      %v3734 = vsel %vm784, %v3729, %v3733
      %v3736 = vshrl.u32 %v3603, 16
      %v3738 = vrot.slane %v3736, 4
      %v3739 = vshll.u32 %v3603, 16
      %v3741 = vrot.slane %v3739, 5
      %v3742 = vor.u32 %v3738, %v3741
      %v3743 = vrot.slane %v3742, 4
      %v3745 = vshll.u32 %v3604, 16
      %v3747 = vrot.slane %v3745, 5
      %v3748 = vsel %vm784, %v3743, %v3747
      %v3749 = vshrl.u32 %v3604, 16
      %v3751 = vrot.slane %v3749, 4
      %v3752 = vor.u32 %v3751, %v3747
      %v3753 = vrot.slane %v3752, 4
      %v3755 = vshll.u32 %v3605, 16
      %v3757 = vrot.slane %v3755, 5
      %v3758 = vsel %vm784, %v3753, %v3757
      %v3760 = vshrl.u32 %v3606, 16
      %v3762 = vrot.slane %v3760, 4
      %v3763 = vshll.u32 %v3606, 16
      %v3765 = vrot.slane %v3763, 5
      %v3766 = vor.u32 %v3762, %v3765
      %v3767 = vrot.slane %v3766, 4
      %v3769 = vshll.u32 %v3607, 16
      %v3771 = vrot.slane %v3769, 5
      %v3772 = vsel %vm784, %v3767, %v3771
      %v3773 = vshrl.u32 %v3607, 16
      %v3775 = vrot.slane %v3773, 4
      %v3776 = vor.u32 %v3775, %v3771
      %v3777 = vrot.slane %v3776, 4
      %v3779 = vshll.u32 %v3608, 16
      %v3781 = vrot.slane %v3779, 5
      %v3782 = vsel %vm784, %v3777, %v3781
      %v3784 = vshrl.u32 %v3609, 16
      %v3786 = vrot.slane %v3784, 4
      %v3787 = vshll.u32 %v3609, 16
      %v3789 = vrot.slane %v3787, 5
      %v3790 = vor.u32 %v3786, %v3789
      %v3791 = vrot.slane %v3790, 4
      %v3793 = vshll.u32 %v3610, 16
      %v3795 = vrot.slane %v3793, 5
      %v3796 = vsel %vm784, %v3791, %v3795
      %v3797 = vshrl.u32 %v3610, 16
      %v3799 = vrot.slane %v3797, 4
      %v3800 = vor.u32 %v3799, %v3795
      %v3801 = vrot.slane %v3800, 4
      %v3803 = vshll.u32 %v3611, 16
      %v3805 = vrot.slane %v3803, 5
      %v3806 = vsel %vm784, %v3801, %v3805
      %v3808 = vshrl.u32 %v3612, 16
      %v3810 = vrot.slane %v3808, 4
      %v3811 = vshll.u32 %v3612, 16
      %v3813 = vrot.slane %v3811, 5
      %v3814 = vor.u32 %v3810, %v3813
      %v3815 = vrot.slane %v3814, 4
      %v3817 = vshll.u32 %v3613, 16
      %v3819 = vrot.slane %v3817, 5
      %v3820 = vsel %vm784, %v3815, %v3819
      %v3821 = vshrl.u32 %v3613, 16
      %v3823 = vrot.slane %v3821, 4
      %v3824 = vor.u32 %v3823, %v3819
      %v3825 = vrot.slane %v3824, 4
      %v3827 = vshll.u32 %v3614, 16
      %v3829 = vrot.slane %v3827, 5
      %v3830 = vsel %vm784, %v3825, %v3829
      %v3832 = vshrl.u32 %v3615, 16
      %v3834 = vrot.slane %v3832, 4
      %v3835 = vshll.u32 %v3615, 16
      %v3837 = vrot.slane %v3835, 5
      %v3838 = vor.u32 %v3834, %v3837
      %v3839 = vrot.slane %v3838, 4
      %v3841 = vshll.u32 %v3616, 16
      %v3843 = vrot.slane %v3841, 5
      %v3844 = vsel %vm784, %v3839, %v3843
      %v3845 = vshrl.u32 %v3616, 16
      %v3847 = vrot.slane %v3845, 4
      %v3848 = vor.u32 %v3847, %v3843
      %v3849 = vrot.slane %v3848, 4
      %v3851 = vshll.u32 %v3617, 16
      %v3853 = vrot.slane %v3851, 5
      %v3854 = vsel %vm784, %v3849, %v3853
      %v3856 = vshrl.u32 %v3618, 16
      %v3858 = vrot.slane %v3856, 4
      %v3859 = vshll.u32 %v3618, 16
      %v3861 = vrot.slane %v3859, 5
      %v3862 = vor.u32 %v3858, %v3861
      %v3863 = vrot.slane %v3862, 4
      %v3865 = vshll.u32 %v3619, 16
      %v3867 = vrot.slane %v3865, 5
      %v3868 = vsel %vm784, %v3863, %v3867
      %v3869 = vshrl.u32 %v3619, 16
      %v3871 = vrot.slane %v3869, 4
      %v3872 = vor.u32 %v3871, %v3867
      %v3873 = vrot.slane %v3872, 4
      %v3875 = vshll.u32 %v3620, 16
      %v3877 = vrot.slane %v3875, 5
      %v3878 = vsel %vm784, %v3873, %v3877
      %v3880 = vshrl.u32 %v3621, 16
      %v3882 = vrot.slane %v3880, 4
      %v3883 = vshll.u32 %v3621, 16
      %v3885 = vrot.slane %v3883, 5
      %v3886 = vor.u32 %v3882, %v3885
      %v3887 = vrot.slane %v3886, 4
      %v3889 = vshll.u32 %v3622, 16
      %v3891 = vrot.slane %v3889, 5
      %v3892 = vsel %vm784, %v3887, %v3891
      %v3893 = vshrl.u32 %v3622, 16
      %v3895 = vrot.slane %v3893, 4
      %v3896 = vor.u32 %v3895, %v3891
      %v3897 = vrot.slane %v3896, 4
      %v3899 = vshll.u32 %v3623, 16
      %v3901 = vrot.slane %v3899, 5
      %v3902 = vsel %vm784, %v3897, %v3901
      %v3904 = vshrl.u32 %v3624, 16
      %v3906 = vrot.slane %v3904, 4
      %v3907 = vshll.u32 %v3624, 16
      %v3909 = vrot.slane %v3907, 5
      %v3910 = vor.u32 %v3906, %v3909
      %v3911 = vrot.slane %v3910, 4
      %v3913 = vshll.u32 %v3625, 16
      %v3915 = vrot.slane %v3913, 5
      %v3916 = vsel %vm784, %v3911, %v3915
      %v3917 = vshrl.u32 %v3625, 16
      %v3919 = vrot.slane %v3917, 4
      %v3920 = vor.u32 %v3919, %v3915
      %v3921 = vrot.slane %v3920, 4
      %v3923 = vshll.u32 %v3626, 16
      %v3925 = vrot.slane %v3923, 5
      %v3926 = vsel %vm784, %v3921, %v3925
      %v3928 = vshrl.u32 %v3627, 16
      %v3930 = vrot.slane %v3928, 4
      %v3931 = vshll.u32 %v3627, 16
      %v3933 = vrot.slane %v3931, 5
      %v3934 = vor.u32 %v3930, %v3933
      %v3935 = vrot.slane %v3934, 4
      %v3937 = vshll.u32 %v3628, 16
      %v3939 = vrot.slane %v3937, 5
      %v3940 = vsel %vm784, %v3935, %v3939
      %v3941 = vshrl.u32 %v3628, 16
      %v3943 = vrot.slane %v3941, 4
      %v3944 = vor.u32 %v3943, %v3939
      %v3945 = vrot.slane %v3944, 4
      %v3947 = vshll.u32 %v3629, 16
      %v3949 = vrot.slane %v3947, 5
      %v3950 = vsel %vm784, %v3945, %v3949
      %v3952 = vshrl.u32 %v3630, 16
      %v3954 = vrot.slane %v3952, 4
      %v3955 = vshll.u32 %v3630, 16
      %v3957 = vrot.slane %v3955, 5
      %v3958 = vor.u32 %v3954, %v3957
      %v3959 = vrot.slane %v3958, 4
      %v3961 = vshll.u32 %v3631, 16
      %v3963 = vrot.slane %v3961, 5
      %v3964 = vsel %vm784, %v3959, %v3963
      %v3965 = vshrl.u32 %v3631, 16
      %v3967 = vrot.slane %v3965, 4
      %v3968 = vor.u32 %v3967, %v3963
      %v3969 = vrot.slane %v3968, 4
      %v3971 = vshll.u32 %v3632, 16
      %v3973 = vrot.slane %v3971, 5
      %v3974 = vsel %vm784, %v3969, %v3973
      %v3976 = vshrl.u32 %v3633, 16
      %v3978 = vrot.slane %v3976, 4
      %v3979 = vshll.u32 %v3633, 16
      %v3981 = vrot.slane %v3979, 5
      %v3982 = vor.u32 %v3978, %v3981
      %v3983 = vrot.slane %v3982, 4
      %v3985 = vshll.u32 %v3634, 16
      %v3987 = vrot.slane %v3985, 5
      %v3988 = vsel %vm784, %v3983, %v3987
      %v3989 = vshrl.u32 %v3634, 16
      %v3991 = vrot.slane %v3989, 4
      %v3992 = vor.u32 %v3991, %v3987
      %v3993 = vrot.slane %v3992, 4
      %v3995 = vshll.u32 %v3635, 16
      %v3997 = vrot.slane %v3995, 5
      %v3998 = vsel %vm784, %v3993, %v3997
      %v4000 = vshrl.u32 %v3636, 16
      %v4002 = vrot.slane %v4000, 4
      %v4003 = vshll.u32 %v3636, 16
      %v4005 = vrot.slane %v4003, 5
      %v4006 = vor.u32 %v4002, %v4005
      %v4007 = vrot.slane %v4006, 4
      %v4009 = vshll.u32 %v3637, 16
      %v4011 = vrot.slane %v4009, 5
      %v4012 = vsel %vm784, %v4007, %v4011
      %v4013 = vshrl.u32 %v3637, 16
      %v4015 = vrot.slane %v4013, 4
      %v4016 = vor.u32 %v4015, %v4011
      %v4017 = vrot.slane %v4016, 4
      %v4019 = vshll.u32 %v3638, 16
      %v4021 = vrot.slane %v4019, 5
      %v4022 = vsel %vm784, %v4017, %v4021
      %s4023 = scalar_lea.vmem %s1, 14
      %v4024 = vld [vmem:[%s4023] sm:$0x3]
      %v4025 = vunpack.c.l.b16 %v3652
      %v4026 = vunpack.c.l.b16 %v3662
      %v4027 = vunpack.c.l.b16 %v3676
      %v4028 = vunpack.c.l.b16 %v3686
      %v4029 = vunpack.c.l.b16 %v3700
      %v4030 = vunpack.c.l.b16 %v3710
      %v4031 = vunpack.c.l.b16 %v3724
      %v4032 = vunpack.c.l.b16 %v3734
      %v4033 = vunpack.c.l.b16 %v3748
      %v4034 = vunpack.c.l.b16 %v3758
      %v4035 = vunpack.c.l.b16 %v3772
      %v4036 = vunpack.c.l.b16 %v3782
      %v4037 = vunpack.c.l.b16 %v3796
      %v4038 = vunpack.c.l.b16 %v3806
      %v4039 = vunpack.c.l.b16 %v3820
      %v4040 = vunpack.c.l.b16 %v3830
      %v4041 = vunpack.c.l.b16 %v3844
      %v4042 = vunpack.c.l.b16 %v3854
      %v4043 = vunpack.c.l.b16 %v3868
      %v4044 = vunpack.c.l.b16 %v3878
      %v4045 = vunpack.c.l.b16 %v3892
      %v4046 = vunpack.c.l.b16 %v3902
      %v4047 = vunpack.c.l.b16 %v3916
      %v4048 = vunpack.c.l.b16 %v3926
      %v4049 = vunpack.c.l.b16 %v3940
      %v4050 = vunpack.c.l.b16 %v3950
      %v4051 = vunpack.c.l.b16 %v3964
      %v4052 = vunpack.c.l.b16 %v3974
      %v4053 = vunpack.c.l.b16 %v3988
      %v4054 = vunpack.c.l.b16 %v3998
      %v4055 = vunpack.c.l.b16 %v4012
      %v4056 = vunpack.c.l.b16 %v4022
      %v4057 = vpack.c.b16 %v4026, %v4025
      %v4058 = vpack.c.b16 %v4028, %v4027
      %v4059 = vpack.c.b16 %v4030, %v4029
      %v4060 = vpack.c.b16 %v4032, %v4031
      %v4061 = vpack.c.b16 %v4034, %v4033
      %v4062 = vpack.c.b16 %v4036, %v4035
      %v4063 = vpack.c.b16 %v4038, %v4037
      %v4064 = vpack.c.b16 %v4040, %v4039
      %v4065 = vpack.c.b16 %v4042, %v4041
      %v4066 = vpack.c.b16 %v4044, %v4043
      %v4067 = vpack.c.b16 %v4046, %v4045
      %v4068 = vpack.c.b16 %v4048, %v4047
      %v4069 = vpack.c.b16 %v4050, %v4049
      %v4070 = vpack.c.b16 %v4052, %v4051
      %v4071 = vpack.c.b16 %v4054, %v4053
      %v4072 = vpack.c.b16 %v4056, %v4055
      %v4074 = vsel %vm1219, %v4057, 0
      %v4077 = vsel %vm1219, %v4058, 0
      %v4080 = vsel %vm1219, %v4059, 0
      %v4083 = vsel %vm1219, %v4060, 0
      %v4086 = vsel %vm1219, %v4061, 0
      %v4089 = vsel %vm1219, %v4062, 0
      %v4092 = vsel %vm1219, %v4063, 0
      %v4095 = vsel %vm1219, %v4064, 0
      %v4098 = vsel %vm1219, %v4065, 0
      %v4101 = vsel %vm1219, %v4066, 0
      %v4104 = vsel %vm1219, %v4067, 0
      %v4107 = vsel %vm1219, %v4068, 0
      %v4110 = vsel %vm1219, %v4069, 0
      %v4113 = vsel %vm1219, %v4070, 0
      %v4116 = vsel %vm1219, %v4071, 0
      %v4119 = vsel %vm1219, %v4072, 0
      %v4122 = vsel %vm1268, %v4024, 0
      %4124 = vmatpush.bf16.msra.mxu0 0
      %4125 = vmatpush.bf16.msra.mxu0 0
      %4126 = vmatpush.bf16.msra.mxu0 0
      %4127 = vmatpush.bf16.msra.mxu0 0
      %4128 = vmatpush.bf16.msra.mxu0 0
      %4129 = vmatpush.bf16.msra.mxu0 0
      %4130 = vmatpush.bf16.msra.mxu0 0
      %4131 = vmatpush.bf16.msra.mxu0 %v4122
      %4132 = vmatmul.bf16.gmra.mxu0 %v4074
      %v4133 = vpop.f32.mrf.mxu0
      %v4134 = vadd.f32 0.0, %v4133
      %v4135 = vpop.f32.mrf.mxu0
      %v4136 = vadd.f32 0.0, %v4135
      %4137 = vmatmul.bf16.gmra.mxu0 %v4077
      %v4138 = vpop.f32.mrf.mxu0
      %v4139 = vadd.f32 0.0, %v4138
      %v4140 = vpop.f32.mrf.mxu0
      %v4141 = vadd.f32 0.0, %v4140
      %4142 = vmatmul.bf16.gmra.mxu0 %v4080
      %v4143 = vpop.f32.mrf.mxu0
      %v4144 = vadd.f32 0.0, %v4143
      %v4145 = vpop.f32.mrf.mxu0
      %v4146 = vadd.f32 0.0, %v4145
      %4147 = vmatmul.bf16.gmra.mxu0 %v4083
      %v4148 = vpop.f32.mrf.mxu0
      %v4149 = vadd.f32 0.0, %v4148
      %v4150 = vpop.f32.mrf.mxu0
      %v4151 = vadd.f32 0.0, %v4150
      %4152 = vmatmul.bf16.gmra.mxu0 %v4086
      %v4153 = vpop.f32.mrf.mxu0
      %v4154 = vadd.f32 0.0, %v4153
      %v4155 = vpop.f32.mrf.mxu0
      %v4156 = vadd.f32 0.0, %v4155
      %4157 = vmatmul.bf16.gmra.mxu0 %v4089
      %v4158 = vpop.f32.mrf.mxu0
      %v4159 = vadd.f32 0.0, %v4158
      %v4160 = vpop.f32.mrf.mxu0
      %v4161 = vadd.f32 0.0, %v4160
      %4162 = vmatmul.bf16.gmra.mxu0 %v4092
      %v4163 = vpop.f32.mrf.mxu0
      %v4164 = vadd.f32 0.0, %v4163
      %v4165 = vpop.f32.mrf.mxu0
      %v4166 = vadd.f32 0.0, %v4165
      %4167 = vmatmul.bf16.gmra.mxu0 %v4095
      %v4168 = vpop.f32.mrf.mxu0
      %v4169 = vadd.f32 0.0, %v4168
      %v4170 = vpop.f32.mrf.mxu0
      %v4171 = vadd.f32 0.0, %v4170
      %4172 = vmatmul.bf16.gmra.mxu0 %v4098
      %v4173 = vpop.f32.mrf.mxu0
      %v4174 = vadd.f32 0.0, %v4173
      %v4175 = vpop.f32.mrf.mxu0
      %v4176 = vadd.f32 0.0, %v4175
      %4177 = vmatmul.bf16.gmra.mxu0 %v4101
      %v4178 = vpop.f32.mrf.mxu0
      %v4179 = vadd.f32 0.0, %v4178
      %v4180 = vpop.f32.mrf.mxu0
      %v4181 = vadd.f32 0.0, %v4180
      %4182 = vmatmul.bf16.gmra.mxu0 %v4104
      %v4183 = vpop.f32.mrf.mxu0
      %v4184 = vadd.f32 0.0, %v4183
      %v4185 = vpop.f32.mrf.mxu0
      %v4186 = vadd.f32 0.0, %v4185
      %4187 = vmatmul.bf16.gmra.mxu0 %v4107
      %v4188 = vpop.f32.mrf.mxu0
      %v4189 = vadd.f32 0.0, %v4188
      %v4190 = vpop.f32.mrf.mxu0
      %v4191 = vadd.f32 0.0, %v4190
      %4192 = vmatmul.bf16.gmra.mxu0 %v4110
      %v4193 = vpop.f32.mrf.mxu0
      %v4194 = vadd.f32 0.0, %v4193
      %v4195 = vpop.f32.mrf.mxu0
      %v4196 = vadd.f32 0.0, %v4195
      %4197 = vmatmul.bf16.gmra.mxu0 %v4113
      %v4198 = vpop.f32.mrf.mxu0
      %v4199 = vadd.f32 0.0, %v4198
      %v4200 = vpop.f32.mrf.mxu0
      %v4201 = vadd.f32 0.0, %v4200
      %4202 = vmatmul.bf16.gmra.mxu0 %v4116
      %v4203 = vpop.f32.mrf.mxu0
      %v4204 = vadd.f32 0.0, %v4203
      %v4205 = vpop.f32.mrf.mxu0
      %v4206 = vadd.f32 0.0, %v4205
      %4207 = vmatmul.bf16.gmra.mxu0 %v4119
      %v4208 = vpop.f32.mrf.mxu0
      %v4209 = vadd.f32 0.0, %v4208
      %v4210 = vpop.f32.mrf.mxu0
      %v4211 = vadd.f32 0.0, %v4210
      %4212 = vdwg.mxu0
      %v4213 = vadd.f32 %v3559, %v4134
      %v4214 = vadd.f32 %v3560, %v4136
      %v4215 = vadd.f32 %v3561, %v4139
      %v4216 = vadd.f32 %v3562, %v4141
      %v4217 = vadd.f32 %v3563, %v4144
      %v4218 = vadd.f32 %v3564, %v4146
      %v4219 = vadd.f32 %v3565, %v4149
      %v4220 = vadd.f32 %v3566, %v4151
      %v4221 = vadd.f32 %v3567, %v4154
      %v4222 = vadd.f32 %v3568, %v4156
      %v4223 = vadd.f32 %v3569, %v4159
      %v4224 = vadd.f32 %v3570, %v4161
      %v4225 = vadd.f32 %v3571, %v4164
      %v4226 = vadd.f32 %v3572, %v4166
      %v4227 = vadd.f32 %v3573, %v4169
      %v4228 = vadd.f32 %v3574, %v4171
      %v4229 = vadd.f32 %v3575, %v4174
      %v4230 = vadd.f32 %v3576, %v4176
      %v4231 = vadd.f32 %v3577, %v4179
      %v4232 = vadd.f32 %v3578, %v4181
      %v4233 = vadd.f32 %v3579, %v4184
      %v4234 = vadd.f32 %v3580, %v4186
      %v4235 = vadd.f32 %v3581, %v4189
      %v4236 = vadd.f32 %v3582, %v4191
      %v4237 = vadd.f32 %v3583, %v4194
      %v4238 = vadd.f32 %v3584, %v4196
      %v4239 = vadd.f32 %v3585, %v4199
      %v4240 = vadd.f32 %v3586, %v4201
      %v4241 = vadd.f32 %v3587, %v4204
      %v4242 = vadd.f32 %v3588, %v4206
      %v4243 = vadd.f32 %v3589, %v4209
      %v4244 = vadd.f32 %v3590, %v4211
      %v4245 = vld [vmem:[%s3304] sm:$0xe]
      %v4246 = vld [vmem:[%s3304 + $0xc] sm:$0xe]
      %v4247 = vld [vmem:[%s3304 + $0x18] sm:$0xe]
      %v4248 = vld [vmem:[%s3304 + $0x24] sm:$0xe]
      %v4249 = vld [vmem:[%s3304 + $0x30] sm:$0xe]
      %v4250 = vld [vmem:[%s3304 + $0x3c] sm:$0xe]
      %v4251 = vld [vmem:[%s3304 + $0x48] sm:$0xe]
      %v4252 = vld [vmem:[%s3304 + $0x54] sm:$0xe]
      %v4253 = vld [vmem:[%s3304 + $0x60] sm:$0xe]
      %v4254 = vld [vmem:[%s3304 + $0x6c] sm:$0xe]
      %v4255 = vld [vmem:[%s3304 + $0x78] sm:$0xe]
      %v4256 = vld [vmem:[%s3304 + $0x84] sm:$0xe]
      %v4257 = vld [vmem:[%s3304 + $0x90] sm:$0xe]
      %v4258 = vld [vmem:[%s3304 + $0x9c] sm:$0xe]
      %v4259 = vld [vmem:[%s3304 + $0xa8] sm:$0xe]
      %v4260 = vld [vmem:[%s3304 + $0xb4] sm:$0xe]
      %v4309 = vrot.slane %v4245, 5
      %v4310 = vrot.slane %v4309, 4
      %v4311 = vrot.slane %v3592, 5
      %v4312 = vsel %vm1631, %v4310, %v4311
      %v4313 = vrot.slane %v4311, 4
      %v4314 = vrot.slane %v3593, 5
      %v4315 = vsel %vm1631, %v4313, %v4314
      %v4316 = vrot.slane %v4246, 5
      %v4317 = vrot.slane %v4316, 4
      %v4318 = vrot.slane %v3595, 5
      %v4319 = vsel %vm1631, %v4317, %v4318
      %v4320 = vrot.slane %v4318, 4
      %v4321 = vrot.slane %v3596, 5
      %v4322 = vsel %vm1631, %v4320, %v4321
      %v4323 = vrot.slane %v4247, 5
      %v4324 = vrot.slane %v4323, 4
      %v4325 = vrot.slane %v3598, 5
      %v4326 = vsel %vm1631, %v4324, %v4325
      %v4327 = vrot.slane %v4325, 4
      %v4328 = vrot.slane %v3599, 5
      %v4329 = vsel %vm1631, %v4327, %v4328
      %v4330 = vrot.slane %v4248, 5
      %v4331 = vrot.slane %v4330, 4
      %v4332 = vrot.slane %v3601, 5
      %v4333 = vsel %vm1631, %v4331, %v4332
      %v4334 = vrot.slane %v4332, 4
      %v4335 = vrot.slane %v3602, 5
      %v4336 = vsel %vm1631, %v4334, %v4335
      %v4337 = vrot.slane %v4249, 5
      %v4338 = vrot.slane %v4337, 4
      %v4339 = vrot.slane %v3604, 5
      %v4340 = vsel %vm1631, %v4338, %v4339
      %v4341 = vrot.slane %v4339, 4
      %v4342 = vrot.slane %v3605, 5
      %v4343 = vsel %vm1631, %v4341, %v4342
      %v4344 = vrot.slane %v4250, 5
      %v4345 = vrot.slane %v4344, 4
      %v4346 = vrot.slane %v3607, 5
      %v4347 = vsel %vm1631, %v4345, %v4346
      %v4348 = vrot.slane %v4346, 4
      %v4349 = vrot.slane %v3608, 5
      %v4350 = vsel %vm1631, %v4348, %v4349
      %v4351 = vrot.slane %v4251, 5
      %v4352 = vrot.slane %v4351, 4
      %v4353 = vrot.slane %v3610, 5
      %v4354 = vsel %vm1631, %v4352, %v4353
      %v4355 = vrot.slane %v4353, 4
      %v4356 = vrot.slane %v3611, 5
      %v4357 = vsel %vm1631, %v4355, %v4356
      %v4358 = vrot.slane %v4252, 5
      %v4359 = vrot.slane %v4358, 4
      %v4360 = vrot.slane %v3613, 5
      %v4361 = vsel %vm1631, %v4359, %v4360
      %v4362 = vrot.slane %v4360, 4
      %v4363 = vrot.slane %v3614, 5
      %v4364 = vsel %vm1631, %v4362, %v4363
      %v4365 = vrot.slane %v4253, 5
      %v4366 = vrot.slane %v4365, 4
      %v4367 = vrot.slane %v3616, 5
      %v4368 = vsel %vm1631, %v4366, %v4367
      %v4369 = vrot.slane %v4367, 4
      %v4370 = vrot.slane %v3617, 5
      %v4371 = vsel %vm1631, %v4369, %v4370
      %v4372 = vrot.slane %v4254, 5
      %v4373 = vrot.slane %v4372, 4
      %v4374 = vrot.slane %v3619, 5
      %v4375 = vsel %vm1631, %v4373, %v4374
      %v4376 = vrot.slane %v4374, 4
      %v4377 = vrot.slane %v3620, 5
      %v4378 = vsel %vm1631, %v4376, %v4377
      %v4379 = vrot.slane %v4255, 5
      %v4380 = vrot.slane %v4379, 4
      %v4381 = vrot.slane %v3622, 5
      %v4382 = vsel %vm1631, %v4380, %v4381
      %v4383 = vrot.slane %v4381, 4
      %v4384 = vrot.slane %v3623, 5
      %v4385 = vsel %vm1631, %v4383, %v4384
      %v4386 = vrot.slane %v4256, 5
      %v4387 = vrot.slane %v4386, 4
      %v4388 = vrot.slane %v3625, 5
      %v4389 = vsel %vm1631, %v4387, %v4388
      %v4390 = vrot.slane %v4388, 4
      %v4391 = vrot.slane %v3626, 5
      %v4392 = vsel %vm1631, %v4390, %v4391
      %v4393 = vrot.slane %v4257, 5
      %v4394 = vrot.slane %v4393, 4
      %v4395 = vrot.slane %v3628, 5
      %v4396 = vsel %vm1631, %v4394, %v4395
      %v4397 = vrot.slane %v4395, 4
      %v4398 = vrot.slane %v3629, 5
      %v4399 = vsel %vm1631, %v4397, %v4398
      %v4400 = vrot.slane %v4258, 5
      %v4401 = vrot.slane %v4400, 4
      %v4402 = vrot.slane %v3631, 5
      %v4403 = vsel %vm1631, %v4401, %v4402
      %v4404 = vrot.slane %v4402, 4
      %v4405 = vrot.slane %v3632, 5
      %v4406 = vsel %vm1631, %v4404, %v4405
      %v4407 = vrot.slane %v4259, 5
      %v4408 = vrot.slane %v4407, 4
      %v4409 = vrot.slane %v3634, 5
      %v4410 = vsel %vm1631, %v4408, %v4409
      %v4411 = vrot.slane %v4409, 4
      %v4412 = vrot.slane %v3635, 5
      %v4413 = vsel %vm1631, %v4411, %v4412
      %v4414 = vrot.slane %v4260, 5
      %v4415 = vrot.slane %v4414, 4
      %v4416 = vrot.slane %v3637, 5
      %v4417 = vsel %vm1631, %v4415, %v4416
      %v4418 = vrot.slane %v4416, 4
      %v4419 = vrot.slane %v3638, 5
      %v4420 = vsel %vm1631, %v4418, %v4419
      %s4421 = scalar_lea.vmem %s1, 16
      %v4422 = vld [vmem:[%s4421] sm:$0x3]
      %v4423 = vunpack.c.l.b16 %v4312
      %v4424 = vunpack.c.l.b16 %v4315
      %v4425 = vunpack.c.l.b16 %v4319
      %v4426 = vunpack.c.l.b16 %v4322
      %v4427 = vunpack.c.l.b16 %v4326
      %v4428 = vunpack.c.l.b16 %v4329
      %v4429 = vunpack.c.l.b16 %v4333
      %v4430 = vunpack.c.l.b16 %v4336
      %v4431 = vunpack.c.l.b16 %v4340
      %v4432 = vunpack.c.l.b16 %v4343
      %v4433 = vunpack.c.l.b16 %v4347
      %v4434 = vunpack.c.l.b16 %v4350
      %v4435 = vunpack.c.l.b16 %v4354
      %v4436 = vunpack.c.l.b16 %v4357
      %v4437 = vunpack.c.l.b16 %v4361
      %v4438 = vunpack.c.l.b16 %v4364
      %v4439 = vunpack.c.l.b16 %v4368
      %v4440 = vunpack.c.l.b16 %v4371
      %v4441 = vunpack.c.l.b16 %v4375
      %v4442 = vunpack.c.l.b16 %v4378
      %v4443 = vunpack.c.l.b16 %v4382
      %v4444 = vunpack.c.l.b16 %v4385
      %v4445 = vunpack.c.l.b16 %v4389
      %v4446 = vunpack.c.l.b16 %v4392
      %v4447 = vunpack.c.l.b16 %v4396
      %v4448 = vunpack.c.l.b16 %v4399
      %v4449 = vunpack.c.l.b16 %v4403
      %v4450 = vunpack.c.l.b16 %v4406
      %v4451 = vunpack.c.l.b16 %v4410
      %v4452 = vunpack.c.l.b16 %v4413
      %v4453 = vunpack.c.l.b16 %v4417
      %v4454 = vunpack.c.l.b16 %v4420
      %v4455 = vpack.c.b16 %v4424, %v4423
      %v4456 = vpack.c.b16 %v4426, %v4425
      %v4457 = vpack.c.b16 %v4428, %v4427
      %v4458 = vpack.c.b16 %v4430, %v4429
      %v4459 = vpack.c.b16 %v4432, %v4431
      %v4460 = vpack.c.b16 %v4434, %v4433
      %v4461 = vpack.c.b16 %v4436, %v4435
      %v4462 = vpack.c.b16 %v4438, %v4437
      %v4463 = vpack.c.b16 %v4440, %v4439
      %v4464 = vpack.c.b16 %v4442, %v4441
      %v4465 = vpack.c.b16 %v4444, %v4443
      %v4466 = vpack.c.b16 %v4446, %v4445
      %v4467 = vpack.c.b16 %v4448, %v4447
      %v4468 = vpack.c.b16 %v4450, %v4449
      %v4469 = vpack.c.b16 %v4452, %v4451
      %v4470 = vpack.c.b16 %v4454, %v4453
      %v4472 = vsel %vm1219, %v4455, 0
      %v4475 = vsel %vm1219, %v4456, 0
      %v4478 = vsel %vm1219, %v4457, 0
      %v4481 = vsel %vm1219, %v4458, 0
      %v4484 = vsel %vm1219, %v4459, 0
      %v4487 = vsel %vm1219, %v4460, 0
      %v4490 = vsel %vm1219, %v4461, 0
      %v4493 = vsel %vm1219, %v4462, 0
      %v4496 = vsel %vm1219, %v4463, 0
      %v4499 = vsel %vm1219, %v4464, 0
      %v4502 = vsel %vm1219, %v4465, 0
      %v4505 = vsel %vm1219, %v4466, 0
      %v4508 = vsel %vm1219, %v4467, 0
      %v4511 = vsel %vm1219, %v4468, 0
      %v4514 = vsel %vm1219, %v4469, 0
      %v4517 = vsel %vm1219, %v4470, 0
      %v4520 = vsel %vm1268, %v4422, 0
      %4522 = vmatpush.bf16.msra.mxu0 0
      %4523 = vmatpush.bf16.msra.mxu0 0
      %4524 = vmatpush.bf16.msra.mxu0 0
      %4525 = vmatpush.bf16.msra.mxu0 0
      %4526 = vmatpush.bf16.msra.mxu0 0
      %4527 = vmatpush.bf16.msra.mxu0 0
      %4528 = vmatpush.bf16.msra.mxu0 0
      %4529 = vmatpush.bf16.msra.mxu0 %v4520
      %4530 = vmatmul.bf16.gmra.mxu0 %v4472
      %v4531 = vpop.f32.mrf.mxu0
      %v4532 = vadd.f32 0.0, %v4531
      %v4533 = vpop.f32.mrf.mxu0
      %v4534 = vadd.f32 0.0, %v4533
      %4535 = vmatmul.bf16.gmra.mxu0 %v4475
      %v4536 = vpop.f32.mrf.mxu0
      %v4537 = vadd.f32 0.0, %v4536
      %v4538 = vpop.f32.mrf.mxu0
      %v4539 = vadd.f32 0.0, %v4538
      %4540 = vmatmul.bf16.gmra.mxu0 %v4478
      %v4541 = vpop.f32.mrf.mxu0
      %v4542 = vadd.f32 0.0, %v4541
      %v4543 = vpop.f32.mrf.mxu0
      %v4544 = vadd.f32 0.0, %v4543
      %4545 = vmatmul.bf16.gmra.mxu0 %v4481
      %v4546 = vpop.f32.mrf.mxu0
      %v4547 = vadd.f32 0.0, %v4546
      %v4548 = vpop.f32.mrf.mxu0
      %v4549 = vadd.f32 0.0, %v4548
      %4550 = vmatmul.bf16.gmra.mxu0 %v4484
      %v4551 = vpop.f32.mrf.mxu0
      %v4552 = vadd.f32 0.0, %v4551
      %v4553 = vpop.f32.mrf.mxu0
      %v4554 = vadd.f32 0.0, %v4553
      %4555 = vmatmul.bf16.gmra.mxu0 %v4487
      %v4556 = vpop.f32.mrf.mxu0
      %v4557 = vadd.f32 0.0, %v4556
      %v4558 = vpop.f32.mrf.mxu0
      %v4559 = vadd.f32 0.0, %v4558
      %4560 = vmatmul.bf16.gmra.mxu0 %v4490
      %v4561 = vpop.f32.mrf.mxu0
      %v4562 = vadd.f32 0.0, %v4561
      %v4563 = vpop.f32.mrf.mxu0
      %v4564 = vadd.f32 0.0, %v4563
      %4565 = vmatmul.bf16.gmra.mxu0 %v4493
      %v4566 = vpop.f32.mrf.mxu0
      %v4567 = vadd.f32 0.0, %v4566
      %v4568 = vpop.f32.mrf.mxu0
      %v4569 = vadd.f32 0.0, %v4568
      %4570 = vmatmul.bf16.gmra.mxu0 %v4496
      %v4571 = vpop.f32.mrf.mxu0
      %v4572 = vadd.f32 0.0, %v4571
      %v4573 = vpop.f32.mrf.mxu0
      %v4574 = vadd.f32 0.0, %v4573
      %4575 = vmatmul.bf16.gmra.mxu0 %v4499
      %v4576 = vpop.f32.mrf.mxu0
      %v4577 = vadd.f32 0.0, %v4576
      %v4578 = vpop.f32.mrf.mxu0
      %v4579 = vadd.f32 0.0, %v4578
      %4580 = vmatmul.bf16.gmra.mxu0 %v4502
      %v4581 = vpop.f32.mrf.mxu0
      %v4582 = vadd.f32 0.0, %v4581
      %v4583 = vpop.f32.mrf.mxu0
      %v4584 = vadd.f32 0.0, %v4583
      %4585 = vmatmul.bf16.gmra.mxu0 %v4505
      %v4586 = vpop.f32.mrf.mxu0
      %v4587 = vadd.f32 0.0, %v4586
      %v4588 = vpop.f32.mrf.mxu0
      %v4589 = vadd.f32 0.0, %v4588
      %4590 = vmatmul.bf16.gmra.mxu0 %v4508
      %v4591 = vpop.f32.mrf.mxu0
      %v4592 = vadd.f32 0.0, %v4591
      %v4593 = vpop.f32.mrf.mxu0
      %v4594 = vadd.f32 0.0, %v4593
      %4595 = vmatmul.bf16.gmra.mxu0 %v4511
      %v4596 = vpop.f32.mrf.mxu0
      %v4597 = vadd.f32 0.0, %v4596
      %v4598 = vpop.f32.mrf.mxu0
      %v4599 = vadd.f32 0.0, %v4598
      %4600 = vmatmul.bf16.gmra.mxu0 %v4514
      %v4601 = vpop.f32.mrf.mxu0
      %v4602 = vadd.f32 0.0, %v4601
      %v4603 = vpop.f32.mrf.mxu0
      %v4604 = vadd.f32 0.0, %v4603
      %4605 = vmatmul.bf16.gmra.mxu0 %v4517
      %v4606 = vpop.f32.mrf.mxu0
      %v4607 = vadd.f32 0.0, %v4606
      %v4608 = vpop.f32.mrf.mxu0
      %v4609 = vadd.f32 0.0, %v4608
      %4610 = vdwg.mxu0
      %v4611 = vadd.f32 %v4213, %v4532
      %v4612 = vadd.f32 %v4214, %v4534
      %v4613 = vadd.f32 %v4215, %v4537
      %v4614 = vadd.f32 %v4216, %v4539
      %v4615 = vadd.f32 %v4217, %v4542
      %v4616 = vadd.f32 %v4218, %v4544
      %v4617 = vadd.f32 %v4219, %v4547
      %v4618 = vadd.f32 %v4220, %v4549
      %v4619 = vadd.f32 %v4221, %v4552
      %v4620 = vadd.f32 %v4222, %v4554
      %v4621 = vadd.f32 %v4223, %v4557
      %v4622 = vadd.f32 %v4224, %v4559
      %v4623 = vadd.f32 %v4225, %v4562
      %v4624 = vadd.f32 %v4226, %v4564
      %v4625 = vadd.f32 %v4227, %v4567
      %v4626 = vadd.f32 %v4228, %v4569
      %v4627 = vadd.f32 %v4229, %v4572
      %v4628 = vadd.f32 %v4230, %v4574
      %v4629 = vadd.f32 %v4231, %v4577
      %v4630 = vadd.f32 %v4232, %v4579
      %v4631 = vadd.f32 %v4233, %v4582
      %v4632 = vadd.f32 %v4234, %v4584
      %v4633 = vadd.f32 %v4235, %v4587
      %v4634 = vadd.f32 %v4236, %v4589
      %v4635 = vadd.f32 %v4237, %v4592
      %v4636 = vadd.f32 %v4238, %v4594
      %v4637 = vadd.f32 %v4239, %v4597
      %v4638 = vadd.f32 %v4240, %v4599
      %v4639 = vadd.f32 %v4241, %v4602
      %v4640 = vadd.f32 %v4242, %v4604
      %v4641 = vadd.f32 %v4243, %v4607
      %v4642 = vadd.f32 %v4244, %v4609
      %v4643 = vld [vmem:[%s2] sm:$0x1]
      %v4645 = vperm.slane %v4643, 0
      %v4647 = vadd.f32 %v4611, %v4645
      %v4648 = vadd.f32 %v4612, %v4645
      %v4649 = vadd.f32 %v4613, %v4645
      %v4650 = vadd.f32 %v4614, %v4645
      %v4651 = vadd.f32 %v4615, %v4645
      %v4652 = vadd.f32 %v4616, %v4645
      %v4653 = vadd.f32 %v4617, %v4645
      %v4654 = vadd.f32 %v4618, %v4645
      %v4655 = vadd.f32 %v4619, %v4645
      %v4656 = vadd.f32 %v4620, %v4645
      %v4657 = vadd.f32 %v4621, %v4645
      %v4658 = vadd.f32 %v4622, %v4645
      %v4659 = vadd.f32 %v4623, %v4645
      %v4660 = vadd.f32 %v4624, %v4645
      %v4661 = vadd.f32 %v4625, %v4645
      %v4662 = vadd.f32 %v4626, %v4645
      %v4663 = vadd.f32 %v4627, %v4645
      %v4664 = vadd.f32 %v4628, %v4645
      %v4665 = vadd.f32 %v4629, %v4645
      %v4666 = vadd.f32 %v4630, %v4645
      %v4667 = vadd.f32 %v4631, %v4645
      %v4668 = vadd.f32 %v4632, %v4645
      %v4669 = vadd.f32 %v4633, %v4645
      %v4670 = vadd.f32 %v4634, %v4645
      %v4671 = vadd.f32 %v4635, %v4645
      %v4672 = vadd.f32 %v4636, %v4645
      %v4673 = vadd.f32 %v4637, %v4645
      %v4674 = vadd.f32 %v4638, %v4645
      %v4675 = vadd.f32 %v4639, %v4645
      %v4676 = vadd.f32 %v4640, %v4645
      %v4677 = vadd.f32 %v4641, %v4645
      %v4678 = vadd.f32 %v4642, %v4645
      %vm4679 = vcmp.gt.f32.partialorder %v4647, 0.0
      %vm4680 = vcmp.gt.f32.partialorder %v4648, 0.0
      %vm4681 = vcmp.gt.f32.partialorder %v4649, 0.0
      %vm4682 = vcmp.gt.f32.partialorder %v4650, 0.0
      %vm4683 = vcmp.gt.f32.partialorder %v4651, 0.0
      %vm4684 = vcmp.gt.f32.partialorder %v4652, 0.0
      %vm4685 = vcmp.gt.f32.partialorder %v4653, 0.0
      %vm4686 = vcmp.gt.f32.partialorder %v4654, 0.0
      %vm4687 = vcmp.gt.f32.partialorder %v4655, 0.0
      %vm4688 = vcmp.gt.f32.partialorder %v4656, 0.0
      %vm4689 = vcmp.gt.f32.partialorder %v4657, 0.0
      %vm4690 = vcmp.gt.f32.partialorder %v4658, 0.0
      %vm4691 = vcmp.gt.f32.partialorder %v4659, 0.0
      %vm4692 = vcmp.gt.f32.partialorder %v4660, 0.0
      %vm4693 = vcmp.gt.f32.partialorder %v4661, 0.0
      %vm4694 = vcmp.gt.f32.partialorder %v4662, 0.0
      %vm4695 = vcmp.gt.f32.partialorder %v4663, 0.0
      %vm4696 = vcmp.gt.f32.partialorder %v4664, 0.0
      %vm4697 = vcmp.gt.f32.partialorder %v4665, 0.0
      %vm4698 = vcmp.gt.f32.partialorder %v4666, 0.0
      %vm4699 = vcmp.gt.f32.partialorder %v4667, 0.0
      %vm4700 = vcmp.gt.f32.partialorder %v4668, 0.0
      %vm4701 = vcmp.gt.f32.partialorder %v4669, 0.0
      %vm4702 = vcmp.gt.f32.partialorder %v4670, 0.0
      %vm4703 = vcmp.gt.f32.partialorder %v4671, 0.0
      %vm4704 = vcmp.gt.f32.partialorder %v4672, 0.0
      %vm4705 = vcmp.gt.f32.partialorder %v4673, 0.0
      %vm4706 = vcmp.gt.f32.partialorder %v4674, 0.0
      %vm4707 = vcmp.gt.f32.partialorder %v4675, 0.0
      %vm4708 = vcmp.gt.f32.partialorder %v4676, 0.0
      %vm4709 = vcmp.gt.f32.partialorder %v4677, 0.0
      %vm4710 = vcmp.gt.f32.partialorder %v4678, 0.0
      %v4711 = vmul.f32 %v4647, 0.01
      %v4712 = vmul.f32 %v4648, 0.01
      %v4713 = vmul.f32 %v4649, 0.01
      %v4714 = vmul.f32 %v4650, 0.01
      %v4715 = vmul.f32 %v4651, 0.01
      %v4716 = vmul.f32 %v4652, 0.01
      %v4717 = vmul.f32 %v4653, 0.01
      %v4718 = vmul.f32 %v4654, 0.01
      %v4719 = vmul.f32 %v4655, 0.01
      %v4720 = vmul.f32 %v4656, 0.01
      %v4721 = vmul.f32 %v4657, 0.01
      %v4722 = vmul.f32 %v4658, 0.01
      %v4723 = vmul.f32 %v4659, 0.01
      %v4724 = vmul.f32 %v4660, 0.01
      %v4725 = vmul.f32 %v4661, 0.01
      %v4726 = vmul.f32 %v4662, 0.01
      %v4727 = vmul.f32 %v4663, 0.01
      %v4728 = vmul.f32 %v4664, 0.01
      %v4729 = vmul.f32 %v4665, 0.01
      %v4730 = vmul.f32 %v4666, 0.01
      %v4731 = vmul.f32 %v4667, 0.01
      %v4732 = vmul.f32 %v4668, 0.01
      %v4733 = vmul.f32 %v4669, 0.01
      %v4734 = vmul.f32 %v4670, 0.01
      %v4735 = vmul.f32 %v4671, 0.01
      %v4736 = vmul.f32 %v4672, 0.01
      %v4737 = vmul.f32 %v4673, 0.01
      %v4738 = vmul.f32 %v4674, 0.01
      %v4739 = vmul.f32 %v4675, 0.01
      %v4740 = vmul.f32 %v4676, 0.01
      %v4741 = vmul.f32 %v4677, 0.01
      %v4742 = vmul.f32 %v4678, 0.01
      %v4743 = vsel %vm4679, %v4647, %v4711
      %v4744 = vsel %vm4680, %v4648, %v4712
      %v4745 = vsel %vm4681, %v4649, %v4713
      %v4746 = vsel %vm4682, %v4650, %v4714
      %v4747 = vsel %vm4683, %v4651, %v4715
      %v4748 = vsel %vm4684, %v4652, %v4716
      %v4749 = vsel %vm4685, %v4653, %v4717
      %v4750 = vsel %vm4686, %v4654, %v4718
      %v4751 = vsel %vm4687, %v4655, %v4719
      %v4752 = vsel %vm4688, %v4656, %v4720
      %v4753 = vsel %vm4689, %v4657, %v4721
      %v4754 = vsel %vm4690, %v4658, %v4722
      %v4755 = vsel %vm4691, %v4659, %v4723
      %v4756 = vsel %vm4692, %v4660, %v4724
      %v4757 = vsel %vm4693, %v4661, %v4725
      %v4758 = vsel %vm4694, %v4662, %v4726
      %v4759 = vsel %vm4695, %v4663, %v4727
      %v4760 = vsel %vm4696, %v4664, %v4728
      %v4761 = vsel %vm4697, %v4665, %v4729
      %v4762 = vsel %vm4698, %v4666, %v4730
      %v4763 = vsel %vm4699, %v4667, %v4731
      %v4764 = vsel %vm4700, %v4668, %v4732
      %v4765 = vsel %vm4701, %v4669, %v4733
      %v4766 = vsel %vm4702, %v4670, %v4734
      %v4767 = vsel %vm4703, %v4671, %v4735
      %v4768 = vsel %vm4704, %v4672, %v4736
      %v4769 = vsel %vm4705, %v4673, %v4737
      %v4770 = vsel %vm4706, %v4674, %v4738
      %v4771 = vsel %vm4707, %v4675, %v4739
      %v4772 = vsel %vm4708, %v4676, %v4740
      %v4773 = vsel %vm4709, %v4677, %v4741
      %v4774 = vsel %vm4710, %v4678, %v4742
      %v4775 = vpack.c.bf16 %v4743, %v4743
      %v4776 = vpack.c.bf16 %v4744, %v4744
      %v4777 = vpack.c.bf16 %v4745, %v4745
      %v4778 = vpack.c.bf16 %v4746, %v4746
      %v4779 = vpack.c.bf16 %v4747, %v4747
      %v4780 = vpack.c.bf16 %v4748, %v4748
      %v4781 = vpack.c.bf16 %v4749, %v4749
      %v4782 = vpack.c.bf16 %v4750, %v4750
      %v4783 = vpack.c.bf16 %v4751, %v4751
      %v4784 = vpack.c.bf16 %v4752, %v4752
      %v4785 = vpack.c.bf16 %v4753, %v4753
      %v4786 = vpack.c.bf16 %v4754, %v4754
      %v4787 = vpack.c.bf16 %v4755, %v4755
      %v4788 = vpack.c.bf16 %v4756, %v4756
      %v4789 = vpack.c.bf16 %v4757, %v4757
      %v4790 = vpack.c.bf16 %v4758, %v4758
      %v4791 = vpack.c.bf16 %v4759, %v4759
      %v4792 = vpack.c.bf16 %v4760, %v4760
      %v4793 = vpack.c.bf16 %v4761, %v4761
      %v4794 = vpack.c.bf16 %v4762, %v4762
      %v4795 = vpack.c.bf16 %v4763, %v4763
      %v4796 = vpack.c.bf16 %v4764, %v4764
      %v4797 = vpack.c.bf16 %v4765, %v4765
      %v4798 = vpack.c.bf16 %v4766, %v4766
      %v4799 = vpack.c.bf16 %v4767, %v4767
      %v4800 = vpack.c.bf16 %v4768, %v4768
      %v4801 = vpack.c.bf16 %v4769, %v4769
      %v4802 = vpack.c.bf16 %v4770, %v4770
      %v4803 = vpack.c.bf16 %v4771, %v4771
      %v4804 = vpack.c.bf16 %v4772, %v4772
      %v4805 = vpack.c.bf16 %v4773, %v4773
      %v4806 = vpack.c.bf16 %v4774, %v4774
      %4807 = vst.msk [vmem:[%s170] sm:$0xf] %vm204, %v4775
      %4808 = vst.msk [vmem:[%s170 + $0x4] sm:$0xf] %vm204, %v4776
      %4809 = vst.msk [vmem:[%s170 + $0x8] sm:$0xf] %vm204, %v4777
      %4810 = vst.msk [vmem:[%s170 + $0xc] sm:$0xf] %vm204, %v4778
      %4811 = vst.msk [vmem:[%s170 + $0x10] sm:$0xf] %vm204, %v4779
      %4812 = vst.msk [vmem:[%s170 + $0x14] sm:$0xf] %vm204, %v4780
      %4813 = vst.msk [vmem:[%s170 + $0x18] sm:$0xf] %vm204, %v4781
      %4814 = vst.msk [vmem:[%s170 + $0x1c] sm:$0xf] %vm204, %v4782
      %4815 = vst.msk [vmem:[%s170 + $0x20] sm:$0xf] %vm204, %v4783
      %4816 = vst.msk [vmem:[%s170 + $0x24] sm:$0xf] %vm204, %v4784
      %4817 = vst.msk [vmem:[%s170 + $0x28] sm:$0xf] %vm204, %v4785
      %4818 = vst.msk [vmem:[%s170 + $0x2c] sm:$0xf] %vm204, %v4786
      %4819 = vst.msk [vmem:[%s170 + $0x30] sm:$0xf] %vm204, %v4787
      %4820 = vst.msk [vmem:[%s170 + $0x34] sm:$0xf] %vm204, %v4788
      %4821 = vst.msk [vmem:[%s170 + $0x38] sm:$0xf] %vm204, %v4789
      %4822 = vst.msk [vmem:[%s170 + $0x3c] sm:$0xf] %vm204, %v4790
      %4823 = vst.msk [vmem:[%s170 + $0x40] sm:$0xf] %vm204, %v4791
      %4824 = vst.msk [vmem:[%s170 + $0x44] sm:$0xf] %vm204, %v4792
      %4825 = vst.msk [vmem:[%s170 + $0x48] sm:$0xf] %vm204, %v4793
      %4826 = vst.msk [vmem:[%s170 + $0x4c] sm:$0xf] %vm204, %v4794
      %4827 = vst.msk [vmem:[%s170 + $0x50] sm:$0xf] %vm204, %v4795
      %4828 = vst.msk [vmem:[%s170 + $0x54] sm:$0xf] %vm204, %v4796
      %4829 = vst.msk [vmem:[%s170 + $0x58] sm:$0xf] %vm204, %v4797
      %4830 = vst.msk [vmem:[%s170 + $0x5c] sm:$0xf] %vm204, %v4798
      %4831 = vst.msk [vmem:[%s170 + $0x60] sm:$0xf] %vm204, %v4799
      %4832 = vst.msk [vmem:[%s170 + $0x64] sm:$0xf] %vm204, %v4800
      %4833 = vst.msk [vmem:[%s170 + $0x68] sm:$0xf] %vm204, %v4801
      %4834 = vst.msk [vmem:[%s170 + $0x6c] sm:$0xf] %vm204, %v4802
      %4835 = vst.msk [vmem:[%s170 + $0x70] sm:$0xf] %vm204, %v4803
      %4836 = vst.msk [vmem:[%s170 + $0x74] sm:$0xf] %vm204, %v4804
      %4837 = vst.msk [vmem:[%s170 + $0x78] sm:$0xf] %vm204, %v4805
      %4838 = vst.msk [vmem:[%s170 + $0x7c] sm:$0xf] %vm204, %v4806
      %p4839 = scmp.lt.s32.totalorder %s14, 1
      %s4840 = scalar_select %p4839, %s14, 1
      %s4841 = smul.addr %s4840, 32
      %s4842 = smul.addr %s4841, 4
      %s4843 = scalar_lea.vmem %s3, %s4842
      // Predicated region
      $region33: #{tpu_custom_call.1} parent=31 // pred_check
        %p4844 = pneg %p100
      $region34: #{tpu_custom_call.1} parent=31 // pred_check_branch
        %4846 = sbr.rel (%p4844) target = $region36
      $region35: #{tpu_custom_call.1} parent=31 // pred_region
        _
      $region36: #{tpu_custom_call.1} parent=31 // pred_fallthru
        _
    $region32: #{tpu_custom_call.1} parent=5 // pred_fallthru
      _
    %p4847 = scmp.le.s32.totalorder 2, %s9
    // Predicated region
    $region37: #{tpu_custom_call.1} parent=5 // pred_check
      %p4848 = pneg %p4847
    $region38: #{tpu_custom_call.1} parent=5 // pred_check_branch
      %4850 = sbr.rel (%p4848) target = $region40
    $region39: #{tpu_custom_call.1} parent=5 // pred_region
      %s4851 = ssub.s32 %s9, 2
      // Predicated region
      $region41: #{tpu_custom_call.1} parent=39 // pred_check
        %p4852 = pneg %p106
      $region42: #{tpu_custom_call.1} parent=39 // pred_check_branch
        %4854 = sbr.rel (%p4852) target = $region44
      $region43: #{tpu_custom_call.1} parent=39 // pred_region
        %p4855 = scmp.lt.s32.totalorder %s15, 1
        %s4856 = scalar_select %p4855, %s15, 1
        %s4857 = smul.addr %s4856, 32
        %s4858 = smul.addr %s4857, 4
        %s4859 = scalar_lea.vmem %s3, %s4858
      $region44: #{tpu_custom_call.1} parent=39 // pred_fallthru
        _
    $region40: #{tpu_custom_call.1} parent=5 // pred_fallthru
      _
  $region6: #{tpu_custom_call.1} parent=0 // loop_footer
    %s13 = sadd.s32 1, %s9
  $region7: #{tpu_custom_call.1} parent=0 // loop_footer_branch
    %8 = sbr.rel target = $region3
  $region8: #{tpu_custom_call.1} parent=0 // loop_exit
    _

</llo_original>
